<compile_context>
chip_gen: v6e
topology: v6e:2x2x1
jax: 0.10.0
libtpu: 0.0.40
codegen_flags: <defaults>
</compile_context>

<pallas_src>
import jax
import jax.numpy as jnp
from jax.experimental import pallas as pl
from jax.experimental.pallas import tpu as pltpu


# --------------------------------------------------------------------------- #
# Fused Pallas kernel (one sample per grid step)
# --------------------------------------------------------------------------- #
def _fused_block_kernel(x_ref, w1_ref, b1_ref, w2_ref, vim_ref, uts_ref,
                        wcs_ref, rwl_ref, mb_ref, t3_ref,
                        o_ref,
                        pad_ref, pat_ref):
    H, W, C = x_ref.shape[1], x_ref.shape[2], x_ref.shape[3]
    HW = H * W

    # Zero the padded scratch ONCE per grid step: only the interior is rewritten
    # between the two conv patch builds, so the zero border is shared.
    pad_ref[...] = jnp.zeros_like(pad_ref)

    def build_patches(img):
        # Zero-padded 3x3 im2col: (H, W, C) -> (H*W, 9*C) patch matrix in VMEM.
        pad_ref[1:H + 1, 1:W + 1, :] = img
        j = 0
        for ky in range(3):
            for kx in range(3):
                pat_ref[:, j * C:(j + 1) * C] = (
                    pad_ref[ky:ky + H, kx:kx + W, :].reshape(HW, C))
                j += 1
        return pat_ref[...]                                       # (HW, 9*C)

    x3 = x_ref[0]                                                 # (H, W, C)
    identity = x3.reshape(HW, C)

    # ---- conv1 (single K=9*C matmul) + bn1 (scale folded into w1) + relu ----
    p1 = build_patches(x3)
    out = jnp.dot(p1, w1_ref[...], preferred_element_type=jnp.float32)
    out = jnp.maximum(out + b1_ref[...], 0.0)                     # (HW, C)

    # ---- meta path -> lam (rank coefficients), fully on-chip, closed form ----
    # lam = ((sum_d meta_wl tiled over H) @ out) @ (meta_wc/(H*D)) + mean(meta_b)
    t = jnp.dot(rwl_ref[...], out, preferred_element_type=jnp.float32)     # (1, C)
    lam = jnp.dot(t, wcs_ref[...], preferred_element_type=jnp.float32)
    lam = lam + mb_ref[...]                                       # (1, R)

    # ---- conv2: common + low-rank specific share the same patch matrix -------
    # (bn3 scale is pre-folded into w2 and U^T in the wrapper)
    p2 = build_patches(out.reshape(H, W, C))
    common = jnp.dot(p2, w2_ref[...], preferred_element_type=jnp.float32)  # (HW, C)
    z = jnp.dot(p2, vim_ref[...], preferred_element_type=jnp.float32)      # (HW, R)
    specific = jnp.dot(z * lam, uts_ref[...],
                       preferred_element_type=jnp.float32)                 # (HW, C)

    # ---- bn3 shift + identity + relu epilogues (shared base, no scale mul) ---
    base = t3_ref[...] + identity
    o_ref[0, 0] = jnp.maximum(common + specific + base, 0.0).astype(o_ref.dtype)
    o_ref[0, 1] = jnp.maximum(common + base, 0.0).astype(o_ref.dtype)
    o_ref[0, 2] = jnp.maximum(specific + base, 0.0).astype(o_ref.dtype)


# --------------------------------------------------------------------------- #
# Wrapper
# --------------------------------------------------------------------------- #
def bn_scale_shift(gamma, beta, mean, var, eps=1e-5):
    scale = gamma / jnp.sqrt(var + eps)
    shift = beta - mean * scale
    return scale, shift


@jax.jit
def basic_block_lrd_forward(x_nchw, params):
    x = jnp.transpose(x_nchw, (0, 2, 3, 1)).astype(jnp.float32)   # (N, H, W, Cin)
    N, H, W, Cin = x.shape
    planes = params["w1"].shape[-1]
    rank = params["U"].shape[1]
    num_domain = params["meta_wl"].shape[1]
    assert Cin == planes  # residual path requires inplanes == planes (downsample=None)
    HW = H * W
    K = 9 * Cin

    s1, t1 = bn_scale_shift(*params["bn1"])
    s3, t3 = bn_scale_shift(*params["bn3"])

    # im2col weight matrices; row order = (ky, kx, cin), matching the kernel patches.
    w1_mat = params["w1"].reshape(K, planes) * s1[None, :]        # bn1 scale folded in
    b1 = t1.reshape(1, planes)                                    # bn1 shift
    # bn3 scale folded into both conv2 branches.
    w2_mat = params["w2_common"].reshape(K, planes) * s3[None, :]
    vim = jnp.transpose(params["V"].reshape(rank, planes, 3, 3),
                        (2, 3, 1, 0)).reshape(K, rank)            # (9*C, rank)
    ut_s3 = params["U"].T * s3[None, :]                           # (rank, planes)

    # Closed-form meta reduction constants.
    wcs = params["meta_wc"] * (1.0 / (H * num_domain))            # (planes, rank)
    rwl = jnp.tile(params["meta_wl"].sum(axis=1), H).reshape(1, HW)
    mbv = jnp.full((1, rank), jnp.mean(params["meta_b"]), jnp.float32)
    t3v = t3.reshape(1, planes)                                   # bn3 shift

    def const2d(shape):
        return pl.BlockSpec(shape, lambda n: (0, 0))

    out = pl.pallas_call(
        _fused_block_kernel,
        out_shape=jax.ShapeDtypeStruct((N, 3, HW, planes), jnp.float32),
        grid=(N,),
        in_specs=[
            pl.BlockSpec((1, H, W, Cin), lambda n: (n, 0, 0, 0)),  # x
            const2d((K, planes)),                                  # w1 (bn1-folded)
            const2d((1, planes)),                                  # bn1 shift
            const2d((K, planes)),                                  # w2 common (bn3-folded)
            const2d((K, rank)),                                    # V (im2col order)
            const2d((rank, planes)),                               # U^T (bn3-folded)
            const2d((planes, rank)),                               # meta_wc / (H*D)
            const2d((1, HW)),                                      # sum_d(meta_wl) tiled
            const2d((1, rank)),                                    # mean(meta_b)
            const2d((1, planes)),                                  # bn3 shift
        ],
        out_specs=pl.BlockSpec((1, 3, HW, planes), lambda n: (n, 0, 0, 0)),
        scratch_shapes=[
            pltpu.VMEM((H + 2, W + 2, Cin), jnp.float32),          # shared padded image
            pltpu.VMEM((HW, K), jnp.float32),                      # shared patch matrix
        ],
        compiler_params=pltpu.CompilerParams(
            dimension_semantics=("parallel",)),
    )(x, w1_mat, b1, w2_mat, vim, ut_s3, wcs, rwl, mbv, t3v)

    out = out.reshape(N, 3, H, W, planes)
    to_nchw = lambda a: jnp.transpose(a, (0, 3, 1, 2))
    return to_nchw(out[:, 0]), to_nchw(out[:, 1]), to_nchw(out[:, 2])


# --------------------------------------------------------------------------- #
# Pure-JAX reference of the same modeled math (for correctness checking)
# --------------------------------------------------------------------------- #
def _reference_forward(x_nchw, params):
    x = jnp.transpose(x_nchw, (0, 2, 3, 1)).astype(jnp.float32)
    N, H, W, Cin = x.shape
    planes = params["w1"].shape[-1]

    def conv3x3(inp, w):
        return jax.lax.conv_general_dilated(
            inp, w, (1, 1), ((1, 1), (1, 1)),
            dimension_numbers=("NHWC", "HWIO", "NHWC"))

    s1, t1 = bn_scale_shift(*params["bn1"])
    s3, t3 = bn_scale_shift(*params["bn3"])

    out = jnp.maximum(conv3x3(x, params["w1"]) * s1 + t1, 0.0)

    y = jnp.einsum("nhwc,cr->nhwr", out, params["meta_wc"])
    y_nchw = jnp.transpose(y, (0, 3, 1, 2))                                # (N,r,H,W)
    dp = jnp.einsum("nrhw,wd->nrhd", y_nchw, params["meta_wl"]) + params["meta_b"]
    lam = jnp.mean(dp, axis=(2, 3))                                        # (N, rank)

    w_spec_flat = jnp.einsum("cr,nr,rk->nck", params["U"], lam, params["V"])
    w_spec = w_spec_flat.reshape(N, planes, planes, 3, 3).transpose(0, 3, 4, 2, 1)

    common = conv3x3(out, params["w2_common"])
    specific = jnp.stack(
        [conv3x3(out[i:i + 1], w_spec[i])[0] for i in range(N)], axis=0)
    feature = common + specific

    epi = lambda v: jnp.maximum(v * s3 + t3 + x, 0.0)
    to_nchw = lambda a: jnp.transpose(a, (0, 3, 1, 2))
    return to_nchw(epi(feature)), to_nchw(epi(common)), to_nchw(epi(specific))


# --------------------------------------------------------------------------- #
# Parameters
# --------------------------------------------------------------------------- #
def init_params(key, inplanes, planes, H, W, rank, num_domain):
    ks = jax.random.split(key, 6)
    p = {}
    p["w1"] = 0.1 * jax.random.normal(ks[0], (3, 3, inplanes, planes), jnp.float32)
    p["w2_common"] = 0.1 * jax.random.normal(ks[1], (3, 3, planes, planes), jnp.float32)
    p["U"] = 0.1 * jax.random.normal(ks[2], (planes, rank), jnp.float32)
    p["V"] = 0.1 * jax.random.normal(ks[3], (rank, planes * 9), jnp.float32)
    p["meta_wc"] = 0.1 * jax.random.normal(ks[4], (planes, rank), jnp.float32)
    p["meta_wl"] = 0.1 * jax.random.normal(ks[5], (W, num_domain), jnp.float32)
    p["meta_b"] = 0.01 * jnp.arange(num_domain, dtype=jnp.float32)

    def bn(i):
        g = 1.0 + 0.05 * jnp.arange(planes, dtype=jnp.float32)
        b = 0.02 * jnp.arange(planes, dtype=jnp.float32) - 0.05
        m = 0.01 * (i + 1) * jnp.arange(planes, dtype=jnp.float32)
        v = 1.0 + 0.03 * jnp.arange(planes, dtype=jnp.float32)
        return g, b, m, v

    p["bn1"] = bn(0)
    # TODO(synk): bn3 is referenced in _forward_feature but never defined in the
    # provided PyTorch snippet; modeled as an eval-mode BatchNorm2d(planes).
    p["bn3"] = bn(1)
    return p


if __name__ == "__main__":
    key = jax.random.PRNGKey(0)
    k_x, k_p = jax.random.split(key)

    N, C, H, W = 2, 8, 16, 16          # inplanes == planes == 8 (residual add)
    planes, rank, num_domain = 8, 2, 3

    x = jax.random.normal(k_x, (N, C, H, W), jnp.float32)
    params = init_params(k_p, C, planes, H, W, rank, num_domain)

    feat, common, specific = basic_block_lrd_forward(x, params)
    jax.block_until_ready((feat, common, specific))

    assert feat.shape == (N, planes, H, W)
    assert common.shape == (N, planes, H, W)
    assert specific.shape == (N, planes, H, W)

    # Correctness check vs the pure-JAX reference of the same modeled math.
    # Loose tolerance: default MXU matmul precision + different reassociation
    # (im2col matmul vs direct conv) can differ at the ~1e-2 level.
    rf, rc, rs = _reference_forward(x, params)
    ok = all(bool(jnp.allclose(a, b, rtol=1e-1, atol=1e-1))
             for a, b in ((feat, rf), (common, rc), (specific, rs)))
    assert ok, "kernel output mismatch vs reference"

    print("KERNEL_OK")
</pallas_src>

<mosaic_0001>
module attributes {stable_mosaic.version = 11 : i64} {
  func.func @_fused_block_kernel(%arg0: i32, %arg1: memref<1x16x16x8xf32, #tpu.memory_space<vmem>>, %arg2: memref<72x8xf32, #tpu.memory_space<vmem>>, %arg3: memref<1x8xf32, #tpu.memory_space<vmem>>, %arg4: memref<72x8xf32, #tpu.memory_space<vmem>>, %arg5: memref<72x2xf32, #tpu.memory_space<vmem>>, %arg6: memref<2x8xf32, #tpu.memory_space<vmem>>, %arg7: memref<8x2xf32, #tpu.memory_space<vmem>>, %arg8: memref<1x256xf32, #tpu.memory_space<vmem>>, %arg9: memref<1x2xf32, #tpu.memory_space<vmem>>, %arg10: memref<1x8xf32, #tpu.memory_space<vmem>>, %arg11: memref<1x3x256x8xf32, #tpu.memory_space<vmem>>, %arg12: memref<18x18x8xf32, #tpu.memory_space<vmem>>, %arg13: memref<256x72xf32, #tpu.memory_space<vmem>>) attributes {dimension_semantics = [#tpu.dimension_semantics<parallel>], iteration_bounds = array<i64: 2>, scalar_prefetch = 0 : i64, scratch_operands = 2 : i64, tpu.core_type = #tpu.core_type<tc>, window_params = [{transform_indices = @transform_0, window_bounds = array<i64: 1, 16, 16, 8>}, {pipeline_mode = #tpu.pipeline_mode<synchronous>, transform_indices = @transform_1, window_bounds = array<i64: 72, 8>}, {pipeline_mode = #tpu.pipeline_mode<synchronous>, transform_indices = @transform_2, window_bounds = array<i64: 1, 8>}, {pipeline_mode = #tpu.pipeline_mode<synchronous>, transform_indices = @transform_3, window_bounds = array<i64: 72, 8>}, {pipeline_mode = #tpu.pipeline_mode<synchronous>, transform_indices = @transform_4, window_bounds = array<i64: 72, 2>}, {pipeline_mode = #tpu.pipeline_mode<synchronous>, transform_indices = @transform_5, window_bounds = array<i64: 2, 8>}, {pipeline_mode = #tpu.pipeline_mode<synchronous>, transform_indices = @transform_6, window_bounds = array<i64: 8, 2>}, {pipeline_mode = #tpu.pipeline_mode<synchronous>, transform_indices = @transform_7, window_bounds = array<i64: 1, 256>}, {pipeline_mode = #tpu.pipeline_mode<synchronous>, transform_indices = @transform_8, window_bounds = array<i64: 1, 2>}, {pipeline_mode = #tpu.pipeline_mode<synchronous>, transform_indices = @transform_9, window_bounds = array<i64: 1, 8>}, {transform_indices = @transform_10, window_bounds = array<i64: 1, 3, 256, 8>}]} {
    %cst = arith.constant 0.000000e+00 : f32
    %0 = vector.broadcast %cst : f32 to vector<18x18x8xf32>
    %c0 = arith.constant 0 : index
    %c0_0 = arith.constant 0 : index
    %c0_1 = arith.constant 0 : index
    %1 = vector.load %arg12[%c0, %c0_0, %c0_1] : memref<18x18x8xf32, #tpu.memory_space<vmem>>, vector<18x18x8xf32>
    tpu.vector_store %arg12[%c0, %c0_0, %c0_1], %0 {strides = array<i32>} : memref<18x18x8xf32, #tpu.memory_space<vmem>>, vector<18x18x8xf32>,
    %c0_2 = arith.constant 0 : index
    %c0_3 = arith.constant 0 : index
    %c0_4 = arith.constant 0 : index
    %c0_5 = arith.constant 0 : index
    %2 = vector.load %arg1[%c0_2, %c0_3, %c0_4, %c0_5] : memref<1x16x16x8xf32, #tpu.memory_space<vmem>>, vector<1x16x16x8xf32>
    %3 = vector.shape_cast %2 : vector<1x16x16x8xf32> to vector<16x16x8xf32>
    %4 = vector.shape_cast %3 : vector<16x16x8xf32> to vector<256x8xf32>
    %c1 = arith.constant 1 : index
    %c1_6 = arith.constant 1 : index
    %c0_7 = arith.constant 0 : index
    %5 = vector.load %arg12[%c1, %c1_6, %c0_7] : memref<18x18x8xf32, #tpu.memory_space<vmem>>, vector<16x16x8xf32>
    tpu.vector_store %arg12[%c1, %c1_6, %c0_7], %3 {strides = array<i32>} : memref<18x18x8xf32, #tpu.memory_space<vmem>>, vector<16x16x8xf32>,
    %c0_8 = arith.constant 0 : index
    %c0_9 = arith.constant 0 : index
    %c0_10 = arith.constant 0 : index
    %6 = vector.load %arg12[%c0_8, %c0_9, %c0_10] : memref<18x18x8xf32, #tpu.memory_space<vmem>>, vector<16x16x8xf32>
    %7 = vector.shape_cast %6 : vector<16x16x8xf32> to vector<256x8xf32>
    %c0_11 = arith.constant 0 : index
    %c0_12 = arith.constant 0 : index
    %8 = vector.load %arg13[%c0_11, %c0_12] : memref<256x72xf32, #tpu.memory_space<vmem>>, vector<256x8xf32>
    tpu.vector_store %arg13[%c0_11, %c0_12], %7 {strides = array<i32>} : memref<256x72xf32, #tpu.memory_space<vmem>>, vector<256x8xf32>,
    %c0_13 = arith.constant 0 : index
    %c1_14 = arith.constant 1 : index
    %c0_15 = arith.constant 0 : index
    %9 = vector.load %arg12[%c0_13, %c1_14, %c0_15] : memref<18x18x8xf32, #tpu.memory_space<vmem>>, vector<16x16x8xf32>
    %10 = vector.shape_cast %9 : vector<16x16x8xf32> to vector<256x8xf32>
    %c0_16 = arith.constant 0 : index
    %c8 = arith.constant 8 : index
    %11 = vector.load %arg13[%c0_16, %c8] : memref<256x72xf32, #tpu.memory_space<vmem>>, vector<256x8xf32>
    tpu.vector_store %arg13[%c0_16, %c8], %10 {strides = array<i32>} : memref<256x72xf32, #tpu.memory_space<vmem>>, vector<256x8xf32>,
    %c0_17 = arith.constant 0 : index
    %c2 = arith.constant 2 : index
    %c0_18 = arith.constant 0 : index
    %12 = vector.load %arg12[%c0_17, %c2, %c0_18] : memref<18x18x8xf32, #tpu.memory_space<vmem>>, vector<16x16x8xf32>
    %13 = vector.shape_cast %12 : vector<16x16x8xf32> to vector<256x8xf32>
    %c0_19 = arith.constant 0 : index
    %c16 = arith.constant 16 : index
    %14 = vector.load %arg13[%c0_19, %c16] : memref<256x72xf32, #tpu.memory_space<vmem>>, vector<256x8xf32>
    tpu.vector_store %arg13[%c0_19, %c16], %13 {strides = array<i32>} : memref<256x72xf32, #tpu.memory_space<vmem>>, vector<256x8xf32>,
    %c1_20 = arith.constant 1 : index
    %c0_21 = arith.constant 0 : index
    %c0_22 = arith.constant 0 : index
    %15 = vector.load %arg12[%c1_20, %c0_21, %c0_22] : memref<18x18x8xf32, #tpu.memory_space<vmem>>, vector<16x16x8xf32>
    %16 = vector.shape_cast %15 : vector<16x16x8xf32> to vector<256x8xf32>
    %c0_23 = arith.constant 0 : index
    %c24 = arith.constant 24 : index
    %17 = vector.load %arg13[%c0_23, %c24] : memref<256x72xf32, #tpu.memory_space<vmem>>, vector<256x8xf32>
    tpu.vector_store %arg13[%c0_23, %c24], %16 {strides = array<i32>} : memref<256x72xf32, #tpu.memory_space<vmem>>, vector<256x8xf32>,
    %c1_24 = arith.constant 1 : index
    %c1_25 = arith.constant 1 : index
    %c0_26 = arith.constant 0 : index
    %18 = vector.load %arg12[%c1_24, %c1_25, %c0_26] : memref<18x18x8xf32, #tpu.memory_space<vmem>>, vector<16x16x8xf32>
    %19 = vector.shape_cast %18 : vector<16x16x8xf32> to vector<256x8xf32>
    %c0_27 = arith.constant 0 : index
    %c32 = arith.constant 32 : index
    %20 = vector.load %arg13[%c0_27, %c32] : memref<256x72xf32, #tpu.memory_space<vmem>>, vector<256x8xf32>
    tpu.vector_store %arg13[%c0_27, %c32], %19 {strides = array<i32>} : memref<256x72xf32, #tpu.memory_space<vmem>>, vector<256x8xf32>,
    %c1_28 = arith.constant 1 : index
    %c2_29 = arith.constant 2 : index
    %c0_30 = arith.constant 0 : index
    %21 = vector.load %arg12[%c1_28, %c2_29, %c0_30] : memref<18x18x8xf32, #tpu.memory_space<vmem>>, vector<16x16x8xf32>
    %22 = vector.shape_cast %21 : vector<16x16x8xf32> to vector<256x8xf32>
    %c0_31 = arith.constant 0 : index
    %c40 = arith.constant 40 : index
    %23 = vector.load %arg13[%c0_31, %c40] : memref<256x72xf32, #tpu.memory_space<vmem>>, vector<256x8xf32>
    tpu.vector_store %arg13[%c0_31, %c40], %22 {strides = array<i32>} : memref<256x72xf32, #tpu.memory_space<vmem>>, vector<256x8xf32>,
    %c2_32 = arith.constant 2 : index
    %c0_33 = arith.constant 0 : index
    %c0_34 = arith.constant 0 : index
    %24 = vector.load %arg12[%c2_32, %c0_33, %c0_34] : memref<18x18x8xf32, #tpu.memory_space<vmem>>, vector<16x16x8xf32>
    %25 = vector.shape_cast %24 : vector<16x16x8xf32> to vector<256x8xf32>
    %c0_35 = arith.constant 0 : index
    %c48 = arith.constant 48 : index
    %26 = vector.load %arg13[%c0_35, %c48] : memref<256x72xf32, #tpu.memory_space<vmem>>, vector<256x8xf32>
    tpu.vector_store %arg13[%c0_35, %c48], %25 {strides = array<i32>} : memref<256x72xf32, #tpu.memory_space<vmem>>, vector<256x8xf32>,
    %c2_36 = arith.constant 2 : index
    %c1_37 = arith.constant 1 : index
    %c0_38 = arith.constant 0 : index
    %27 = vector.load %arg12[%c2_36, %c1_37, %c0_38] : memref<18x18x8xf32, #tpu.memory_space<vmem>>, vector<16x16x8xf32>
    %28 = vector.shape_cast %27 : vector<16x16x8xf32> to vector<256x8xf32>
    %c0_39 = arith.constant 0 : index
    %c56 = arith.constant 56 : index
    %29 = vector.load %arg13[%c0_39, %c56] : memref<256x72xf32, #tpu.memory_space<vmem>>, vector<256x8xf32>
    tpu.vector_store %arg13[%c0_39, %c56], %28 {strides = array<i32>} : memref<256x72xf32, #tpu.memory_space<vmem>>, vector<256x8xf32>,
    %c2_40 = arith.constant 2 : index
    %c2_41 = arith.constant 2 : index
    %c0_42 = arith.constant 0 : index
    %30 = vector.load %arg12[%c2_40, %c2_41, %c0_42] : memref<18x18x8xf32, #tpu.memory_space<vmem>>, vector<16x16x8xf32>
    %31 = vector.shape_cast %30 : vector<16x16x8xf32> to vector<256x8xf32>
    %c0_43 = arith.constant 0 : index
    %c64 = arith.constant 64 : index
    %32 = vector.load %arg13[%c0_43, %c64] : memref<256x72xf32, #tpu.memory_space<vmem>>, vector<256x8xf32>
    tpu.vector_store %arg13[%c0_43, %c64], %31 {strides = array<i32>} : memref<256x72xf32, #tpu.memory_space<vmem>>, vector<256x8xf32>,
    %c0_44 = arith.constant 0 : index
    %c0_45 = arith.constant 0 : index
    %33 = vector.load %arg13[%c0_44, %c0_45] : memref<256x72xf32, #tpu.memory_space<vmem>>, vector<256x72xf32>
    %c0_46 = arith.constant 0 : index
    %c0_47 = arith.constant 0 : index
    %34 = vector.load %arg2[%c0_46, %c0_47] : memref<72x8xf32, #tpu.memory_space<vmem>>, vector<72x8xf32>
    %cst_48 = arith.constant dense<0.000000e+00> : vector<256x8xf32>
    %35 = tpu.matmul %33, %34, %cst_48 {dimension_numbers = #tpu.dot_dimension_numbers<[1], [0], [0], [1], [0, 0, 1, 1], [], []>} : vector<256x72xf32>, vector<72x8xf32>, vector<256x8xf32> -> vector<256x8xf32>
    %c0_49 = arith.constant 0 : index
    %c0_50 = arith.constant 0 : index
    %36 = vector.load %arg3[%c0_49, %c0_50] : memref<1x8xf32, #tpu.memory_space<vmem>>, vector<1x8xf32>
    %37 = vector.broadcast %36 : vector<1x8xf32> to vector<256x8xf32>
    %38 = arith.addf %35, %37 : vector<256x8xf32>
    %cst_51 = arith.constant 0.000000e+00 : f32
    %39 = vector.broadcast %cst_51 : f32 to vector<256x8xf32>
    %40 = arith.maximumf %38, %39 : vector<256x8xf32>
    %c0_52 = arith.constant 0 : index
    %c0_53 = arith.constant 0 : index
    %41 = vector.load %arg8[%c0_52, %c0_53] : memref<1x256xf32, #tpu.memory_space<vmem>>, vector<1x256xf32>
    %cst_54 = arith.constant dense<0.000000e+00> : vector<1x8xf32>
    %42 = tpu.matmul %41, %40, %cst_54 {dimension_numbers = #tpu.dot_dimension_numbers<[1], [0], [0], [1], [0, 0, 1, 1], [], []>} : vector<1x256xf32>, vector<256x8xf32>, vector<1x8xf32> -> vector<1x8xf32>
    %c0_55 = arith.constant 0 : index
    %c0_56 = arith.constant 0 : index
    %43 = vector.load %arg7[%c0_55, %c0_56] : memref<8x2xf32, #tpu.memory_space<vmem>>, vector<8x2xf32>
    %cst_57 = arith.constant dense<0.000000e+00> : vector<1x2xf32>
    %44 = tpu.matmul %42, %43, %cst_57 {dimension_numbers = #tpu.dot_dimension_numbers<[1], [0], [0], [1], [0, 0, 1, 1], [], []>} : vector<1x8xf32>, vector<8x2xf32>, vector<1x2xf32> -> vector<1x2xf32>
    %c0_58 = arith.constant 0 : index
    %c0_59 = arith.constant 0 : index
    %45 = vector.load %arg9[%c0_58, %c0_59] : memref<1x2xf32, #tpu.memory_space<vmem>>, vector<1x2xf32>
    %46 = arith.addf %44, %45 : vector<1x2xf32>
    %47 = vector.shape_cast %40 : vector<256x8xf32> to vector<16x16x8xf32>
    %c1_60 = arith.constant 1 : index
    %c1_61 = arith.constant 1 : index
    %c0_62 = arith.constant 0 : index
    %48 = vector.load %arg12[%c1_60, %c1_61, %c0_62] : memref<18x18x8xf32, #tpu.memory_space<vmem>>, vector<16x16x8xf32>
    tpu.vector_store %arg12[%c1_60, %c1_61, %c0_62], %47 {strides = array<i32>} : memref<18x18x8xf32, #tpu.memory_space<vmem>>, vector<16x16x8xf32>,
    %c0_63 = arith.constant 0 : index
    %c0_64 = arith.constant 0 : index
    %c0_65 = arith.constant 0 : index
    %49 = vector.load %arg12[%c0_63, %c0_64, %c0_65] : memref<18x18x8xf32, #tpu.memory_space<vmem>>, vector<16x16x8xf32>
    %50 = vector.shape_cast %49 : vector<16x16x8xf32> to vector<256x8xf32>
    %c0_66 = arith.constant 0 : index
    %c0_67 = arith.constant 0 : index
    %51 = vector.load %arg13[%c0_66, %c0_67] : memref<256x72xf32, #tpu.memory_space<vmem>>, vector<256x8xf32>
    tpu.vector_store %arg13[%c0_66, %c0_67], %50 {strides = array<i32>} : memref<256x72xf32, #tpu.memory_space<vmem>>, vector<256x8xf32>,
    %c0_68 = arith.constant 0 : index
    %c1_69 = arith.constant 1 : index
    %c0_70 = arith.constant 0 : index
    %52 = vector.load %arg12[%c0_68, %c1_69, %c0_70] : memref<18x18x8xf32, #tpu.memory_space<vmem>>, vector<16x16x8xf32>
    %53 = vector.shape_cast %52 : vector<16x16x8xf32> to vector<256x8xf32>
    %c0_71 = arith.constant 0 : index
    %c8_72 = arith.constant 8 : index
    %54 = vector.load %arg13[%c0_71, %c8_72] : memref<256x72xf32, #tpu.memory_space<vmem>>, vector<256x8xf32>
    tpu.vector_store %arg13[%c0_71, %c8_72], %53 {strides = array<i32>} : memref<256x72xf32, #tpu.memory_space<vmem>>, vector<256x8xf32>,
    %c0_73 = arith.constant 0 : index
    %c2_74 = arith.constant 2 : index
    %c0_75 = arith.constant 0 : index
    %55 = vector.load %arg12[%c0_73, %c2_74, %c0_75] : memref<18x18x8xf32, #tpu.memory_space<vmem>>, vector<16x16x8xf32>
    %56 = vector.shape_cast %55 : vector<16x16x8xf32> to vector<256x8xf32>
    %c0_76 = arith.constant 0 : index
    %c16_77 = arith.constant 16 : index
    %57 = vector.load %arg13[%c0_76, %c16_77] : memref<256x72xf32, #tpu.memory_space<vmem>>, vector<256x8xf32>
    tpu.vector_store %arg13[%c0_76, %c16_77], %56 {strides = array<i32>} : memref<256x72xf32, #tpu.memory_space<vmem>>, vector<256x8xf32>,
    %c1_78 = arith.constant 1 : index
    %c0_79 = arith.constant 0 : index
    %c0_80 = arith.constant 0 : index
    %58 = vector.load %arg12[%c1_78, %c0_79, %c0_80] : memref<18x18x8xf32, #tpu.memory_space<vmem>>, vector<16x16x8xf32>
    %59 = vector.shape_cast %58 : vector<16x16x8xf32> to vector<256x8xf32>
    %c0_81 = arith.constant 0 : index
    %c24_82 = arith.constant 24 : index
    %60 = vector.load %arg13[%c0_81, %c24_82] : memref<256x72xf32, #tpu.memory_space<vmem>>, vector<256x8xf32>
    tpu.vector_store %arg13[%c0_81, %c24_82], %59 {strides = array<i32>} : memref<256x72xf32, #tpu.memory_space<vmem>>, vector<256x8xf32>,
    %c1_83 = arith.constant 1 : index
    %c1_84 = arith.constant 1 : index
    %c0_85 = arith.constant 0 : index
    %61 = vector.load %arg12[%c1_83, %c1_84, %c0_85] : memref<18x18x8xf32, #tpu.memory_space<vmem>>, vector<16x16x8xf32>
    %62 = vector.shape_cast %61 : vector<16x16x8xf32> to vector<256x8xf32>
    %c0_86 = arith.constant 0 : index
    %c32_87 = arith.constant 32 : index
    %63 = vector.load %arg13[%c0_86, %c32_87] : memref<256x72xf32, #tpu.memory_space<vmem>>, vector<256x8xf32>
    tpu.vector_store %arg13[%c0_86, %c32_87], %62 {strides = array<i32>} : memref<256x72xf32, #tpu.memory_space<vmem>>, vector<256x8xf32>,
    %c1_88 = arith.constant 1 : index
    %c2_89 = arith.constant 2 : index
    %c0_90 = arith.constant 0 : index
    %64 = vector.load %arg12[%c1_88, %c2_89, %c0_90] : memref<18x18x8xf32, #tpu.memory_space<vmem>>, vector<16x16x8xf32>
    %65 = vector.shape_cast %64 : vector<16x16x8xf32> to vector<256x8xf32>
    %c0_91 = arith.constant 0 : index
    %c40_92 = arith.constant 40 : index
    %66 = vector.load %arg13[%c0_91, %c40_92] : memref<256x72xf32, #tpu.memory_space<vmem>>, vector<256x8xf32>
    tpu.vector_store %arg13[%c0_91, %c40_92], %65 {strides = array<i32>} : memref<256x72xf32, #tpu.memory_space<vmem>>, vector<256x8xf32>,
    %c2_93 = arith.constant 2 : index
    %c0_94 = arith.constant 0 : index
    %c0_95 = arith.constant 0 : index
    %67 = vector.load %arg12[%c2_93, %c0_94, %c0_95] : memref<18x18x8xf32, #tpu.memory_space<vmem>>, vector<16x16x8xf32>
    %68 = vector.shape_cast %67 : vector<16x16x8xf32> to vector<256x8xf32>
    %c0_96 = arith.constant 0 : index
    %c48_97 = arith.constant 48 : index
    %69 = vector.load %arg13[%c0_96, %c48_97] : memref<256x72xf32, #tpu.memory_space<vmem>>, vector<256x8xf32>
    tpu.vector_store %arg13[%c0_96, %c48_97], %68 {strides = array<i32>} : memref<256x72xf32, #tpu.memory_space<vmem>>, vector<256x8xf32>,
    %c2_98 = arith.constant 2 : index
    %c1_99 = arith.constant 1 : index
    %c0_100 = arith.constant 0 : index
    %70 = vector.load %arg12[%c2_98, %c1_99, %c0_100] : memref<18x18x8xf32, #tpu.memory_space<vmem>>, vector<16x16x8xf32>
    %71 = vector.shape_cast %70 : vector<16x16x8xf32> to vector<256x8xf32>
    %c0_101 = arith.constant 0 : index
    %c56_102 = arith.constant 56 : index
    %72 = vector.load %arg13[%c0_101, %c56_102] : memref<256x72xf32, #tpu.memory_space<vmem>>, vector<256x8xf32>
    tpu.vector_store %arg13[%c0_101, %c56_102], %71 {strides = array<i32>} : memref<256x72xf32, #tpu.memory_space<vmem>>, vector<256x8xf32>,
    %c2_103 = arith.constant 2 : index
    %c2_104 = arith.constant 2 : index
    %c0_105 = arith.constant 0 : index
    %73 = vector.load %arg12[%c2_103, %c2_104, %c0_105] : memref<18x18x8xf32, #tpu.memory_space<vmem>>, vector<16x16x8xf32>
    %74 = vector.shape_cast %73 : vector<16x16x8xf32> to vector<256x8xf32>
    %c0_106 = arith.constant 0 : index
    %c64_107 = arith.constant 64 : index
    %75 = vector.load %arg13[%c0_106, %c64_107] : memref<256x72xf32, #tpu.memory_space<vmem>>, vector<256x8xf32>
    tpu.vector_store %arg13[%c0_106, %c64_107], %74 {strides = array<i32>} : memref<256x72xf32, #tpu.memory_space<vmem>>, vector<256x8xf32>,
    %c0_108 = arith.constant 0 : index
    %c0_109 = arith.constant 0 : index
    %76 = vector.load %arg13[%c0_108, %c0_109] : memref<256x72xf32, #tpu.memory_space<vmem>>, vector<256x72xf32>
    %c0_110 = arith.constant 0 : index
    %c0_111 = arith.constant 0 : index
    %77 = vector.load %arg4[%c0_110, %c0_111] : memref<72x8xf32, #tpu.memory_space<vmem>>, vector<72x8xf32>
    %cst_112 = arith.constant dense<0.000000e+00> : vector<256x8xf32>
    %78 = tpu.matmul %76, %77, %cst_112 {dimension_numbers = #tpu.dot_dimension_numbers<[1], [0], [0], [1], [0, 0, 1, 1], [], []>} : vector<256x72xf32>, vector<72x8xf32>, vector<256x8xf32> -> vector<256x8xf32>
    %c0_113 = arith.constant 0 : index
    %c0_114 = arith.constant 0 : index
    %79 = vector.load %arg5[%c0_113, %c0_114] : memref<72x2xf32, #tpu.memory_space<vmem>>, vector<72x2xf32>
    %cst_115 = arith.constant dense<0.000000e+00> : vector<256x2xf32>
    %80 = tpu.matmul %76, %79, %cst_115 {dimension_numbers = #tpu.dot_dimension_numbers<[1], [0], [0], [1], [0, 0, 1, 1], [], []>} : vector<256x72xf32>, vector<72x2xf32>, vector<256x2xf32> -> vector<256x2xf32>
    %81 = vector.broadcast %46 : vector<1x2xf32> to vector<256x2xf32>
    %82 = arith.mulf %80, %81 : vector<256x2xf32>
    %c0_116 = arith.constant 0 : index
    %c0_117 = arith.constant 0 : index
    %83 = vector.load %arg6[%c0_116, %c0_117] : memref<2x8xf32, #tpu.memory_space<vmem>>, vector<2x8xf32>
    %cst_118 = arith.constant dense<0.000000e+00> : vector<256x8xf32>
    %84 = tpu.matmul %82, %83, %cst_118 {dimension_numbers = #tpu.dot_dimension_numbers<[1], [0], [0], [1], [0, 0, 1, 1], [], []>} : vector<256x2xf32>, vector<2x8xf32>, vector<256x8xf32> -> vector<256x8xf32>
    %c0_119 = arith.constant 0 : index
    %c0_120 = arith.constant 0 : index
    %85 = vector.load %arg10[%c0_119, %c0_120] : memref<1x8xf32, #tpu.memory_space<vmem>>, vector<1x8xf32>
    %86 = vector.broadcast %85 : vector<1x8xf32> to vector<256x8xf32>
    %87 = arith.addf %86, %4 : vector<256x8xf32>
    %88 = arith.addf %78, %84 : vector<256x8xf32>
    %89 = arith.addf %88, %87 : vector<256x8xf32>
    %cst_121 = arith.constant 0.000000e+00 : f32
    %90 = vector.broadcast %cst_121 : f32 to vector<256x8xf32>
    %91 = arith.maximumf %89, %90 : vector<256x8xf32>
    %c0_122 = arith.constant 0 : index
    %c0_123 = arith.constant 0 : index
    %c0_124 = arith.constant 0 : index
    %c0_125 = arith.constant 0 : index
    %92 = vector.load %arg11[%c0_122, %c0_123, %c0_124, %c0_125] : memref<1x3x256x8xf32, #tpu.memory_space<vmem>>, vector<1x1x256x8xf32>
    %93 = vector.shape_cast %92 : vector<1x1x256x8xf32> to vector<256x8xf32>
    %94 = vector.shape_cast %91 : vector<256x8xf32> to vector<1x1x256x8xf32>
    tpu.vector_store %arg11[%c0_122, %c0_123, %c0_124, %c0_125], %94 {strides = array<i32>} : memref<1x3x256x8xf32, #tpu.memory_space<vmem>>, vector<1x1x256x8xf32>,
    %95 = arith.addf %78, %87 : vector<256x8xf32>
    %cst_126 = arith.constant 0.000000e+00 : f32
    %96 = vector.broadcast %cst_126 : f32 to vector<256x8xf32>
    %97 = arith.maximumf %95, %96 : vector<256x8xf32>
    %c0_127 = arith.constant 0 : index
    %c1_128 = arith.constant 1 : index
    %c0_129 = arith.constant 0 : index
    %c0_130 = arith.constant 0 : index
    %98 = vector.load %arg11[%c0_127, %c1_128, %c0_129, %c0_130] : memref<1x3x256x8xf32, #tpu.memory_space<vmem>>, vector<1x1x256x8xf32>
    %99 = vector.shape_cast %98 : vector<1x1x256x8xf32> to vector<256x8xf32>
    %100 = vector.shape_cast %97 : vector<256x8xf32> to vector<1x1x256x8xf32>
    tpu.vector_store %arg11[%c0_127, %c1_128, %c0_129, %c0_130], %100 {strides = array<i32>} : memref<1x3x256x8xf32, #tpu.memory_space<vmem>>, vector<1x1x256x8xf32>,
    %101 = arith.addf %84, %87 : vector<256x8xf32>
    %cst_131 = arith.constant 0.000000e+00 : f32
    %102 = vector.broadcast %cst_131 : f32 to vector<256x8xf32>
    %103 = arith.maximumf %101, %102 : vector<256x8xf32>
    %c0_132 = arith.constant 0 : index
    %c2_133 = arith.constant 2 : index
    %c0_134 = arith.constant 0 : index
    %c0_135 = arith.constant 0 : index
    %104 = vector.load %arg11[%c0_132, %c2_133, %c0_134, %c0_135] : memref<1x3x256x8xf32, #tpu.memory_space<vmem>>, vector<1x1x256x8xf32>
    %105 = vector.shape_cast %104 : vector<1x1x256x8xf32> to vector<256x8xf32>
    %106 = vector.shape_cast %103 : vector<256x8xf32> to vector<1x1x256x8xf32>
    tpu.vector_store %arg11[%c0_132, %c2_133, %c0_134, %c0_135], %106 {strides = array<i32>} : memref<1x3x256x8xf32, #tpu.memory_space<vmem>>, vector<1x1x256x8xf32>,
    return
  }
  func.func @transform_0(%arg0: i32) -> (i32, i32, i32, i32) {
    %c0_i32 = arith.constant 0 : i32
    %c0_i32_0 = arith.constant 0 : i32
    %c0_i32_1 = arith.constant 0 : i32
    %c0_i32_2 = arith.constant 0 : i32
    return %arg0, %c0_i32, %c0_i32_0, %c0_i32_1 : i32, i32, i32, i32
  }
  func.func @transform_1(%arg0: i32) -> (i32, i32) {
    %c0_i32 = arith.constant 0 : i32
    %c0_i32_0 = arith.constant 0 : i32
    %c0_i32_1 = arith.constant 0 : i32
    return %c0_i32, %c0_i32_0 : i32, i32
  }
  func.func @transform_2(%arg0: i32) -> (i32, i32) {
    %c0_i32 = arith.constant 0 : i32
    %c0_i32_0 = arith.constant 0 : i32
    %c0_i32_1 = arith.constant 0 : i32
    return %c0_i32, %c0_i32_0 : i32, i32
  }
  func.func @transform_3(%arg0: i32) -> (i32, i32) {
    %c0_i32 = arith.constant 0 : i32
    %c0_i32_0 = arith.constant 0 : i32
    %c0_i32_1 = arith.constant 0 : i32
    return %c0_i32, %c0_i32_0 : i32, i32
  }
  func.func @transform_4(%arg0: i32) -> (i32, i32) {
    %c0_i32 = arith.constant 0 : i32
    %c0_i32_0 = arith.constant 0 : i32
    %c0_i32_1 = arith.constant 0 : i32
    return %c0_i32, %c0_i32_0 : i32, i32
  }
  func.func @transform_5(%arg0: i32) -> (i32, i32) {
    %c0_i32 = arith.constant 0 : i32
    %c0_i32_0 = arith.constant 0 : i32
    %c0_i32_1 = arith.constant 0 : i32
    return %c0_i32, %c0_i32_0 : i32, i32
  }
  func.func @transform_6(%arg0: i32) -> (i32, i32) {
    %c0_i32 = arith.constant 0 : i32
    %c0_i32_0 = arith.constant 0 : i32
    %c0_i32_1 = arith.constant 0 : i32
    return %c0_i32, %c0_i32_0 : i32, i32
  }
  func.func @transform_7(%arg0: i32) -> (i32, i32) {
    %c0_i32 = arith.constant 0 : i32
    %c0_i32_0 = arith.constant 0 : i32
    %c0_i32_1 = arith.constant 0 : i32
    return %c0_i32, %c0_i32_0 : i32, i32
  }
  func.func @transform_8(%arg0: i32) -> (i32, i32) {
    %c0_i32 = arith.constant 0 : i32
    %c0_i32_0 = arith.constant 0 : i32
    %c0_i32_1 = arith.constant 0 : i32
    return %c0_i32, %c0_i32_0 : i32, i32
  }
  func.func @transform_9(%arg0: i32) -> (i32, i32) {
    %c0_i32 = arith.constant 0 : i32
    %c0_i32_0 = arith.constant 0 : i32
    %c0_i32_1 = arith.constant 0 : i32
    return %c0_i32, %c0_i32_0 : i32, i32
  }
  func.func @transform_10(%arg0: i32) -> (i32, i32, i32, i32) {
    %c0_i32 = arith.constant 0 : i32
    %c0_i32_0 = arith.constant 0 : i32
    %c0_i32_1 = arith.constant 0 : i32
    %c0_i32_2 = arith.constant 0 : i32
    return %arg0, %c0_i32, %c0_i32_0, %c0_i32_1 : i32, i32, i32, i32
  }
}

</mosaic_0001>

<llo_original>
// kernel: tile.8
$region0: #{tile.8}
  #allocation0 [shape = 's32[1]{0}', space=sflag, size = 0x4, scoped, tag = 'scoped memory for tile.8']
  %s0 = inlined_call_operand.vmem [shape: f32[16], index: 0, kind: input, shape index: {}]
  %s1 = inlined_call_operand.vmem [shape: f32[16,16], index: 1, kind: output, shape index: {}]
  // Predicated region
  $region2: #{tile.8} parent=0 // pred_check
    _
  $region3: #{tile.8} parent=0 // pred_check_branch
    %3 = sbr.rel (0) target = $region5
  $region4: #{tile.8} parent=0 // pred_region
    _
  $region5: #{tile.8} parent=0 // pred_fallthru
    _
  %v4 = vld [vmem:[%s0] ss:$0 sm:$0xff]
  %5 = vst [vmem:[%s1] sm:$0xff] %v4
  %s6 = scalar_lea.vmem %s1, 8
  %7 = vst [vmem:[%s6] sm:$0xff] %v4

// kernel: tile.9
$region0: #{tile.9}
  %s0 = inlined_call_operand.vmem [shape: f32[16,16], index: 0, kind: input, shape index: {}]
  %s1 = inlined_call_operand.vmem [shape: f32[1,256], index: 1, kind: output, shape index: {}]
  $region1: #{tile.9} parent=0
    #allocation0 [shape = 'u8[8192]{0}', space=vmem, size = 0x2000, scoped, tag = 'scoped mem for output reshape']
    %s2 = smov 3
    %v3 = vld [vmem:[%s0] ss:$8 sm:%s2]
    %vm4 = vcmask 130048
    %5 = vst.msk [vmem:[#allocation0] ss:$8 sm:$0x3] %vm4, %v3
    %s6 = scalar_lea.vmem %s0, 7
    %s7 = smov 3
    %v8 = vld [vmem:[%s6] ss:$8 sm:%s7]
    %9 = vrot.lane.b32.xlu0 %v8, 112
    %v10 = vpop.permute.xlu0 %9
    %vm11 = vcmask 1048448
    %12 = vst.msk [vmem:[#allocation0] ss:$8 sm:$0x3] %vm11, %v10
    %s13 = scalar_lea.vmem %s0, 6
    %s14 = smov 3
    %v15 = vld [vmem:[%s13] ss:$8 sm:%s14]
    %16 = vrot.lane.b32.xlu0 %v15, 96
    %v17 = vpop.permute.xlu0 %16
    %vm18 = vcmask 917248
    %19 = vst.msk [vmem:[#allocation0] ss:$8 sm:$0x3] %vm18, %v17
    %s20 = scalar_lea.vmem %s0, 5
    %s21 = smov 3
    %v22 = vld [vmem:[%s20] ss:$8 sm:%s21]
    %23 = vrot.lane.b32.xlu0 %v22, 80
    %v24 = vpop.permute.xlu0 %23
    %vm25 = vcmask 786048
    %26 = vst.msk [vmem:[#allocation0] ss:$8 sm:$0x3] %vm25, %v24
    %s27 = scalar_lea.vmem %s0, 4
    %s28 = smov 3
    %v29 = vld [vmem:[%s27] ss:$8 sm:%s28]
    %30 = vrot.lane.b32.xlu0 %v29, 64
    %v31 = vpop.permute.xlu0 %30
    %vm32 = vcmask 654848
    %33 = vst.msk [vmem:[#allocation0] ss:$8 sm:$0x3] %vm32, %v31
    %s34 = scalar_lea.vmem %s0, 3
    %s35 = smov 3
    %v36 = vld [vmem:[%s34] ss:$8 sm:%s35]
    %37 = vrot.lane.b32.xlu0 %v36, 48
    %v38 = vpop.permute.xlu0 %37
    %vm39 = vcmask 523648
    %40 = vst.msk [vmem:[#allocation0] ss:$8 sm:$0x3] %vm39, %v38
    %s41 = scalar_lea.vmem %s0, 2
    %s42 = smov 3
    %v43 = vld [vmem:[%s41] ss:$8 sm:%s42]
    %44 = vrot.lane.b32.xlu0 %v43, 32
    %v45 = vpop.permute.xlu0 %44
    %vm46 = vcmask 392448
    %47 = vst.msk [vmem:[#allocation0] ss:$8 sm:$0x3] %vm46, %v45
    %s48 = scalar_lea.vmem %s0, 1
    %s49 = smov 3
    %v50 = vld [vmem:[%s48] ss:$8 sm:%s49]
    %51 = vrot.lane.b32.xlu0 %v50, 16
    %v52 = vpop.permute.xlu0 %51
    %vm53 = vcmask 261248
    %54 = vst.msk [vmem:[#allocation0] ss:$8 sm:$0x3] %vm53, %v52
    %s56 = sshll.u32 1, 1
    %s57 = ssub.s32 %s56, 1
    %v59 = vld [vmem:[#allocation0] sm:%s57]
    %s60 = sshll.u32 1, 1
    %s61 = ssub.s32 %s60, 1
    %62 = vst [vmem:[%s1] sm:%s61] %v59
    %s63 = scalar_lea.vmem [#allocation0], 8
    %v64 = vld [vmem:[%s63] sm:%s57]
    %s65 = sshll.u32 1, 1
    %s66 = ssub.s32 %s65, 1
    %s67 = scalar_lea.vmem %s1, 1
    %68 = vst [vmem:[%s67] sm:%s66] %v64

// kernel: basic_block_lrd_forward.1
$region0: #{basic_block_lrd_forward.1}
  #allocation0 [shape = 'u32[]', space=smem, size = 0x4, offset = 0x4, fixed_abs, tag = 'smem constant byte address 0x4 - core index']
  #allocation1 [shape = 'u32[144,128]{1,0:T(1,128)}', space=vmem, size = 0x12000, scoped, tag = 'internal scratch']
  #allocation2 [shape = 'f32[18,18,8]{2,1,0:T(8,128)}', space=vmem, size = 0x36000, scoped, tag = 'scratch operand']
  #allocation3 [shape = 'f32[256,72]{1,0:T(8,128)}', space=vmem, size = 0x20000, scoped, tag = 'scratch operand']
  %s0 = inlined_call_operand.vmem [shape: f32[2,16,16,8], index: 0, kind: input, shape index: {}]
  %s1 = inlined_call_operand.vmem [shape: f32[72,8], index: 1, kind: input, shape index: {}]
  %s2 = inlined_call_operand.vmem [shape: f32[1,8], index: 2, kind: input, shape index: {}]
  %s3 = inlined_call_operand.vmem [shape: f32[72,8], index: 3, kind: input, shape index: {}]
  %s4 = inlined_call_operand.vmem [shape: f32[72,2], index: 4, kind: input, shape index: {}]
  %s5 = inlined_call_operand.vmem [shape: f32[2,8], index: 5, kind: input, shape index: {}]
  %s6 = inlined_call_operand.vmem [shape: f32[8,2], index: 6, kind: input, shape index: {}]
  %s7 = inlined_call_operand.vmem [shape: f32[1,256], index: 7, kind: input, shape index: {}]
  %s8 = inlined_call_operand.vmem [shape: f32[1,2], index: 8, kind: input, shape index: {}]
  %s9 = inlined_call_operand.vmem [shape: f32[1,8], index: 9, kind: input, shape index: {}]
  %s10 = inlined_call_operand.vmem [shape: f32[2,3,256,8], index: 10, kind: output, shape index: {}]
  %s11 = sld [smem:[#allocation0]]
  $region73: #{basic_block_lrd_forward.1} parent=0
    _
  %s13 = ssub.s32 1, %s11
  %s14 = scalar_select 0, %s13, %s11
  loop: start=0, step=1, limit=4
  $region2: #{basic_block_lrd_forward.1} parent=0 // loop_pre_header
    _
  $region3: #{basic_block_lrd_forward.1} parent=0 // loop_header
    %s16 = sphi 0, %s20
    %p17 = scmp.ge.s32.totalorder %s16, 4
    %s26 = sphi 0, %s28
    %s29 = sphi 0, %s26
    %s30 = sphi 0, %s29
    %s46 = sphi 0, %s30
    %s50 = sphi 0, %s50
    %s52 = sphi 0, %s50
    %s53 = sphi 0, %s52
    %s67 = sphi 0, %s53
    %s71 = sphi 0, %s71
    %s73 = sphi 0, %s71
    %s74 = sphi 0, %s73
    %s88 = sphi 0, %s74
    %s92 = sphi 0, %s92
    %s94 = sphi 0, %s92
    %s95 = sphi 0, %s94
    %s109 = sphi 0, %s95
    %s113 = sphi 0, %s113
    %s115 = sphi 0, %s113
    %s116 = sphi 0, %s115
    %s130 = sphi 0, %s116
    %s134 = sphi 0, %s134
    %s136 = sphi 0, %s134
    %s137 = sphi 0, %s136
    %s151 = sphi 0, %s137
    %s155 = sphi 0, %s155
    %s157 = sphi 0, %s155
    %s158 = sphi 0, %s157
    %s172 = sphi 0, %s158
    %s176 = sphi 0, %s176
    %s178 = sphi 0, %s176
    %s179 = sphi 0, %s178
    %s193 = sphi 0, %s179
    %s197 = sphi 0, %s197
    %s199 = sphi 0, %s197
    %s200 = sphi 0, %s199
    %s214 = sphi 0, %s200
    %s218 = sphi 0, %s218
    %s220 = sphi 0, %s218
    %s221 = sphi 0, %s220
    %s235 = sphi 0, %s221
    %s241 = sphi 0, %s243
    %s244 = sphi 0, %s241
    %s245 = sphi 0, %s244
    %s261 = sphi 0, %s245
  $region4: #{basic_block_lrd_forward.1} parent=0 // loop_header_branch
    %19 = sbr.rel (%p17) target = $region8
  $region5: #{basic_block_lrd_forward.1} parent=0 // loop_body
    %s21 = ssub.s32 %s16, 1
    %s22 = ssub.s32 %s16, 2
    %s23 = sadd.s32 %s16, 1
    %s24 = ssub.s32 %s16, %s23
    %p25 = scmp.eq.s32.totalorder %s24, 0
    %s27 = sadd.s32 %s26, 1
    %s28 = scalar_select %p25, %s26, %s27
    %p31 = pneg %p25
    %p32 = scmp.eq.s32.totalorder %s16, 1
    %p33 = por %p31, %p32
    %p34 = scmp.ne.s32.totalorder %s26, %s29
    %p35 = scmp.eq.s32.totalorder %s16, 0
    %p36 = por %p34, %p35
    %p37 = scmp.ne.s32.totalorder %s26, %s29
    %p38 = scmp.eq.s32.totalorder %s21, 1
    %p39 = por %p37, %p38
    %p40 = scmp.ne.s32.totalorder %s29, %s30
    %p41 = scmp.eq.s32.totalorder %s21, 0
    %p42 = por %p40, %p41
    %p43 = scmp.ne.s32.totalorder %s29, %s30
    %p44 = scmp.eq.s32.totalorder %s22, 1
    %p45 = por %p43, %p44
    %p47 = scmp.ne.s32.totalorder %s30, %s46
    %p48 = scmp.eq.s32.totalorder %s22, 0
    %p49 = por %p47, %p48
    %s51 = sadd.s32 %s50, 1
    %p54 = scmp.eq.s32.totalorder %s16, 1
    %p55 = scmp.ne.s32.totalorder %s50, %s52
    %p56 = scmp.eq.s32.totalorder %s16, 0
    %p57 = por %p55, %p56
    %p58 = scmp.ne.s32.totalorder %s50, %s52
    %p59 = scmp.eq.s32.totalorder %s21, 1
    %p60 = por %p58, %p59
    %p61 = scmp.ne.s32.totalorder %s52, %s53
    %p62 = scmp.eq.s32.totalorder %s21, 0
    %p63 = por %p61, %p62
    %p64 = scmp.ne.s32.totalorder %s52, %s53
    %p65 = scmp.eq.s32.totalorder %s22, 1
    %p66 = por %p64, %p65
    %p68 = scmp.ne.s32.totalorder %s53, %s67
    %p69 = scmp.eq.s32.totalorder %s22, 0
    %p70 = por %p68, %p69
    %s72 = sadd.s32 %s71, 1
    %p75 = scmp.eq.s32.totalorder %s16, 1
    %p76 = scmp.ne.s32.totalorder %s71, %s73
    %p77 = scmp.eq.s32.totalorder %s16, 0
    %p78 = por %p76, %p77
    %p79 = scmp.ne.s32.totalorder %s71, %s73
    %p80 = scmp.eq.s32.totalorder %s21, 1
    %p81 = por %p79, %p80
    %p82 = scmp.ne.s32.totalorder %s73, %s74
    %p83 = scmp.eq.s32.totalorder %s21, 0
    %p84 = por %p82, %p83
    %p85 = scmp.ne.s32.totalorder %s73, %s74
    %p86 = scmp.eq.s32.totalorder %s22, 1
    %p87 = por %p85, %p86
    %p89 = scmp.ne.s32.totalorder %s74, %s88
    %p90 = scmp.eq.s32.totalorder %s22, 0
    %p91 = por %p89, %p90
    %s93 = sadd.s32 %s92, 1
    %p96 = scmp.eq.s32.totalorder %s16, 1
    %p97 = scmp.ne.s32.totalorder %s92, %s94
    %p98 = scmp.eq.s32.totalorder %s16, 0
    %p99 = por %p97, %p98
    %p100 = scmp.ne.s32.totalorder %s92, %s94
    %p101 = scmp.eq.s32.totalorder %s21, 1
    %p102 = por %p100, %p101
    %p103 = scmp.ne.s32.totalorder %s94, %s95
    %p104 = scmp.eq.s32.totalorder %s21, 0
    %p105 = por %p103, %p104
    %p106 = scmp.ne.s32.totalorder %s94, %s95
    %p107 = scmp.eq.s32.totalorder %s22, 1
    %p108 = por %p106, %p107
    %p110 = scmp.ne.s32.totalorder %s95, %s109
    %p111 = scmp.eq.s32.totalorder %s22, 0
    %p112 = por %p110, %p111
    %s114 = sadd.s32 %s113, 1
    %p117 = scmp.eq.s32.totalorder %s16, 1
    %p118 = scmp.ne.s32.totalorder %s113, %s115
    %p119 = scmp.eq.s32.totalorder %s16, 0
    %p120 = por %p118, %p119
    %p121 = scmp.ne.s32.totalorder %s113, %s115
    %p122 = scmp.eq.s32.totalorder %s21, 1
    %p123 = por %p121, %p122
    %p124 = scmp.ne.s32.totalorder %s115, %s116
    %p125 = scmp.eq.s32.totalorder %s21, 0
    %p126 = por %p124, %p125
    %p127 = scmp.ne.s32.totalorder %s115, %s116
    %p128 = scmp.eq.s32.totalorder %s22, 1
    %p129 = por %p127, %p128
    %p131 = scmp.ne.s32.totalorder %s116, %s130
    %p132 = scmp.eq.s32.totalorder %s22, 0
    %p133 = por %p131, %p132
    %s135 = sadd.s32 %s134, 1
    %p138 = scmp.eq.s32.totalorder %s16, 1
    %p139 = scmp.ne.s32.totalorder %s134, %s136
    %p140 = scmp.eq.s32.totalorder %s16, 0
    %p141 = por %p139, %p140
    %p142 = scmp.ne.s32.totalorder %s134, %s136
    %p143 = scmp.eq.s32.totalorder %s21, 1
    %p144 = por %p142, %p143
    %p145 = scmp.ne.s32.totalorder %s136, %s137
    %p146 = scmp.eq.s32.totalorder %s21, 0
    %p147 = por %p145, %p146
    %p148 = scmp.ne.s32.totalorder %s136, %s137
    %p149 = scmp.eq.s32.totalorder %s22, 1
    %p150 = por %p148, %p149
    %p152 = scmp.ne.s32.totalorder %s137, %s151
    %p153 = scmp.eq.s32.totalorder %s22, 0
    %p154 = por %p152, %p153
    %s156 = sadd.s32 %s155, 1
    %p159 = scmp.eq.s32.totalorder %s16, 1
    %p160 = scmp.ne.s32.totalorder %s155, %s157
    %p161 = scmp.eq.s32.totalorder %s16, 0
    %p162 = por %p160, %p161
    %p163 = scmp.ne.s32.totalorder %s155, %s157
    %p164 = scmp.eq.s32.totalorder %s21, 1
    %p165 = por %p163, %p164
    %p166 = scmp.ne.s32.totalorder %s157, %s158
    %p167 = scmp.eq.s32.totalorder %s21, 0
    %p168 = por %p166, %p167
    %p169 = scmp.ne.s32.totalorder %s157, %s158
    %p170 = scmp.eq.s32.totalorder %s22, 1
    %p171 = por %p169, %p170
    %p173 = scmp.ne.s32.totalorder %s158, %s172
    %p174 = scmp.eq.s32.totalorder %s22, 0
    %p175 = por %p173, %p174
    %s177 = sadd.s32 %s176, 1
    %p180 = scmp.eq.s32.totalorder %s16, 1
    %p181 = scmp.ne.s32.totalorder %s176, %s178
    %p182 = scmp.eq.s32.totalorder %s16, 0
    %p183 = por %p181, %p182
    %p184 = scmp.ne.s32.totalorder %s176, %s178
    %p185 = scmp.eq.s32.totalorder %s21, 1
    %p186 = por %p184, %p185
    %p187 = scmp.ne.s32.totalorder %s178, %s179
    %p188 = scmp.eq.s32.totalorder %s21, 0
    %p189 = por %p187, %p188
    %p190 = scmp.ne.s32.totalorder %s178, %s179
    %p191 = scmp.eq.s32.totalorder %s22, 1
    %p192 = por %p190, %p191
    %p194 = scmp.ne.s32.totalorder %s179, %s193
    %p195 = scmp.eq.s32.totalorder %s22, 0
    %p196 = por %p194, %p195
    %s198 = sadd.s32 %s197, 1
    %p201 = scmp.eq.s32.totalorder %s16, 1
    %p202 = scmp.ne.s32.totalorder %s197, %s199
    %p203 = scmp.eq.s32.totalorder %s16, 0
    %p204 = por %p202, %p203
    %p205 = scmp.ne.s32.totalorder %s197, %s199
    %p206 = scmp.eq.s32.totalorder %s21, 1
    %p207 = por %p205, %p206
    %p208 = scmp.ne.s32.totalorder %s199, %s200
    %p209 = scmp.eq.s32.totalorder %s21, 0
    %p210 = por %p208, %p209
    %p211 = scmp.ne.s32.totalorder %s199, %s200
    %p212 = scmp.eq.s32.totalorder %s22, 1
    %p213 = por %p211, %p212
    %p215 = scmp.ne.s32.totalorder %s200, %s214
    %p216 = scmp.eq.s32.totalorder %s22, 0
    %p217 = por %p215, %p216
    %s219 = sadd.s32 %s218, 1
    %p222 = scmp.eq.s32.totalorder %s16, 1
    %p223 = scmp.ne.s32.totalorder %s218, %s220
    %p224 = scmp.eq.s32.totalorder %s16, 0
    %p225 = por %p223, %p224
    %p226 = scmp.ne.s32.totalorder %s218, %s220
    %p227 = scmp.eq.s32.totalorder %s21, 1
    %p228 = por %p226, %p227
    %p229 = scmp.ne.s32.totalorder %s220, %s221
    %p230 = scmp.eq.s32.totalorder %s21, 0
    %p231 = por %p229, %p230
    %p232 = scmp.ne.s32.totalorder %s220, %s221
    %p233 = scmp.eq.s32.totalorder %s22, 1
    %p234 = por %p232, %p233
    %p236 = scmp.ne.s32.totalorder %s221, %s235
    %p237 = scmp.eq.s32.totalorder %s22, 0
    %p238 = por %p236, %p237
    %s239 = ssub.s32 %s16, %s23
    %p240 = scmp.eq.s32.totalorder %s239, 0
    %s242 = sadd.s32 %s241, 1
    %s243 = scalar_select %p240, %s241, %s242
    %p246 = pneg %p240
    %p247 = scmp.eq.s32.totalorder %s16, 1
    %p248 = por %p246, %p247
    %p249 = scmp.ne.s32.totalorder %s241, %s244
    %p250 = scmp.eq.s32.totalorder %s16, 0
    %p251 = por %p249, %p250
    %p252 = scmp.ne.s32.totalorder %s241, %s244
    %p253 = scmp.eq.s32.totalorder %s21, 1
    %p254 = por %p252, %p253
    %p255 = scmp.ne.s32.totalorder %s244, %s245
    %p256 = scmp.eq.s32.totalorder %s21, 0
    %p257 = por %p255, %p256
    %p258 = scmp.ne.s32.totalorder %s244, %s245
    %p259 = scmp.eq.s32.totalorder %s22, 1
    %p260 = por %p258, %p259
    %p262 = scmp.ne.s32.totalorder %s245, %s261
    %p263 = scmp.eq.s32.totalorder %s22, 0
    %p264 = por %p262, %p263
    %p265 = scmp.le.s32.totalorder 1, %s16
    %p266 = scmp.lt.s32.totalorder %s16, 3
    %p267 = pnand %p265, %p266
    %p268 = pneg %p267
    // Predicated region
    $region9: #{basic_block_lrd_forward.1} parent=5 // pred_check
      _
    $region10: #{basic_block_lrd_forward.1} parent=5 // pred_check_branch
      %270 = sbr.rel (%p267) target = $region12
    $region11: #{basic_block_lrd_forward.1} parent=5 // pred_region
      %s271 = ssub.s32 %s16, 1
      // Predicated region
      $region13: #{basic_block_lrd_forward.1} parent=11 // pred_check
        %p272 = pneg %p63
      $region14: #{basic_block_lrd_forward.1} parent=11 // pred_check_branch
        %274 = sbr.rel (%p272) target = $region16
      $region15: #{basic_block_lrd_forward.1} parent=11 // pred_region
        _
      $region16: #{basic_block_lrd_forward.1} parent=11 // pred_fallthru
        _
      // Predicated region
      $region17: #{basic_block_lrd_forward.1} parent=11 // pred_check
        %p275 = pneg %p84
      $region18: #{basic_block_lrd_forward.1} parent=11 // pred_check_branch
        %277 = sbr.rel (%p275) target = $region20
      $region19: #{basic_block_lrd_forward.1} parent=11 // pred_region
        _
      $region20: #{basic_block_lrd_forward.1} parent=11 // pred_fallthru
        _
      // Predicated region
      $region21: #{basic_block_lrd_forward.1} parent=11 // pred_check
        %p278 = pneg %p105
      $region22: #{basic_block_lrd_forward.1} parent=11 // pred_check_branch
        %280 = sbr.rel (%p278) target = $region24
      $region23: #{basic_block_lrd_forward.1} parent=11 // pred_region
        _
      $region24: #{basic_block_lrd_forward.1} parent=11 // pred_fallthru
        _
      // Predicated region
      $region25: #{basic_block_lrd_forward.1} parent=11 // pred_check
        %p281 = pneg %p126
      $region26: #{basic_block_lrd_forward.1} parent=11 // pred_check_branch
        %283 = sbr.rel (%p281) target = $region28
      $region27: #{basic_block_lrd_forward.1} parent=11 // pred_region
        _
      $region28: #{basic_block_lrd_forward.1} parent=11 // pred_fallthru
        _
      // Predicated region
      $region29: #{basic_block_lrd_forward.1} parent=11 // pred_check
        %p284 = pneg %p147
      $region30: #{basic_block_lrd_forward.1} parent=11 // pred_check_branch
        %286 = sbr.rel (%p284) target = $region32
      $region31: #{basic_block_lrd_forward.1} parent=11 // pred_region
        _
      $region32: #{basic_block_lrd_forward.1} parent=11 // pred_fallthru
        _
      // Predicated region
      $region33: #{basic_block_lrd_forward.1} parent=11 // pred_check
        %p287 = pneg %p168
      $region34: #{basic_block_lrd_forward.1} parent=11 // pred_check_branch
        %289 = sbr.rel (%p287) target = $region36
      $region35: #{basic_block_lrd_forward.1} parent=11 // pred_region
        _
      $region36: #{basic_block_lrd_forward.1} parent=11 // pred_fallthru
        _
      // Predicated region
      $region37: #{basic_block_lrd_forward.1} parent=11 // pred_check
        %p290 = pneg %p189
      $region38: #{basic_block_lrd_forward.1} parent=11 // pred_check_branch
        %292 = sbr.rel (%p290) target = $region40
      $region39: #{basic_block_lrd_forward.1} parent=11 // pred_region
        _
      $region40: #{basic_block_lrd_forward.1} parent=11 // pred_fallthru
        _
      // Predicated region
      $region41: #{basic_block_lrd_forward.1} parent=11 // pred_check
        %p293 = pneg %p210
      $region42: #{basic_block_lrd_forward.1} parent=11 // pred_check_branch
        %295 = sbr.rel (%p293) target = $region44
      $region43: #{basic_block_lrd_forward.1} parent=11 // pred_region
        _
      $region44: #{basic_block_lrd_forward.1} parent=11 // pred_fallthru
        _
      // Predicated region
      $region45: #{basic_block_lrd_forward.1} parent=11 // pred_check
        %p296 = pneg %p231
      $region46: #{basic_block_lrd_forward.1} parent=11 // pred_check_branch
        %298 = sbr.rel (%p296) target = $region48
      $region47: #{basic_block_lrd_forward.1} parent=11 // pred_region
        _
      $region48: #{basic_block_lrd_forward.1} parent=11 // pred_fallthru
        _
    $region12: #{basic_block_lrd_forward.1} parent=5 // pred_fallthru
      _
    %p299 = scmp.lt.s32.totalorder %s16, 2
    // Predicated region
    $region49: #{basic_block_lrd_forward.1} parent=5 // pred_check
      %p300 = pneg %p299
    $region50: #{basic_block_lrd_forward.1} parent=5 // pred_check_branch
      %302 = sbr.rel (%p300) target = $region52
    $region51: #{basic_block_lrd_forward.1} parent=5 // pred_region
      // Predicated region
      $region53: #{basic_block_lrd_forward.1} parent=51 // pred_check
        %p303 = pneg %p36
      $region54: #{basic_block_lrd_forward.1} parent=51 // pred_check_branch
        %305 = sbr.rel (%p303) target = $region56
      $region55: #{basic_block_lrd_forward.1} parent=51 // pred_region
        %p306 = scmp.lt.s32.totalorder %s16, 1
        %s307 = scalar_select %p306, %s16, 1
        %s308 = smul.addr %s307, 32
        %s309 = smul.addr %s308, 8
        %s310 = scalar_lea.vmem %s0, %s309
      $region56: #{basic_block_lrd_forward.1} parent=51 // pred_fallthru
        _
    $region52: #{basic_block_lrd_forward.1} parent=5 // pred_fallthru
      _
    %p311 = scmp.le.s32.totalorder 1, %s16
    %p312 = scmp.lt.s32.totalorder %s16, 3
    %p313 = pnand %p311, %p312
    %p314 = pneg %p313
    // Predicated region
    $region57: #{basic_block_lrd_forward.1} parent=5 // pred_check
      _
    $region58: #{basic_block_lrd_forward.1} parent=5 // pred_check_branch
      %316 = sbr.rel (%p313) target = $region60
    $region59: #{basic_block_lrd_forward.1} parent=5 // pred_region
      %s317 = ssub.s32 %s16, 1
      %p318 = scmp.lt.s32.totalorder %s21, 1
      %s319 = scalar_select %p318, %s21, 1
      %s320 = smul.addr %s319, 32
      %s321 = smul.addr %s320, 8
      %s322 = scalar_lea.vmem %s0, %s321
      %p323 = pneg %p42
      %p324 = pneg %p39
      %p325 = pneg %p63
      %p326 = pneg %p60
      %p327 = pneg %p84
      %p328 = pneg %p81
      %p329 = pneg %p105
      %p330 = pneg %p102
      %p331 = pneg %p126
      %p332 = pneg %p123
      %p333 = pneg %p147
      %p334 = pneg %p144
      %p335 = pneg %p168
      %p336 = pneg %p165
      %p337 = pneg %p189
      %p338 = pneg %p186
      %p339 = pneg %p210
      %p340 = pneg %p207
      %p341 = pneg %p231
      %p342 = pneg %p228
      %p343 = pneg %p257
      %p344 = pneg %p254
      %p345 = scmp.lt.s32.totalorder %s21, 1
      %s346 = scalar_select %p345, %s21, 1
      %s347 = smul.addr %s346, 96
      %s348 = smul.addr %s347, 8
      %s349 = scalar_lea.vmem %s10, %s348
      %p350 = scmp.lt.s32.totalorder %s21, 1
      %s351 = scalar_select %p350, %s21, 1
      %s352 = smul.addr %s351, 32
      %s353 = smul.addr %s352, 8
      %s354 = scalar_lea.vmem %s0, %s353
      %p355 = scmp.lt.s32.totalorder %s21, 1
      %s356 = scalar_select %p355, %s21, 1
      %s357 = smul.addr %s356, 96
      %s358 = smul.addr %s357, 8
      %s359 = scalar_lea.vmem %s10, %s358
      %vm360 = vcmask 64512
      %361 = vst.msk [vmem:[#allocation2] sm:$0xff] %vm360, 0.0
      %362 = vst.msk [vmem:[#allocation2 + $0x8] sm:$0xff] %vm360, 0.0
      %vm363 = vcmask 58368
      %364 = vst.msk [vmem:[#allocation2 + $0x10] sm:$0x3] %vm363, 0.0
      %365 = vst.msk [vmem:[#allocation2 + $0x18] sm:$0xff] %vm360, 0.0
      %366 = vst.msk [vmem:[#allocation2 + $0x20] sm:$0xff] %vm360, 0.0
      %367 = vst.msk [vmem:[#allocation2 + $0x28] sm:$0x3] %vm363, 0.0
      %368 = vst.msk [vmem:[#allocation2 + $0x30] sm:$0xff] %vm360, 0.0
      %369 = vst.msk [vmem:[#allocation2 + $0x38] sm:$0xff] %vm360, 0.0
      %370 = vst.msk [vmem:[#allocation2 + $0x40] sm:$0x3] %vm363, 0.0
      %371 = vst.msk [vmem:[#allocation2 + $0x48] sm:$0xff] %vm360, 0.0
      %372 = vst.msk [vmem:[#allocation2 + $0x50] sm:$0xff] %vm360, 0.0
      %373 = vst.msk [vmem:[#allocation2 + $0x58] sm:$0x3] %vm363, 0.0
      %374 = vst.msk [vmem:[#allocation2 + $0x60] sm:$0xff] %vm360, 0.0
      %375 = vst.msk [vmem:[#allocation2 + $0x68] sm:$0xff] %vm360, 0.0
      %376 = vst.msk [vmem:[#allocation2 + $0x70] sm:$0x3] %vm363, 0.0
      %377 = vst.msk [vmem:[#allocation2 + $0x78] sm:$0xff] %vm360, 0.0
      %378 = vst.msk [vmem:[#allocation2 + $0x80] sm:$0xff] %vm360, 0.0
      %379 = vst.msk [vmem:[#allocation2 + $0x88] sm:$0x3] %vm363, 0.0
      %380 = vst.msk [vmem:[#allocation2 + $0x90] sm:$0xff] %vm360, 0.0
      %381 = vst.msk [vmem:[#allocation2 + $0x98] sm:$0xff] %vm360, 0.0
      %382 = vst.msk [vmem:[#allocation2 + $0xa0] sm:$0x3] %vm363, 0.0
      %383 = vst.msk [vmem:[#allocation2 + $0xa8] sm:$0xff] %vm360, 0.0
      %384 = vst.msk [vmem:[#allocation2 + $0xb0] sm:$0xff] %vm360, 0.0
      %385 = vst.msk [vmem:[#allocation2 + $0xb8] sm:$0x3] %vm363, 0.0
      %386 = vst.msk [vmem:[#allocation2 + $0xc0] sm:$0xff] %vm360, 0.0
      %387 = vst.msk [vmem:[#allocation2 + $0xc8] sm:$0xff] %vm360, 0.0
      %388 = vst.msk [vmem:[#allocation2 + $0xd0] sm:$0x3] %vm363, 0.0
      %389 = vst.msk [vmem:[#allocation2 + $0xd8] sm:$0xff] %vm360, 0.0
      %390 = vst.msk [vmem:[#allocation2 + $0xe0] sm:$0xff] %vm360, 0.0
      %391 = vst.msk [vmem:[#allocation2 + $0xe8] sm:$0x3] %vm363, 0.0
      %392 = vst.msk [vmem:[#allocation2 + $0xf0] sm:$0xff] %vm360, 0.0
      %393 = vst.msk [vmem:[#allocation2 + $0xf8] sm:$0xff] %vm360, 0.0
      %394 = vst.msk [vmem:[#allocation2 + $0x100] sm:$0x3] %vm363, 0.0
      %395 = vst.msk [vmem:[#allocation2 + $0x108] sm:$0xff] %vm360, 0.0
      %396 = vst.msk [vmem:[#allocation2 + $0x110] sm:$0xff] %vm360, 0.0
      %397 = vst.msk [vmem:[#allocation2 + $0x118] sm:$0x3] %vm363, 0.0
      %398 = vst.msk [vmem:[#allocation2 + $0x120] sm:$0xff] %vm360, 0.0
      %399 = vst.msk [vmem:[#allocation2 + $0x128] sm:$0xff] %vm360, 0.0
      %400 = vst.msk [vmem:[#allocation2 + $0x130] sm:$0x3] %vm363, 0.0
      %401 = vst.msk [vmem:[#allocation2 + $0x138] sm:$0xff] %vm360, 0.0
      %402 = vst.msk [vmem:[#allocation2 + $0x140] sm:$0xff] %vm360, 0.0
      %403 = vst.msk [vmem:[#allocation2 + $0x148] sm:$0x3] %vm363, 0.0
      %404 = vst.msk [vmem:[#allocation2 + $0x150] sm:$0xff] %vm360, 0.0
      %405 = vst.msk [vmem:[#allocation2 + $0x158] sm:$0xff] %vm360, 0.0
      %406 = vst.msk [vmem:[#allocation2 + $0x160] sm:$0x3] %vm363, 0.0
      %407 = vst.msk [vmem:[#allocation2 + $0x168] sm:$0xff] %vm360, 0.0
      %408 = vst.msk [vmem:[#allocation2 + $0x170] sm:$0xff] %vm360, 0.0
      %409 = vst.msk [vmem:[#allocation2 + $0x178] sm:$0x3] %vm363, 0.0
      %410 = vst.msk [vmem:[#allocation2 + $0x180] sm:$0xff] %vm360, 0.0
      %411 = vst.msk [vmem:[#allocation2 + $0x188] sm:$0xff] %vm360, 0.0
      %412 = vst.msk [vmem:[#allocation2 + $0x190] sm:$0x3] %vm363, 0.0
      %413 = vst.msk [vmem:[#allocation2 + $0x198] sm:$0xff] %vm360, 0.0
      %414 = vst.msk [vmem:[#allocation2 + $0x1a0] sm:$0xff] %vm360, 0.0
      %415 = vst.msk [vmem:[#allocation2 + $0x1a8] sm:$0x3] %vm363, 0.0
      %v416 = vld [vmem:[%s354] sm:$0xff]
      %v417 = vld [vmem:[%s354 + $0x8] sm:$0xff]
      %v418 = vld [vmem:[%s354 + $0x10] sm:$0xff]
      %v419 = vld [vmem:[%s354 + $0x18] sm:$0xff]
      %v420 = vld [vmem:[%s354 + $0x20] sm:$0xff]
      %v421 = vld [vmem:[%s354 + $0x28] sm:$0xff]
      %v422 = vld [vmem:[%s354 + $0x30] sm:$0xff]
      %v423 = vld [vmem:[%s354 + $0x38] sm:$0xff]
      %v424 = vld [vmem:[%s354 + $0x40] sm:$0xff]
      %v425 = vld [vmem:[%s354 + $0x48] sm:$0xff]
      %v426 = vld [vmem:[%s354 + $0x50] sm:$0xff]
      %v427 = vld [vmem:[%s354 + $0x58] sm:$0xff]
      %v428 = vld [vmem:[%s354 + $0x60] sm:$0xff]
      %v429 = vld [vmem:[%s354 + $0x68] sm:$0xff]
      %v430 = vld [vmem:[%s354 + $0x70] sm:$0xff]
      %v431 = vld [vmem:[%s354 + $0x78] sm:$0xff]
      %v432 = vld [vmem:[%s354 + $0x80] sm:$0xff]
      %v433 = vld [vmem:[%s354 + $0x88] sm:$0xff]
      %v434 = vld [vmem:[%s354 + $0x90] sm:$0xff]
      %v435 = vld [vmem:[%s354 + $0x98] sm:$0xff]
      %v436 = vld [vmem:[%s354 + $0xa0] sm:$0xff]
      %v437 = vld [vmem:[%s354 + $0xa8] sm:$0xff]
      %v438 = vld [vmem:[%s354 + $0xb0] sm:$0xff]
      %v439 = vld [vmem:[%s354 + $0xb8] sm:$0xff]
      %v440 = vld [vmem:[%s354 + $0xc0] sm:$0xff]
      %v441 = vld [vmem:[%s354 + $0xc8] sm:$0xff]
      %v442 = vld [vmem:[%s354 + $0xd0] sm:$0xff]
      %v443 = vld [vmem:[%s354 + $0xd8] sm:$0xff]
      %v444 = vld [vmem:[%s354 + $0xe0] sm:$0xff]
      %v445 = vld [vmem:[%s354 + $0xe8] sm:$0xff]
      %v446 = vld [vmem:[%s354 + $0xf0] sm:$0xff]
      %v447 = vld [vmem:[%s354 + $0xf8] sm:$0xff]
      %s448 = scalar_lea.vmem [#allocation2], 24
      %449 = vst.msk [vmem:[%s448 + $0x1] sm:$0xff] %vm360, %v416
      %450 = vst.msk [vmem:[%s448 + $0x9] sm:$0xff] %vm360, %v417
      %451 = vst.msk [vmem:[%s448 + $0x19] sm:$0xff] %vm360, %v418
      %452 = vst.msk [vmem:[%s448 + $0x21] sm:$0xff] %vm360, %v419
      %453 = vst.msk [vmem:[%s448 + $0x31] sm:$0xff] %vm360, %v420
      %454 = vst.msk [vmem:[%s448 + $0x39] sm:$0xff] %vm360, %v421
      %455 = vst.msk [vmem:[%s448 + $0x49] sm:$0xff] %vm360, %v422
      %456 = vst.msk [vmem:[%s448 + $0x51] sm:$0xff] %vm360, %v423
      %457 = vst.msk [vmem:[%s448 + $0x61] sm:$0xff] %vm360, %v424
      %458 = vst.msk [vmem:[%s448 + $0x69] sm:$0xff] %vm360, %v425
      %459 = vst.msk [vmem:[%s448 + $0x79] sm:$0xff] %vm360, %v426
      %460 = vst.msk [vmem:[%s448 + $0x81] sm:$0xff] %vm360, %v427
      %461 = vst.msk [vmem:[%s448 + $0x91] sm:$0xff] %vm360, %v428
      %462 = vst.msk [vmem:[%s448 + $0x99] sm:$0xff] %vm360, %v429
      %463 = vst.msk [vmem:[%s448 + $0xa9] sm:$0xff] %vm360, %v430
      %464 = vst.msk [vmem:[%s448 + $0xb1] sm:$0xff] %vm360, %v431
      %465 = vst.msk [vmem:[%s448 + $0xc1] sm:$0xff] %vm360, %v432
      %466 = vst.msk [vmem:[%s448 + $0xc9] sm:$0xff] %vm360, %v433
      %467 = vst.msk [vmem:[%s448 + $0xd9] sm:$0xff] %vm360, %v434
      %468 = vst.msk [vmem:[%s448 + $0xe1] sm:$0xff] %vm360, %v435
      %469 = vst.msk [vmem:[%s448 + $0xf1] sm:$0xff] %vm360, %v436
      %470 = vst.msk [vmem:[%s448 + $0xf9] sm:$0xff] %vm360, %v437
      %471 = vst.msk [vmem:[%s448 + $0x109] sm:$0xff] %vm360, %v438
      %472 = vst.msk [vmem:[%s448 + $0x111] sm:$0xff] %vm360, %v439
      %473 = vst.msk [vmem:[%s448 + $0x121] sm:$0xff] %vm360, %v440
      %474 = vst.msk [vmem:[%s448 + $0x129] sm:$0xff] %vm360, %v441
      %475 = vst.msk [vmem:[%s448 + $0x139] sm:$0xff] %vm360, %v442
      %476 = vst.msk [vmem:[%s448 + $0x141] sm:$0xff] %vm360, %v443
      %477 = vst.msk [vmem:[%s448 + $0x151] sm:$0xff] %vm360, %v444
      %478 = vst.msk [vmem:[%s448 + $0x159] sm:$0xff] %vm360, %v445
      %479 = vst.msk [vmem:[%s448 + $0x169] sm:$0xff] %vm360, %v446
      %480 = vst.msk [vmem:[%s448 + $0x171] sm:$0xff] %vm360, %v447
      %v481 = vld [vmem:[#allocation2] sm:$0xff]
      %v482 = vld [vmem:[#allocation2 + $0x8] sm:$0xff]
      %v483 = vld [vmem:[#allocation2 + $0x18] sm:$0xff]
      %v484 = vld [vmem:[#allocation2 + $0x20] sm:$0xff]
      %v485 = vld [vmem:[#allocation2 + $0x30] sm:$0xff]
      %v486 = vld [vmem:[#allocation2 + $0x38] sm:$0xff]
      %v487 = vld [vmem:[#allocation2 + $0x48] sm:$0xff]
      %v488 = vld [vmem:[#allocation2 + $0x50] sm:$0xff]
      %v489 = vld [vmem:[#allocation2 + $0x60] sm:$0xff]
      %v490 = vld [vmem:[#allocation2 + $0x68] sm:$0xff]
      %v491 = vld [vmem:[#allocation2 + $0x78] sm:$0xff]
      %v492 = vld [vmem:[#allocation2 + $0x80] sm:$0xff]
      %v493 = vld [vmem:[#allocation2 + $0x90] sm:$0xff]
      %v494 = vld [vmem:[#allocation2 + $0x98] sm:$0xff]
      %v495 = vld [vmem:[#allocation2 + $0xa8] sm:$0xff]
      %v496 = vld [vmem:[#allocation2 + $0xb0] sm:$0xff]
      %v497 = vld [vmem:[#allocation2 + $0xc0] sm:$0xff]
      %v498 = vld [vmem:[#allocation2 + $0xc8] sm:$0xff]
      %v499 = vld [vmem:[#allocation2 + $0xd8] sm:$0xff]
      %v500 = vld [vmem:[#allocation2 + $0xe0] sm:$0xff]
      %v501 = vld [vmem:[#allocation2 + $0xf0] sm:$0xff]
      %v502 = vld [vmem:[#allocation2 + $0xf8] sm:$0xff]
      %v503 = vld [vmem:[#allocation2 + $0x108] sm:$0xff]
      %v504 = vld [vmem:[#allocation2 + $0x110] sm:$0xff]
      %v505 = vld [vmem:[#allocation2 + $0x120] sm:$0xff]
      %v506 = vld [vmem:[#allocation2 + $0x128] sm:$0xff]
      %v507 = vld [vmem:[#allocation2 + $0x138] sm:$0xff]
      %v508 = vld [vmem:[#allocation2 + $0x140] sm:$0xff]
      %v509 = vld [vmem:[#allocation2 + $0x150] sm:$0xff]
      %v510 = vld [vmem:[#allocation2 + $0x158] sm:$0xff]
      %v511 = vld [vmem:[#allocation2 + $0x168] sm:$0xff]
      %v512 = vld [vmem:[#allocation2 + $0x170] sm:$0xff]
      %513 = vst.msk [vmem:[#allocation3] sm:$0xff] %vm360, %v481
      %514 = vst.msk [vmem:[#allocation3 + $0x8] sm:$0xff] %vm360, %v482
      %515 = vst.msk [vmem:[#allocation3 + $0x10] sm:$0xff] %vm360, %v483
      %516 = vst.msk [vmem:[#allocation3 + $0x18] sm:$0xff] %vm360, %v484
      %517 = vst.msk [vmem:[#allocation3 + $0x20] sm:$0xff] %vm360, %v485
      %518 = vst.msk [vmem:[#allocation3 + $0x28] sm:$0xff] %vm360, %v486
      %519 = vst.msk [vmem:[#allocation3 + $0x30] sm:$0xff] %vm360, %v487
      %520 = vst.msk [vmem:[#allocation3 + $0x38] sm:$0xff] %vm360, %v488
      %521 = vst.msk [vmem:[#allocation3 + $0x40] sm:$0xff] %vm360, %v489
      %522 = vst.msk [vmem:[#allocation3 + $0x48] sm:$0xff] %vm360, %v490
      %523 = vst.msk [vmem:[#allocation3 + $0x50] sm:$0xff] %vm360, %v491
      %524 = vst.msk [vmem:[#allocation3 + $0x58] sm:$0xff] %vm360, %v492
      %525 = vst.msk [vmem:[#allocation3 + $0x60] sm:$0xff] %vm360, %v493
      %526 = vst.msk [vmem:[#allocation3 + $0x68] sm:$0xff] %vm360, %v494
      %527 = vst.msk [vmem:[#allocation3 + $0x70] sm:$0xff] %vm360, %v495
      %528 = vst.msk [vmem:[#allocation3 + $0x78] sm:$0xff] %vm360, %v496
      %529 = vst.msk [vmem:[#allocation3 + $0x80] sm:$0xff] %vm360, %v497
      %530 = vst.msk [vmem:[#allocation3 + $0x88] sm:$0xff] %vm360, %v498
      %531 = vst.msk [vmem:[#allocation3 + $0x90] sm:$0xff] %vm360, %v499
      %532 = vst.msk [vmem:[#allocation3 + $0x98] sm:$0xff] %vm360, %v500
      %533 = vst.msk [vmem:[#allocation3 + $0xa0] sm:$0xff] %vm360, %v501
      %534 = vst.msk [vmem:[#allocation3 + $0xa8] sm:$0xff] %vm360, %v502
      %535 = vst.msk [vmem:[#allocation3 + $0xb0] sm:$0xff] %vm360, %v503
      %536 = vst.msk [vmem:[#allocation3 + $0xb8] sm:$0xff] %vm360, %v504
      %537 = vst.msk [vmem:[#allocation3 + $0xc0] sm:$0xff] %vm360, %v505
      %538 = vst.msk [vmem:[#allocation3 + $0xc8] sm:$0xff] %vm360, %v506
      %539 = vst.msk [vmem:[#allocation3 + $0xd0] sm:$0xff] %vm360, %v507
      %540 = vst.msk [vmem:[#allocation3 + $0xd8] sm:$0xff] %vm360, %v508
      %541 = vst.msk [vmem:[#allocation3 + $0xe0] sm:$0xff] %vm360, %v509
      %542 = vst.msk [vmem:[#allocation3 + $0xe8] sm:$0xff] %vm360, %v510
      %543 = vst.msk [vmem:[#allocation3 + $0xf0] sm:$0xff] %vm360, %v511
      %544 = vst.msk [vmem:[#allocation3 + $0xf8] sm:$0xff] %vm360, %v512
      %v545 = vld [vmem:[#allocation2 + $0x1] sm:$0xff]
      %v546 = vld [vmem:[#allocation2 + $0x9] sm:$0xff]
      %v547 = vld [vmem:[#allocation2 + $0x19] sm:$0xff]
      %v548 = vld [vmem:[#allocation2 + $0x21] sm:$0xff]
      %v549 = vld [vmem:[#allocation2 + $0x31] sm:$0xff]
      %v550 = vld [vmem:[#allocation2 + $0x39] sm:$0xff]
      %v551 = vld [vmem:[#allocation2 + $0x49] sm:$0xff]
      %v552 = vld [vmem:[#allocation2 + $0x51] sm:$0xff]
      %v553 = vld [vmem:[#allocation2 + $0x61] sm:$0xff]
      %v554 = vld [vmem:[#allocation2 + $0x69] sm:$0xff]
      %v555 = vld [vmem:[#allocation2 + $0x79] sm:$0xff]
      %v556 = vld [vmem:[#allocation2 + $0x81] sm:$0xff]
      %v557 = vld [vmem:[#allocation2 + $0x91] sm:$0xff]
      %v558 = vld [vmem:[#allocation2 + $0x99] sm:$0xff]
      %v559 = vld [vmem:[#allocation2 + $0xa9] sm:$0xff]
      %v560 = vld [vmem:[#allocation2 + $0xb1] sm:$0xff]
      %v561 = vld [vmem:[#allocation2 + $0xc1] sm:$0xff]
      %v562 = vld [vmem:[#allocation2 + $0xc9] sm:$0xff]
      %v563 = vld [vmem:[#allocation2 + $0xd9] sm:$0xff]
      %v564 = vld [vmem:[#allocation2 + $0xe1] sm:$0xff]
      %v565 = vld [vmem:[#allocation2 + $0xf1] sm:$0xff]
      %v566 = vld [vmem:[#allocation2 + $0xf9] sm:$0xff]
      %v567 = vld [vmem:[#allocation2 + $0x109] sm:$0xff]
      %v568 = vld [vmem:[#allocation2 + $0x111] sm:$0xff]
      %v569 = vld [vmem:[#allocation2 + $0x121] sm:$0xff]
      %v570 = vld [vmem:[#allocation2 + $0x129] sm:$0xff]
      %v571 = vld [vmem:[#allocation2 + $0x139] sm:$0xff]
      %v572 = vld [vmem:[#allocation2 + $0x141] sm:$0xff]
      %v573 = vld [vmem:[#allocation2 + $0x151] sm:$0xff]
      %v574 = vld [vmem:[#allocation2 + $0x159] sm:$0xff]
      %v575 = vld [vmem:[#allocation2 + $0x169] sm:$0xff]
      %v576 = vld [vmem:[#allocation2 + $0x171] sm:$0xff]
      %609 = vrot.lane.b32.xlu0 %v545, 8
      %v610 = vpop.permute.xlu0 %609
      %611 = vrot.lane.b32.xlu0 %v546, 8
      %v612 = vpop.permute.xlu0 %611
      %613 = vrot.lane.b32.xlu0 %v547, 8
      %v614 = vpop.permute.xlu0 %613
      %615 = vrot.lane.b32.xlu0 %v548, 8
      %v616 = vpop.permute.xlu0 %615
      %617 = vrot.lane.b32.xlu0 %v549, 8
      %v618 = vpop.permute.xlu0 %617
      %619 = vrot.lane.b32.xlu0 %v550, 8
      %v620 = vpop.permute.xlu0 %619
      %621 = vrot.lane.b32.xlu0 %v551, 8
      %v622 = vpop.permute.xlu0 %621
      %623 = vrot.lane.b32.xlu0 %v552, 8
      %v624 = vpop.permute.xlu0 %623
      %625 = vrot.lane.b32.xlu0 %v553, 8
      %v626 = vpop.permute.xlu0 %625
      %627 = vrot.lane.b32.xlu0 %v554, 8
      %v628 = vpop.permute.xlu0 %627
      %629 = vrot.lane.b32.xlu0 %v555, 8
      %v630 = vpop.permute.xlu0 %629
      %631 = vrot.lane.b32.xlu0 %v556, 8
      %v632 = vpop.permute.xlu0 %631
      %633 = vrot.lane.b32.xlu0 %v557, 8
      %v634 = vpop.permute.xlu0 %633
      %635 = vrot.lane.b32.xlu0 %v558, 8
      %v636 = vpop.permute.xlu0 %635
      %637 = vrot.lane.b32.xlu0 %v559, 8
      %v638 = vpop.permute.xlu0 %637
      %639 = vrot.lane.b32.xlu0 %v560, 8
      %v640 = vpop.permute.xlu0 %639
      %641 = vrot.lane.b32.xlu0 %v561, 8
      %v642 = vpop.permute.xlu0 %641
      %643 = vrot.lane.b32.xlu0 %v562, 8
      %v644 = vpop.permute.xlu0 %643
      %645 = vrot.lane.b32.xlu0 %v563, 8
      %v646 = vpop.permute.xlu0 %645
      %647 = vrot.lane.b32.xlu0 %v564, 8
      %v648 = vpop.permute.xlu0 %647
      %649 = vrot.lane.b32.xlu0 %v565, 8
      %v650 = vpop.permute.xlu0 %649
      %651 = vrot.lane.b32.xlu0 %v566, 8
      %v652 = vpop.permute.xlu0 %651
      %653 = vrot.lane.b32.xlu0 %v567, 8
      %v654 = vpop.permute.xlu0 %653
      %655 = vrot.lane.b32.xlu0 %v568, 8
      %v656 = vpop.permute.xlu0 %655
      %657 = vrot.lane.b32.xlu0 %v569, 8
      %v658 = vpop.permute.xlu0 %657
      %659 = vrot.lane.b32.xlu0 %v570, 8
      %v660 = vpop.permute.xlu0 %659
      %661 = vrot.lane.b32.xlu0 %v571, 8
      %v662 = vpop.permute.xlu0 %661
      %663 = vrot.lane.b32.xlu0 %v572, 8
      %v664 = vpop.permute.xlu0 %663
      %665 = vrot.lane.b32.xlu0 %v573, 8
      %v666 = vpop.permute.xlu0 %665
      %667 = vrot.lane.b32.xlu0 %v574, 8
      %v668 = vpop.permute.xlu0 %667
      %669 = vrot.lane.b32.xlu0 %v575, 8
      %v670 = vpop.permute.xlu0 %669
      %671 = vrot.lane.b32.xlu0 %v576, 8
      %v672 = vpop.permute.xlu0 %671
      %vm705 = vcmask 130112
      %706 = vst.msk [vmem:[#allocation3] sm:$0xff] %vm705, %v610
      %707 = vst.msk [vmem:[#allocation3 + $0x8] sm:$0xff] %vm705, %v612
      %708 = vst.msk [vmem:[#allocation3 + $0x10] sm:$0xff] %vm705, %v614
      %709 = vst.msk [vmem:[#allocation3 + $0x18] sm:$0xff] %vm705, %v616
      %710 = vst.msk [vmem:[#allocation3 + $0x20] sm:$0xff] %vm705, %v618
      %711 = vst.msk [vmem:[#allocation3 + $0x28] sm:$0xff] %vm705, %v620
      %712 = vst.msk [vmem:[#allocation3 + $0x30] sm:$0xff] %vm705, %v622
      %713 = vst.msk [vmem:[#allocation3 + $0x38] sm:$0xff] %vm705, %v624
      %714 = vst.msk [vmem:[#allocation3 + $0x40] sm:$0xff] %vm705, %v626
      %715 = vst.msk [vmem:[#allocation3 + $0x48] sm:$0xff] %vm705, %v628
      %716 = vst.msk [vmem:[#allocation3 + $0x50] sm:$0xff] %vm705, %v630
      %717 = vst.msk [vmem:[#allocation3 + $0x58] sm:$0xff] %vm705, %v632
      %718 = vst.msk [vmem:[#allocation3 + $0x60] sm:$0xff] %vm705, %v634
      %719 = vst.msk [vmem:[#allocation3 + $0x68] sm:$0xff] %vm705, %v636
      %720 = vst.msk [vmem:[#allocation3 + $0x70] sm:$0xff] %vm705, %v638
      %721 = vst.msk [vmem:[#allocation3 + $0x78] sm:$0xff] %vm705, %v640
      %722 = vst.msk [vmem:[#allocation3 + $0x80] sm:$0xff] %vm705, %v642
      %723 = vst.msk [vmem:[#allocation3 + $0x88] sm:$0xff] %vm705, %v644
      %724 = vst.msk [vmem:[#allocation3 + $0x90] sm:$0xff] %vm705, %v646
      %725 = vst.msk [vmem:[#allocation3 + $0x98] sm:$0xff] %vm705, %v648
      %726 = vst.msk [vmem:[#allocation3 + $0xa0] sm:$0xff] %vm705, %v650
      %727 = vst.msk [vmem:[#allocation3 + $0xa8] sm:$0xff] %vm705, %v652
      %728 = vst.msk [vmem:[#allocation3 + $0xb0] sm:$0xff] %vm705, %v654
      %729 = vst.msk [vmem:[#allocation3 + $0xb8] sm:$0xff] %vm705, %v656
      %730 = vst.msk [vmem:[#allocation3 + $0xc0] sm:$0xff] %vm705, %v658
      %731 = vst.msk [vmem:[#allocation3 + $0xc8] sm:$0xff] %vm705, %v660
      %732 = vst.msk [vmem:[#allocation3 + $0xd0] sm:$0xff] %vm705, %v662
      %733 = vst.msk [vmem:[#allocation3 + $0xd8] sm:$0xff] %vm705, %v664
      %734 = vst.msk [vmem:[#allocation3 + $0xe0] sm:$0xff] %vm705, %v666
      %735 = vst.msk [vmem:[#allocation3 + $0xe8] sm:$0xff] %vm705, %v668
      %736 = vst.msk [vmem:[#allocation3 + $0xf0] sm:$0xff] %vm705, %v670
      %737 = vst.msk [vmem:[#allocation3 + $0xf8] sm:$0xff] %vm705, %v672
      %v738 = vld [vmem:[#allocation2 + $0x2] sm:$0xff]
      %v739 = vld [vmem:[#allocation2 + $0xa] sm:$0xff]
      %v740 = vld [vmem:[#allocation2 + $0x1a] sm:$0xff]
      %v741 = vld [vmem:[#allocation2 + $0x22] sm:$0xff]
      %v742 = vld [vmem:[#allocation2 + $0x32] sm:$0xff]
      %v743 = vld [vmem:[#allocation2 + $0x3a] sm:$0xff]
      %v744 = vld [vmem:[#allocation2 + $0x4a] sm:$0xff]
      %v745 = vld [vmem:[#allocation2 + $0x52] sm:$0xff]
      %v746 = vld [vmem:[#allocation2 + $0x62] sm:$0xff]
      %v747 = vld [vmem:[#allocation2 + $0x6a] sm:$0xff]
      %v748 = vld [vmem:[#allocation2 + $0x7a] sm:$0xff]
      %v749 = vld [vmem:[#allocation2 + $0x82] sm:$0xff]
      %v750 = vld [vmem:[#allocation2 + $0x92] sm:$0xff]
      %v751 = vld [vmem:[#allocation2 + $0x9a] sm:$0xff]
      %v752 = vld [vmem:[#allocation2 + $0xaa] sm:$0xff]
      %v753 = vld [vmem:[#allocation2 + $0xb2] sm:$0xff]
      %v754 = vld [vmem:[#allocation2 + $0xc2] sm:$0xff]
      %v755 = vld [vmem:[#allocation2 + $0xca] sm:$0xff]
      %v756 = vld [vmem:[#allocation2 + $0xda] sm:$0xff]
      %v757 = vld [vmem:[#allocation2 + $0xe2] sm:$0xff]
      %v758 = vld [vmem:[#allocation2 + $0xf2] sm:$0xff]
      %v759 = vld [vmem:[#allocation2 + $0xfa] sm:$0xff]
      %v760 = vld [vmem:[#allocation2 + $0x10a] sm:$0xff]
      %v761 = vld [vmem:[#allocation2 + $0x112] sm:$0xff]
      %v762 = vld [vmem:[#allocation2 + $0x122] sm:$0xff]
      %v763 = vld [vmem:[#allocation2 + $0x12a] sm:$0xff]
      %v764 = vld [vmem:[#allocation2 + $0x13a] sm:$0xff]
      %v765 = vld [vmem:[#allocation2 + $0x142] sm:$0xff]
      %v766 = vld [vmem:[#allocation2 + $0x152] sm:$0xff]
      %v767 = vld [vmem:[#allocation2 + $0x15a] sm:$0xff]
      %v768 = vld [vmem:[#allocation2 + $0x16a] sm:$0xff]
      %v769 = vld [vmem:[#allocation2 + $0x172] sm:$0xff]
      %802 = vrot.lane.b32.xlu0 %v738, 16
      %v803 = vpop.permute.xlu0 %802
      %804 = vrot.lane.b32.xlu0 %v739, 16
      %v805 = vpop.permute.xlu0 %804
      %806 = vrot.lane.b32.xlu0 %v740, 16
      %v807 = vpop.permute.xlu0 %806
      %808 = vrot.lane.b32.xlu0 %v741, 16
      %v809 = vpop.permute.xlu0 %808
      %810 = vrot.lane.b32.xlu0 %v742, 16
      %v811 = vpop.permute.xlu0 %810
      %812 = vrot.lane.b32.xlu0 %v743, 16
      %v813 = vpop.permute.xlu0 %812
      %814 = vrot.lane.b32.xlu0 %v744, 16
      %v815 = vpop.permute.xlu0 %814
      %816 = vrot.lane.b32.xlu0 %v745, 16
      %v817 = vpop.permute.xlu0 %816
      %818 = vrot.lane.b32.xlu0 %v746, 16
      %v819 = vpop.permute.xlu0 %818
      %820 = vrot.lane.b32.xlu0 %v747, 16
      %v821 = vpop.permute.xlu0 %820
      %822 = vrot.lane.b32.xlu0 %v748, 16
      %v823 = vpop.permute.xlu0 %822
      %824 = vrot.lane.b32.xlu0 %v749, 16
      %v825 = vpop.permute.xlu0 %824
      %826 = vrot.lane.b32.xlu0 %v750, 16
      %v827 = vpop.permute.xlu0 %826
      %828 = vrot.lane.b32.xlu0 %v751, 16
      %v829 = vpop.permute.xlu0 %828
      %830 = vrot.lane.b32.xlu0 %v752, 16
      %v831 = vpop.permute.xlu0 %830
      %832 = vrot.lane.b32.xlu0 %v753, 16
      %v833 = vpop.permute.xlu0 %832
      %834 = vrot.lane.b32.xlu0 %v754, 16
      %v835 = vpop.permute.xlu0 %834
      %836 = vrot.lane.b32.xlu0 %v755, 16
      %v837 = vpop.permute.xlu0 %836
      %838 = vrot.lane.b32.xlu0 %v756, 16
      %v839 = vpop.permute.xlu0 %838
      %840 = vrot.lane.b32.xlu0 %v757, 16
      %v841 = vpop.permute.xlu0 %840
      %842 = vrot.lane.b32.xlu0 %v758, 16
      %v843 = vpop.permute.xlu0 %842
      %844 = vrot.lane.b32.xlu0 %v759, 16
      %v845 = vpop.permute.xlu0 %844
      %846 = vrot.lane.b32.xlu0 %v760, 16
      %v847 = vpop.permute.xlu0 %846
      %848 = vrot.lane.b32.xlu0 %v761, 16
      %v849 = vpop.permute.xlu0 %848
      %850 = vrot.lane.b32.xlu0 %v762, 16
      %v851 = vpop.permute.xlu0 %850
      %852 = vrot.lane.b32.xlu0 %v763, 16
      %v853 = vpop.permute.xlu0 %852
      %854 = vrot.lane.b32.xlu0 %v764, 16
      %v855 = vpop.permute.xlu0 %854
      %856 = vrot.lane.b32.xlu0 %v765, 16
      %v857 = vpop.permute.xlu0 %856
      %858 = vrot.lane.b32.xlu0 %v766, 16
      %v859 = vpop.permute.xlu0 %858
      %860 = vrot.lane.b32.xlu0 %v767, 16
      %v861 = vpop.permute.xlu0 %860
      %862 = vrot.lane.b32.xlu0 %v768, 16
      %v863 = vpop.permute.xlu0 %862
      %864 = vrot.lane.b32.xlu0 %v769, 16
      %v865 = vpop.permute.xlu0 %864
      %vm898 = vcmask 195712
      %899 = vst.msk [vmem:[#allocation3] sm:$0xff] %vm898, %v803
      %900 = vst.msk [vmem:[#allocation3 + $0x8] sm:$0xff] %vm898, %v805
      %901 = vst.msk [vmem:[#allocation3 + $0x10] sm:$0xff] %vm898, %v807
      %902 = vst.msk [vmem:[#allocation3 + $0x18] sm:$0xff] %vm898, %v809
      %903 = vst.msk [vmem:[#allocation3 + $0x20] sm:$0xff] %vm898, %v811
      %904 = vst.msk [vmem:[#allocation3 + $0x28] sm:$0xff] %vm898, %v813
      %905 = vst.msk [vmem:[#allocation3 + $0x30] sm:$0xff] %vm898, %v815
      %906 = vst.msk [vmem:[#allocation3 + $0x38] sm:$0xff] %vm898, %v817
      %907 = vst.msk [vmem:[#allocation3 + $0x40] sm:$0xff] %vm898, %v819
      %908 = vst.msk [vmem:[#allocation3 + $0x48] sm:$0xff] %vm898, %v821
      %909 = vst.msk [vmem:[#allocation3 + $0x50] sm:$0xff] %vm898, %v823
      %910 = vst.msk [vmem:[#allocation3 + $0x58] sm:$0xff] %vm898, %v825
      %911 = vst.msk [vmem:[#allocation3 + $0x60] sm:$0xff] %vm898, %v827
      %912 = vst.msk [vmem:[#allocation3 + $0x68] sm:$0xff] %vm898, %v829
      %913 = vst.msk [vmem:[#allocation3 + $0x70] sm:$0xff] %vm898, %v831
      %914 = vst.msk [vmem:[#allocation3 + $0x78] sm:$0xff] %vm898, %v833
      %915 = vst.msk [vmem:[#allocation3 + $0x80] sm:$0xff] %vm898, %v835
      %916 = vst.msk [vmem:[#allocation3 + $0x88] sm:$0xff] %vm898, %v837
      %917 = vst.msk [vmem:[#allocation3 + $0x90] sm:$0xff] %vm898, %v839
      %918 = vst.msk [vmem:[#allocation3 + $0x98] sm:$0xff] %vm898, %v841
      %919 = vst.msk [vmem:[#allocation3 + $0xa0] sm:$0xff] %vm898, %v843
      %920 = vst.msk [vmem:[#allocation3 + $0xa8] sm:$0xff] %vm898, %v845
      %921 = vst.msk [vmem:[#allocation3 + $0xb0] sm:$0xff] %vm898, %v847
      %922 = vst.msk [vmem:[#allocation3 + $0xb8] sm:$0xff] %vm898, %v849
      %923 = vst.msk [vmem:[#allocation3 + $0xc0] sm:$0xff] %vm898, %v851
      %924 = vst.msk [vmem:[#allocation3 + $0xc8] sm:$0xff] %vm898, %v853
      %925 = vst.msk [vmem:[#allocation3 + $0xd0] sm:$0xff] %vm898, %v855
      %926 = vst.msk [vmem:[#allocation3 + $0xd8] sm:$0xff] %vm898, %v857
      %927 = vst.msk [vmem:[#allocation3 + $0xe0] sm:$0xff] %vm898, %v859
      %928 = vst.msk [vmem:[#allocation3 + $0xe8] sm:$0xff] %vm898, %v861
      %929 = vst.msk [vmem:[#allocation3 + $0xf0] sm:$0xff] %vm898, %v863
      %930 = vst.msk [vmem:[#allocation3 + $0xf8] sm:$0xff] %vm898, %v865
      %v931 = vld [vmem:[%s448] sm:$0xff]
      %v932 = vld [vmem:[%s448 + $0x8] sm:$0xff]
      %v933 = vld [vmem:[%s448 + $0x18] sm:$0xff]
      %v934 = vld [vmem:[%s448 + $0x20] sm:$0xff]
      %v935 = vld [vmem:[%s448 + $0x30] sm:$0xff]
      %v936 = vld [vmem:[%s448 + $0x38] sm:$0xff]
      %v937 = vld [vmem:[%s448 + $0x48] sm:$0xff]
      %v938 = vld [vmem:[%s448 + $0x50] sm:$0xff]
      %v939 = vld [vmem:[%s448 + $0x60] sm:$0xff]
      %v940 = vld [vmem:[%s448 + $0x68] sm:$0xff]
      %v941 = vld [vmem:[%s448 + $0x78] sm:$0xff]
      %v942 = vld [vmem:[%s448 + $0x80] sm:$0xff]
      %v943 = vld [vmem:[%s448 + $0x90] sm:$0xff]
      %v944 = vld [vmem:[%s448 + $0x98] sm:$0xff]
      %v945 = vld [vmem:[%s448 + $0xa8] sm:$0xff]
      %v946 = vld [vmem:[%s448 + $0xb0] sm:$0xff]
      %v947 = vld [vmem:[%s448 + $0xc0] sm:$0xff]
      %v948 = vld [vmem:[%s448 + $0xc8] sm:$0xff]
      %v949 = vld [vmem:[%s448 + $0xd8] sm:$0xff]
      %v950 = vld [vmem:[%s448 + $0xe0] sm:$0xff]
      %v951 = vld [vmem:[%s448 + $0xf0] sm:$0xff]
      %v952 = vld [vmem:[%s448 + $0xf8] sm:$0xff]
      %v953 = vld [vmem:[%s448 + $0x108] sm:$0xff]
      %v954 = vld [vmem:[%s448 + $0x110] sm:$0xff]
      %v955 = vld [vmem:[%s448 + $0x120] sm:$0xff]
      %v956 = vld [vmem:[%s448 + $0x128] sm:$0xff]
      %v957 = vld [vmem:[%s448 + $0x138] sm:$0xff]
      %v958 = vld [vmem:[%s448 + $0x140] sm:$0xff]
      %v959 = vld [vmem:[%s448 + $0x150] sm:$0xff]
      %v960 = vld [vmem:[%s448 + $0x158] sm:$0xff]
      %v961 = vld [vmem:[%s448 + $0x168] sm:$0xff]
      %v962 = vld [vmem:[%s448 + $0x170] sm:$0xff]
      %995 = vrot.lane.b32.xlu0 %v931, 24
      %v996 = vpop.permute.xlu0 %995
      %997 = vrot.lane.b32.xlu0 %v932, 24
      %v998 = vpop.permute.xlu0 %997
      %999 = vrot.lane.b32.xlu0 %v933, 24
      %v1000 = vpop.permute.xlu0 %999
      %1001 = vrot.lane.b32.xlu0 %v934, 24
      %v1002 = vpop.permute.xlu0 %1001
      %1003 = vrot.lane.b32.xlu0 %v935, 24
      %v1004 = vpop.permute.xlu0 %1003
      %1005 = vrot.lane.b32.xlu0 %v936, 24
      %v1006 = vpop.permute.xlu0 %1005
      %1007 = vrot.lane.b32.xlu0 %v937, 24
      %v1008 = vpop.permute.xlu0 %1007
      %1009 = vrot.lane.b32.xlu0 %v938, 24
      %v1010 = vpop.permute.xlu0 %1009
      %1011 = vrot.lane.b32.xlu0 %v939, 24
      %v1012 = vpop.permute.xlu0 %1011
      %1013 = vrot.lane.b32.xlu0 %v940, 24
      %v1014 = vpop.permute.xlu0 %1013
      %1015 = vrot.lane.b32.xlu0 %v941, 24
      %v1016 = vpop.permute.xlu0 %1015
      %1017 = vrot.lane.b32.xlu0 %v942, 24
      %v1018 = vpop.permute.xlu0 %1017
      %1019 = vrot.lane.b32.xlu0 %v943, 24
      %v1020 = vpop.permute.xlu0 %1019
      %1021 = vrot.lane.b32.xlu0 %v944, 24
      %v1022 = vpop.permute.xlu0 %1021
      %1023 = vrot.lane.b32.xlu0 %v945, 24
      %v1024 = vpop.permute.xlu0 %1023
      %1025 = vrot.lane.b32.xlu0 %v946, 24
      %v1026 = vpop.permute.xlu0 %1025
      %1027 = vrot.lane.b32.xlu0 %v947, 24
      %v1028 = vpop.permute.xlu0 %1027
      %1029 = vrot.lane.b32.xlu0 %v948, 24
      %v1030 = vpop.permute.xlu0 %1029
      %1031 = vrot.lane.b32.xlu0 %v949, 24
      %v1032 = vpop.permute.xlu0 %1031
      %1033 = vrot.lane.b32.xlu0 %v950, 24
      %v1034 = vpop.permute.xlu0 %1033
      %1035 = vrot.lane.b32.xlu0 %v951, 24
      %v1036 = vpop.permute.xlu0 %1035
      %1037 = vrot.lane.b32.xlu0 %v952, 24
      %v1038 = vpop.permute.xlu0 %1037
      %1039 = vrot.lane.b32.xlu0 %v953, 24
      %v1040 = vpop.permute.xlu0 %1039
      %1041 = vrot.lane.b32.xlu0 %v954, 24
      %v1042 = vpop.permute.xlu0 %1041
      %1043 = vrot.lane.b32.xlu0 %v955, 24
      %v1044 = vpop.permute.xlu0 %1043
      %1045 = vrot.lane.b32.xlu0 %v956, 24
      %v1046 = vpop.permute.xlu0 %1045
      %1047 = vrot.lane.b32.xlu0 %v957, 24
      %v1048 = vpop.permute.xlu0 %1047
      %1049 = vrot.lane.b32.xlu0 %v958, 24
      %v1050 = vpop.permute.xlu0 %1049
      %1051 = vrot.lane.b32.xlu0 %v959, 24
      %v1052 = vpop.permute.xlu0 %1051
      %1053 = vrot.lane.b32.xlu0 %v960, 24
      %v1054 = vpop.permute.xlu0 %1053
      %1055 = vrot.lane.b32.xlu0 %v961, 24
      %v1056 = vpop.permute.xlu0 %1055
      %1057 = vrot.lane.b32.xlu0 %v962, 24
      %v1058 = vpop.permute.xlu0 %1057
      %vm1091 = vcmask 261312
      %1092 = vst.msk [vmem:[#allocation3] sm:$0xff] %vm1091, %v996
      %1093 = vst.msk [vmem:[#allocation3 + $0x8] sm:$0xff] %vm1091, %v998
      %1094 = vst.msk [vmem:[#allocation3 + $0x10] sm:$0xff] %vm1091, %v1000
      %1095 = vst.msk [vmem:[#allocation3 + $0x18] sm:$0xff] %vm1091, %v1002
      %1096 = vst.msk [vmem:[#allocation3 + $0x20] sm:$0xff] %vm1091, %v1004
      %1097 = vst.msk [vmem:[#allocation3 + $0x28] sm:$0xff] %vm1091, %v1006
      %1098 = vst.msk [vmem:[#allocation3 + $0x30] sm:$0xff] %vm1091, %v1008
      %1099 = vst.msk [vmem:[#allocation3 + $0x38] sm:$0xff] %vm1091, %v1010
      %1100 = vst.msk [vmem:[#allocation3 + $0x40] sm:$0xff] %vm1091, %v1012
      %1101 = vst.msk [vmem:[#allocation3 + $0x48] sm:$0xff] %vm1091, %v1014
      %1102 = vst.msk [vmem:[#allocation3 + $0x50] sm:$0xff] %vm1091, %v1016
      %1103 = vst.msk [vmem:[#allocation3 + $0x58] sm:$0xff] %vm1091, %v1018
      %1104 = vst.msk [vmem:[#allocation3 + $0x60] sm:$0xff] %vm1091, %v1020
      %1105 = vst.msk [vmem:[#allocation3 + $0x68] sm:$0xff] %vm1091, %v1022
      %1106 = vst.msk [vmem:[#allocation3 + $0x70] sm:$0xff] %vm1091, %v1024
      %1107 = vst.msk [vmem:[#allocation3 + $0x78] sm:$0xff] %vm1091, %v1026
      %1108 = vst.msk [vmem:[#allocation3 + $0x80] sm:$0xff] %vm1091, %v1028
      %1109 = vst.msk [vmem:[#allocation3 + $0x88] sm:$0xff] %vm1091, %v1030
      %1110 = vst.msk [vmem:[#allocation3 + $0x90] sm:$0xff] %vm1091, %v1032
      %1111 = vst.msk [vmem:[#allocation3 + $0x98] sm:$0xff] %vm1091, %v1034
      %1112 = vst.msk [vmem:[#allocation3 + $0xa0] sm:$0xff] %vm1091, %v1036
      %1113 = vst.msk [vmem:[#allocation3 + $0xa8] sm:$0xff] %vm1091, %v1038
      %1114 = vst.msk [vmem:[#allocation3 + $0xb0] sm:$0xff] %vm1091, %v1040
      %1115 = vst.msk [vmem:[#allocation3 + $0xb8] sm:$0xff] %vm1091, %v1042
      %1116 = vst.msk [vmem:[#allocation3 + $0xc0] sm:$0xff] %vm1091, %v1044
      %1117 = vst.msk [vmem:[#allocation3 + $0xc8] sm:$0xff] %vm1091, %v1046
      %1118 = vst.msk [vmem:[#allocation3 + $0xd0] sm:$0xff] %vm1091, %v1048
      %1119 = vst.msk [vmem:[#allocation3 + $0xd8] sm:$0xff] %vm1091, %v1050
      %1120 = vst.msk [vmem:[#allocation3 + $0xe0] sm:$0xff] %vm1091, %v1052
      %1121 = vst.msk [vmem:[#allocation3 + $0xe8] sm:$0xff] %vm1091, %v1054
      %1122 = vst.msk [vmem:[#allocation3 + $0xf0] sm:$0xff] %vm1091, %v1056
      %1123 = vst.msk [vmem:[#allocation3 + $0xf8] sm:$0xff] %vm1091, %v1058
      %v1124 = vld [vmem:[%s448 + $0x1] sm:$0xff]
      %v1125 = vld [vmem:[%s448 + $0x9] sm:$0xff]
      %v1126 = vld [vmem:[%s448 + $0x19] sm:$0xff]
      %v1127 = vld [vmem:[%s448 + $0x21] sm:$0xff]
      %v1128 = vld [vmem:[%s448 + $0x31] sm:$0xff]
      %v1129 = vld [vmem:[%s448 + $0x39] sm:$0xff]
      %v1130 = vld [vmem:[%s448 + $0x49] sm:$0xff]
      %v1131 = vld [vmem:[%s448 + $0x51] sm:$0xff]
      %v1132 = vld [vmem:[%s448 + $0x61] sm:$0xff]
      %v1133 = vld [vmem:[%s448 + $0x69] sm:$0xff]
      %v1134 = vld [vmem:[%s448 + $0x79] sm:$0xff]
      %v1135 = vld [vmem:[%s448 + $0x81] sm:$0xff]
      %v1136 = vld [vmem:[%s448 + $0x91] sm:$0xff]
      %v1137 = vld [vmem:[%s448 + $0x99] sm:$0xff]
      %v1138 = vld [vmem:[%s448 + $0xa9] sm:$0xff]
      %v1139 = vld [vmem:[%s448 + $0xb1] sm:$0xff]
      %v1140 = vld [vmem:[%s448 + $0xc1] sm:$0xff]
      %v1141 = vld [vmem:[%s448 + $0xc9] sm:$0xff]
      %v1142 = vld [vmem:[%s448 + $0xd9] sm:$0xff]
      %v1143 = vld [vmem:[%s448 + $0xe1] sm:$0xff]
      %v1144 = vld [vmem:[%s448 + $0xf1] sm:$0xff]
      %v1145 = vld [vmem:[%s448 + $0xf9] sm:$0xff]
      %v1146 = vld [vmem:[%s448 + $0x109] sm:$0xff]
      %v1147 = vld [vmem:[%s448 + $0x111] sm:$0xff]
      %v1148 = vld [vmem:[%s448 + $0x121] sm:$0xff]
      %v1149 = vld [vmem:[%s448 + $0x129] sm:$0xff]
      %v1150 = vld [vmem:[%s448 + $0x139] sm:$0xff]
      %v1151 = vld [vmem:[%s448 + $0x141] sm:$0xff]
      %v1152 = vld [vmem:[%s448 + $0x151] sm:$0xff]
      %v1153 = vld [vmem:[%s448 + $0x159] sm:$0xff]
      %v1154 = vld [vmem:[%s448 + $0x169] sm:$0xff]
      %v1155 = vld [vmem:[%s448 + $0x171] sm:$0xff]
      %1188 = vrot.lane.b32.xlu0 %v1124, 32
      %v1189 = vpop.permute.xlu0 %1188
      %1190 = vrot.lane.b32.xlu0 %v1125, 32
      %v1191 = vpop.permute.xlu0 %1190
      %1192 = vrot.lane.b32.xlu0 %v1126, 32
      %v1193 = vpop.permute.xlu0 %1192
      %1194 = vrot.lane.b32.xlu0 %v1127, 32
      %v1195 = vpop.permute.xlu0 %1194
      %1196 = vrot.lane.b32.xlu0 %v1128, 32
      %v1197 = vpop.permute.xlu0 %1196
      %1198 = vrot.lane.b32.xlu0 %v1129, 32
      %v1199 = vpop.permute.xlu0 %1198
      %1200 = vrot.lane.b32.xlu0 %v1130, 32
      %v1201 = vpop.permute.xlu0 %1200
      %1202 = vrot.lane.b32.xlu0 %v1131, 32
      %v1203 = vpop.permute.xlu0 %1202
      %1204 = vrot.lane.b32.xlu0 %v1132, 32
      %v1205 = vpop.permute.xlu0 %1204
      %1206 = vrot.lane.b32.xlu0 %v1133, 32
      %v1207 = vpop.permute.xlu0 %1206
      %1208 = vrot.lane.b32.xlu0 %v1134, 32
      %v1209 = vpop.permute.xlu0 %1208
      %1210 = vrot.lane.b32.xlu0 %v1135, 32
      %v1211 = vpop.permute.xlu0 %1210
      %1212 = vrot.lane.b32.xlu0 %v1136, 32
      %v1213 = vpop.permute.xlu0 %1212
      %1214 = vrot.lane.b32.xlu0 %v1137, 32
      %v1215 = vpop.permute.xlu0 %1214
      %1216 = vrot.lane.b32.xlu0 %v1138, 32
      %v1217 = vpop.permute.xlu0 %1216
      %1218 = vrot.lane.b32.xlu0 %v1139, 32
      %v1219 = vpop.permute.xlu0 %1218
      %1220 = vrot.lane.b32.xlu0 %v1140, 32
      %v1221 = vpop.permute.xlu0 %1220
      %1222 = vrot.lane.b32.xlu0 %v1141, 32
      %v1223 = vpop.permute.xlu0 %1222
      %1224 = vrot.lane.b32.xlu0 %v1142, 32
      %v1225 = vpop.permute.xlu0 %1224
      %1226 = vrot.lane.b32.xlu0 %v1143, 32
      %v1227 = vpop.permute.xlu0 %1226
      %1228 = vrot.lane.b32.xlu0 %v1144, 32
      %v1229 = vpop.permute.xlu0 %1228
      %1230 = vrot.lane.b32.xlu0 %v1145, 32
      %v1231 = vpop.permute.xlu0 %1230
      %1232 = vrot.lane.b32.xlu0 %v1146, 32
      %v1233 = vpop.permute.xlu0 %1232
      %1234 = vrot.lane.b32.xlu0 %v1147, 32
      %v1235 = vpop.permute.xlu0 %1234
      %1236 = vrot.lane.b32.xlu0 %v1148, 32
      %v1237 = vpop.permute.xlu0 %1236
      %1238 = vrot.lane.b32.xlu0 %v1149, 32
      %v1239 = vpop.permute.xlu0 %1238
      %1240 = vrot.lane.b32.xlu0 %v1150, 32
      %v1241 = vpop.permute.xlu0 %1240
      %1242 = vrot.lane.b32.xlu0 %v1151, 32
      %v1243 = vpop.permute.xlu0 %1242
      %1244 = vrot.lane.b32.xlu0 %v1152, 32
      %v1245 = vpop.permute.xlu0 %1244
      %1246 = vrot.lane.b32.xlu0 %v1153, 32
      %v1247 = vpop.permute.xlu0 %1246
      %1248 = vrot.lane.b32.xlu0 %v1154, 32
      %v1249 = vpop.permute.xlu0 %1248
      %1250 = vrot.lane.b32.xlu0 %v1155, 32
      %v1251 = vpop.permute.xlu0 %1250
      %vm1284 = vcmask 326912
      %1285 = vst.msk [vmem:[#allocation3] sm:$0xff] %vm1284, %v1189
      %1286 = vst.msk [vmem:[#allocation3 + $0x8] sm:$0xff] %vm1284, %v1191
      %1287 = vst.msk [vmem:[#allocation3 + $0x10] sm:$0xff] %vm1284, %v1193
      %1288 = vst.msk [vmem:[#allocation3 + $0x18] sm:$0xff] %vm1284, %v1195
      %1289 = vst.msk [vmem:[#allocation3 + $0x20] sm:$0xff] %vm1284, %v1197
      %1290 = vst.msk [vmem:[#allocation3 + $0x28] sm:$0xff] %vm1284, %v1199
      %1291 = vst.msk [vmem:[#allocation3 + $0x30] sm:$0xff] %vm1284, %v1201
      %1292 = vst.msk [vmem:[#allocation3 + $0x38] sm:$0xff] %vm1284, %v1203
      %1293 = vst.msk [vmem:[#allocation3 + $0x40] sm:$0xff] %vm1284, %v1205
      %1294 = vst.msk [vmem:[#allocation3 + $0x48] sm:$0xff] %vm1284, %v1207
      %1295 = vst.msk [vmem:[#allocation3 + $0x50] sm:$0xff] %vm1284, %v1209
      %1296 = vst.msk [vmem:[#allocation3 + $0x58] sm:$0xff] %vm1284, %v1211
      %1297 = vst.msk [vmem:[#allocation3 + $0x60] sm:$0xff] %vm1284, %v1213
      %1298 = vst.msk [vmem:[#allocation3 + $0x68] sm:$0xff] %vm1284, %v1215
      %1299 = vst.msk [vmem:[#allocation3 + $0x70] sm:$0xff] %vm1284, %v1217
      %1300 = vst.msk [vmem:[#allocation3 + $0x78] sm:$0xff] %vm1284, %v1219
      %1301 = vst.msk [vmem:[#allocation3 + $0x80] sm:$0xff] %vm1284, %v1221
      %1302 = vst.msk [vmem:[#allocation3 + $0x88] sm:$0xff] %vm1284, %v1223
      %1303 = vst.msk [vmem:[#allocation3 + $0x90] sm:$0xff] %vm1284, %v1225
      %1304 = vst.msk [vmem:[#allocation3 + $0x98] sm:$0xff] %vm1284, %v1227
      %1305 = vst.msk [vmem:[#allocation3 + $0xa0] sm:$0xff] %vm1284, %v1229
      %1306 = vst.msk [vmem:[#allocation3 + $0xa8] sm:$0xff] %vm1284, %v1231
      %1307 = vst.msk [vmem:[#allocation3 + $0xb0] sm:$0xff] %vm1284, %v1233
      %1308 = vst.msk [vmem:[#allocation3 + $0xb8] sm:$0xff] %vm1284, %v1235
      %1309 = vst.msk [vmem:[#allocation3 + $0xc0] sm:$0xff] %vm1284, %v1237
      %1310 = vst.msk [vmem:[#allocation3 + $0xc8] sm:$0xff] %vm1284, %v1239
      %1311 = vst.msk [vmem:[#allocation3 + $0xd0] sm:$0xff] %vm1284, %v1241
      %1312 = vst.msk [vmem:[#allocation3 + $0xd8] sm:$0xff] %vm1284, %v1243
      %1313 = vst.msk [vmem:[#allocation3 + $0xe0] sm:$0xff] %vm1284, %v1245
      %1314 = vst.msk [vmem:[#allocation3 + $0xe8] sm:$0xff] %vm1284, %v1247
      %1315 = vst.msk [vmem:[#allocation3 + $0xf0] sm:$0xff] %vm1284, %v1249
      %1316 = vst.msk [vmem:[#allocation3 + $0xf8] sm:$0xff] %vm1284, %v1251
      %v1317 = vld [vmem:[%s448 + $0x2] sm:$0xff]
      %v1318 = vld [vmem:[%s448 + $0xa] sm:$0xff]
      %v1319 = vld [vmem:[%s448 + $0x1a] sm:$0xff]
      %v1320 = vld [vmem:[%s448 + $0x22] sm:$0xff]
      %v1321 = vld [vmem:[%s448 + $0x32] sm:$0xff]
      %v1322 = vld [vmem:[%s448 + $0x3a] sm:$0xff]
      %v1323 = vld [vmem:[%s448 + $0x4a] sm:$0xff]
      %v1324 = vld [vmem:[%s448 + $0x52] sm:$0xff]
      %v1325 = vld [vmem:[%s448 + $0x62] sm:$0xff]
      %v1326 = vld [vmem:[%s448 + $0x6a] sm:$0xff]
      %v1327 = vld [vmem:[%s448 + $0x7a] sm:$0xff]
      %v1328 = vld [vmem:[%s448 + $0x82] sm:$0xff]
      %v1329 = vld [vmem:[%s448 + $0x92] sm:$0xff]
      %v1330 = vld [vmem:[%s448 + $0x9a] sm:$0xff]
      %v1331 = vld [vmem:[%s448 + $0xaa] sm:$0xff]
      %v1332 = vld [vmem:[%s448 + $0xb2] sm:$0xff]
      %v1333 = vld [vmem:[%s448 + $0xc2] sm:$0xff]
      %v1334 = vld [vmem:[%s448 + $0xca] sm:$0xff]
      %v1335 = vld [vmem:[%s448 + $0xda] sm:$0xff]
      %v1336 = vld [vmem:[%s448 + $0xe2] sm:$0xff]
      %v1337 = vld [vmem:[%s448 + $0xf2] sm:$0xff]
      %v1338 = vld [vmem:[%s448 + $0xfa] sm:$0xff]
      %v1339 = vld [vmem:[%s448 + $0x10a] sm:$0xff]
      %v1340 = vld [vmem:[%s448 + $0x112] sm:$0xff]
      %v1341 = vld [vmem:[%s448 + $0x122] sm:$0xff]
      %v1342 = vld [vmem:[%s448 + $0x12a] sm:$0xff]
      %v1343 = vld [vmem:[%s448 + $0x13a] sm:$0xff]
      %v1344 = vld [vmem:[%s448 + $0x142] sm:$0xff]
      %v1345 = vld [vmem:[%s448 + $0x152] sm:$0xff]
      %v1346 = vld [vmem:[%s448 + $0x15a] sm:$0xff]
      %v1347 = vld [vmem:[%s448 + $0x16a] sm:$0xff]
      %v1348 = vld [vmem:[%s448 + $0x172] sm:$0xff]
      %1381 = vrot.lane.b32.xlu0 %v1317, 40
      %v1382 = vpop.permute.xlu0 %1381
      %1383 = vrot.lane.b32.xlu0 %v1318, 40
      %v1384 = vpop.permute.xlu0 %1383
      %1385 = vrot.lane.b32.xlu0 %v1319, 40
      %v1386 = vpop.permute.xlu0 %1385
      %1387 = vrot.lane.b32.xlu0 %v1320, 40
      %v1388 = vpop.permute.xlu0 %1387
      %1389 = vrot.lane.b32.xlu0 %v1321, 40
      %v1390 = vpop.permute.xlu0 %1389
      %1391 = vrot.lane.b32.xlu0 %v1322, 40
      %v1392 = vpop.permute.xlu0 %1391
      %1393 = vrot.lane.b32.xlu0 %v1323, 40
      %v1394 = vpop.permute.xlu0 %1393
      %1395 = vrot.lane.b32.xlu0 %v1324, 40
      %v1396 = vpop.permute.xlu0 %1395
      %1397 = vrot.lane.b32.xlu0 %v1325, 40
      %v1398 = vpop.permute.xlu0 %1397
      %1399 = vrot.lane.b32.xlu0 %v1326, 40
      %v1400 = vpop.permute.xlu0 %1399
      %1401 = vrot.lane.b32.xlu0 %v1327, 40
      %v1402 = vpop.permute.xlu0 %1401
      %1403 = vrot.lane.b32.xlu0 %v1328, 40
      %v1404 = vpop.permute.xlu0 %1403
      %1405 = vrot.lane.b32.xlu0 %v1329, 40
      %v1406 = vpop.permute.xlu0 %1405
      %1407 = vrot.lane.b32.xlu0 %v1330, 40
      %v1408 = vpop.permute.xlu0 %1407
      %1409 = vrot.lane.b32.xlu0 %v1331, 40
      %v1410 = vpop.permute.xlu0 %1409
      %1411 = vrot.lane.b32.xlu0 %v1332, 40
      %v1412 = vpop.permute.xlu0 %1411
      %1413 = vrot.lane.b32.xlu0 %v1333, 40
      %v1414 = vpop.permute.xlu0 %1413
      %1415 = vrot.lane.b32.xlu0 %v1334, 40
      %v1416 = vpop.permute.xlu0 %1415
      %1417 = vrot.lane.b32.xlu0 %v1335, 40
      %v1418 = vpop.permute.xlu0 %1417
      %1419 = vrot.lane.b32.xlu0 %v1336, 40
      %v1420 = vpop.permute.xlu0 %1419
      %1421 = vrot.lane.b32.xlu0 %v1337, 40
      %v1422 = vpop.permute.xlu0 %1421
      %1423 = vrot.lane.b32.xlu0 %v1338, 40
      %v1424 = vpop.permute.xlu0 %1423
      %1425 = vrot.lane.b32.xlu0 %v1339, 40
      %v1426 = vpop.permute.xlu0 %1425
      %1427 = vrot.lane.b32.xlu0 %v1340, 40
      %v1428 = vpop.permute.xlu0 %1427
      %1429 = vrot.lane.b32.xlu0 %v1341, 40
      %v1430 = vpop.permute.xlu0 %1429
      %1431 = vrot.lane.b32.xlu0 %v1342, 40
      %v1432 = vpop.permute.xlu0 %1431
      %1433 = vrot.lane.b32.xlu0 %v1343, 40
      %v1434 = vpop.permute.xlu0 %1433
      %1435 = vrot.lane.b32.xlu0 %v1344, 40
      %v1436 = vpop.permute.xlu0 %1435
      %1437 = vrot.lane.b32.xlu0 %v1345, 40
      %v1438 = vpop.permute.xlu0 %1437
      %1439 = vrot.lane.b32.xlu0 %v1346, 40
      %v1440 = vpop.permute.xlu0 %1439
      %1441 = vrot.lane.b32.xlu0 %v1347, 40
      %v1442 = vpop.permute.xlu0 %1441
      %1443 = vrot.lane.b32.xlu0 %v1348, 40
      %v1444 = vpop.permute.xlu0 %1443
      %vm1477 = vcmask 392512
      %1478 = vst.msk [vmem:[#allocation3] sm:$0xff] %vm1477, %v1382
      %1479 = vst.msk [vmem:[#allocation3 + $0x8] sm:$0xff] %vm1477, %v1384
      %1480 = vst.msk [vmem:[#allocation3 + $0x10] sm:$0xff] %vm1477, %v1386
      %1481 = vst.msk [vmem:[#allocation3 + $0x18] sm:$0xff] %vm1477, %v1388
      %1482 = vst.msk [vmem:[#allocation3 + $0x20] sm:$0xff] %vm1477, %v1390
      %1483 = vst.msk [vmem:[#allocation3 + $0x28] sm:$0xff] %vm1477, %v1392
      %1484 = vst.msk [vmem:[#allocation3 + $0x30] sm:$0xff] %vm1477, %v1394
      %1485 = vst.msk [vmem:[#allocation3 + $0x38] sm:$0xff] %vm1477, %v1396
      %1486 = vst.msk [vmem:[#allocation3 + $0x40] sm:$0xff] %vm1477, %v1398
      %1487 = vst.msk [vmem:[#allocation3 + $0x48] sm:$0xff] %vm1477, %v1400
      %1488 = vst.msk [vmem:[#allocation3 + $0x50] sm:$0xff] %vm1477, %v1402
      %1489 = vst.msk [vmem:[#allocation3 + $0x58] sm:$0xff] %vm1477, %v1404
      %1490 = vst.msk [vmem:[#allocation3 + $0x60] sm:$0xff] %vm1477, %v1406
      %1491 = vst.msk [vmem:[#allocation3 + $0x68] sm:$0xff] %vm1477, %v1408
      %1492 = vst.msk [vmem:[#allocation3 + $0x70] sm:$0xff] %vm1477, %v1410
      %1493 = vst.msk [vmem:[#allocation3 + $0x78] sm:$0xff] %vm1477, %v1412
      %1494 = vst.msk [vmem:[#allocation3 + $0x80] sm:$0xff] %vm1477, %v1414
      %1495 = vst.msk [vmem:[#allocation3 + $0x88] sm:$0xff] %vm1477, %v1416
      %1496 = vst.msk [vmem:[#allocation3 + $0x90] sm:$0xff] %vm1477, %v1418
      %1497 = vst.msk [vmem:[#allocation3 + $0x98] sm:$0xff] %vm1477, %v1420
      %1498 = vst.msk [vmem:[#allocation3 + $0xa0] sm:$0xff] %vm1477, %v1422
      %1499 = vst.msk [vmem:[#allocation3 + $0xa8] sm:$0xff] %vm1477, %v1424
      %1500 = vst.msk [vmem:[#allocation3 + $0xb0] sm:$0xff] %vm1477, %v1426
      %1501 = vst.msk [vmem:[#allocation3 + $0xb8] sm:$0xff] %vm1477, %v1428
      %1502 = vst.msk [vmem:[#allocation3 + $0xc0] sm:$0xff] %vm1477, %v1430
      %1503 = vst.msk [vmem:[#allocation3 + $0xc8] sm:$0xff] %vm1477, %v1432
      %1504 = vst.msk [vmem:[#allocation3 + $0xd0] sm:$0xff] %vm1477, %v1434
      %1505 = vst.msk [vmem:[#allocation3 + $0xd8] sm:$0xff] %vm1477, %v1436
      %1506 = vst.msk [vmem:[#allocation3 + $0xe0] sm:$0xff] %vm1477, %v1438
      %1507 = vst.msk [vmem:[#allocation3 + $0xe8] sm:$0xff] %vm1477, %v1440
      %1508 = vst.msk [vmem:[#allocation3 + $0xf0] sm:$0xff] %vm1477, %v1442
      %1509 = vst.msk [vmem:[#allocation3 + $0xf8] sm:$0xff] %vm1477, %v1444
      %s1510 = scalar_lea.vmem [#allocation2], 48
      %v1511 = vld [vmem:[%s1510] sm:$0xff]
      %v1512 = vld [vmem:[%s1510 + $0x8] sm:$0xff]
      %v1513 = vld [vmem:[%s1510 + $0x18] sm:$0xff]
      %v1514 = vld [vmem:[%s1510 + $0x20] sm:$0xff]
      %v1515 = vld [vmem:[%s1510 + $0x30] sm:$0xff]
      %v1516 = vld [vmem:[%s1510 + $0x38] sm:$0xff]
      %v1517 = vld [vmem:[%s1510 + $0x48] sm:$0xff]
      %v1518 = vld [vmem:[%s1510 + $0x50] sm:$0xff]
      %v1519 = vld [vmem:[%s1510 + $0x60] sm:$0xff]
      %v1520 = vld [vmem:[%s1510 + $0x68] sm:$0xff]
      %v1521 = vld [vmem:[%s1510 + $0x78] sm:$0xff]
      %v1522 = vld [vmem:[%s1510 + $0x80] sm:$0xff]
      %v1523 = vld [vmem:[%s1510 + $0x90] sm:$0xff]
      %v1524 = vld [vmem:[%s1510 + $0x98] sm:$0xff]
      %v1525 = vld [vmem:[%s1510 + $0xa8] sm:$0xff]
      %v1526 = vld [vmem:[%s1510 + $0xb0] sm:$0xff]
      %v1527 = vld [vmem:[%s1510 + $0xc0] sm:$0xff]
      %v1528 = vld [vmem:[%s1510 + $0xc8] sm:$0xff]
      %v1529 = vld [vmem:[%s1510 + $0xd8] sm:$0xff]
      %v1530 = vld [vmem:[%s1510 + $0xe0] sm:$0xff]
      %v1531 = vld [vmem:[%s1510 + $0xf0] sm:$0xff]
      %v1532 = vld [vmem:[%s1510 + $0xf8] sm:$0xff]
      %v1533 = vld [vmem:[%s1510 + $0x108] sm:$0xff]
      %v1534 = vld [vmem:[%s1510 + $0x110] sm:$0xff]
      %v1535 = vld [vmem:[%s1510 + $0x120] sm:$0xff]
      %v1536 = vld [vmem:[%s1510 + $0x128] sm:$0xff]
      %v1537 = vld [vmem:[%s1510 + $0x138] sm:$0xff]
      %v1538 = vld [vmem:[%s1510 + $0x140] sm:$0xff]
      %v1539 = vld [vmem:[%s1510 + $0x150] sm:$0xff]
      %v1540 = vld [vmem:[%s1510 + $0x158] sm:$0xff]
      %v1541 = vld [vmem:[%s1510 + $0x168] sm:$0xff]
      %v1542 = vld [vmem:[%s1510 + $0x170] sm:$0xff]
      %1575 = vrot.lane.b32.xlu0 %v1511, 48
      %v1576 = vpop.permute.xlu0 %1575
      %1577 = vrot.lane.b32.xlu0 %v1512, 48
      %v1578 = vpop.permute.xlu0 %1577
      %1579 = vrot.lane.b32.xlu0 %v1513, 48
      %v1580 = vpop.permute.xlu0 %1579
      %1581 = vrot.lane.b32.xlu0 %v1514, 48
      %v1582 = vpop.permute.xlu0 %1581
      %1583 = vrot.lane.b32.xlu0 %v1515, 48
      %v1584 = vpop.permute.xlu0 %1583
      %1585 = vrot.lane.b32.xlu0 %v1516, 48
      %v1586 = vpop.permute.xlu0 %1585
      %1587 = vrot.lane.b32.xlu0 %v1517, 48
      %v1588 = vpop.permute.xlu0 %1587
      %1589 = vrot.lane.b32.xlu0 %v1518, 48
      %v1590 = vpop.permute.xlu0 %1589
      %1591 = vrot.lane.b32.xlu0 %v1519, 48
      %v1592 = vpop.permute.xlu0 %1591
      %1593 = vrot.lane.b32.xlu0 %v1520, 48
      %v1594 = vpop.permute.xlu0 %1593
      %1595 = vrot.lane.b32.xlu0 %v1521, 48
      %v1596 = vpop.permute.xlu0 %1595
      %1597 = vrot.lane.b32.xlu0 %v1522, 48
      %v1598 = vpop.permute.xlu0 %1597
      %1599 = vrot.lane.b32.xlu0 %v1523, 48
      %v1600 = vpop.permute.xlu0 %1599
      %1601 = vrot.lane.b32.xlu0 %v1524, 48
      %v1602 = vpop.permute.xlu0 %1601
      %1603 = vrot.lane.b32.xlu0 %v1525, 48
      %v1604 = vpop.permute.xlu0 %1603
      %1605 = vrot.lane.b32.xlu0 %v1526, 48
      %v1606 = vpop.permute.xlu0 %1605
      %1607 = vrot.lane.b32.xlu0 %v1527, 48
      %v1608 = vpop.permute.xlu0 %1607
      %1609 = vrot.lane.b32.xlu0 %v1528, 48
      %v1610 = vpop.permute.xlu0 %1609
      %1611 = vrot.lane.b32.xlu0 %v1529, 48
      %v1612 = vpop.permute.xlu0 %1611
      %1613 = vrot.lane.b32.xlu0 %v1530, 48
      %v1614 = vpop.permute.xlu0 %1613
      %1615 = vrot.lane.b32.xlu0 %v1531, 48
      %v1616 = vpop.permute.xlu0 %1615
      %1617 = vrot.lane.b32.xlu0 %v1532, 48
      %v1618 = vpop.permute.xlu0 %1617
      %1619 = vrot.lane.b32.xlu0 %v1533, 48
      %v1620 = vpop.permute.xlu0 %1619
      %1621 = vrot.lane.b32.xlu0 %v1534, 48
      %v1622 = vpop.permute.xlu0 %1621
      %1623 = vrot.lane.b32.xlu0 %v1535, 48
      %v1624 = vpop.permute.xlu0 %1623
      %1625 = vrot.lane.b32.xlu0 %v1536, 48
      %v1626 = vpop.permute.xlu0 %1625
      %1627 = vrot.lane.b32.xlu0 %v1537, 48
      %v1628 = vpop.permute.xlu0 %1627
      %1629 = vrot.lane.b32.xlu0 %v1538, 48
      %v1630 = vpop.permute.xlu0 %1629
      %1631 = vrot.lane.b32.xlu0 %v1539, 48
      %v1632 = vpop.permute.xlu0 %1631
      %1633 = vrot.lane.b32.xlu0 %v1540, 48
      %v1634 = vpop.permute.xlu0 %1633
      %1635 = vrot.lane.b32.xlu0 %v1541, 48
      %v1636 = vpop.permute.xlu0 %1635
      %1637 = vrot.lane.b32.xlu0 %v1542, 48
      %v1638 = vpop.permute.xlu0 %1637
      %vm1671 = vcmask 458112
      %1672 = vst.msk [vmem:[#allocation3] sm:$0xff] %vm1671, %v1576
      %1673 = vst.msk [vmem:[#allocation3 + $0x8] sm:$0xff] %vm1671, %v1578
      %1674 = vst.msk [vmem:[#allocation3 + $0x10] sm:$0xff] %vm1671, %v1580
      %1675 = vst.msk [vmem:[#allocation3 + $0x18] sm:$0xff] %vm1671, %v1582
      %1676 = vst.msk [vmem:[#allocation3 + $0x20] sm:$0xff] %vm1671, %v1584
      %1677 = vst.msk [vmem:[#allocation3 + $0x28] sm:$0xff] %vm1671, %v1586
      %1678 = vst.msk [vmem:[#allocation3 + $0x30] sm:$0xff] %vm1671, %v1588
      %1679 = vst.msk [vmem:[#allocation3 + $0x38] sm:$0xff] %vm1671, %v1590
      %1680 = vst.msk [vmem:[#allocation3 + $0x40] sm:$0xff] %vm1671, %v1592
      %1681 = vst.msk [vmem:[#allocation3 + $0x48] sm:$0xff] %vm1671, %v1594
      %1682 = vst.msk [vmem:[#allocation3 + $0x50] sm:$0xff] %vm1671, %v1596
      %1683 = vst.msk [vmem:[#allocation3 + $0x58] sm:$0xff] %vm1671, %v1598
      %1684 = vst.msk [vmem:[#allocation3 + $0x60] sm:$0xff] %vm1671, %v1600
      %1685 = vst.msk [vmem:[#allocation3 + $0x68] sm:$0xff] %vm1671, %v1602
      %1686 = vst.msk [vmem:[#allocation3 + $0x70] sm:$0xff] %vm1671, %v1604
      %1687 = vst.msk [vmem:[#allocation3 + $0x78] sm:$0xff] %vm1671, %v1606
      %1688 = vst.msk [vmem:[#allocation3 + $0x80] sm:$0xff] %vm1671, %v1608
      %1689 = vst.msk [vmem:[#allocation3 + $0x88] sm:$0xff] %vm1671, %v1610
      %1690 = vst.msk [vmem:[#allocation3 + $0x90] sm:$0xff] %vm1671, %v1612
      %1691 = vst.msk [vmem:[#allocation3 + $0x98] sm:$0xff] %vm1671, %v1614
      %1692 = vst.msk [vmem:[#allocation3 + $0xa0] sm:$0xff] %vm1671, %v1616
      %1693 = vst.msk [vmem:[#allocation3 + $0xa8] sm:$0xff] %vm1671, %v1618
      %1694 = vst.msk [vmem:[#allocation3 + $0xb0] sm:$0xff] %vm1671, %v1620
      %1695 = vst.msk [vmem:[#allocation3 + $0xb8] sm:$0xff] %vm1671, %v1622
      %1696 = vst.msk [vmem:[#allocation3 + $0xc0] sm:$0xff] %vm1671, %v1624
      %1697 = vst.msk [vmem:[#allocation3 + $0xc8] sm:$0xff] %vm1671, %v1626
      %1698 = vst.msk [vmem:[#allocation3 + $0xd0] sm:$0xff] %vm1671, %v1628
      %1699 = vst.msk [vmem:[#allocation3 + $0xd8] sm:$0xff] %vm1671, %v1630
      %1700 = vst.msk [vmem:[#allocation3 + $0xe0] sm:$0xff] %vm1671, %v1632
      %1701 = vst.msk [vmem:[#allocation3 + $0xe8] sm:$0xff] %vm1671, %v1634
      %1702 = vst.msk [vmem:[#allocation3 + $0xf0] sm:$0xff] %vm1671, %v1636
      %1703 = vst.msk [vmem:[#allocation3 + $0xf8] sm:$0xff] %vm1671, %v1638
      %v1704 = vld [vmem:[%s1510 + $0x1] sm:$0xff]
      %v1705 = vld [vmem:[%s1510 + $0x9] sm:$0xff]
      %v1706 = vld [vmem:[%s1510 + $0x19] sm:$0xff]
      %v1707 = vld [vmem:[%s1510 + $0x21] sm:$0xff]
      %v1708 = vld [vmem:[%s1510 + $0x31] sm:$0xff]
      %v1709 = vld [vmem:[%s1510 + $0x39] sm:$0xff]
      %v1710 = vld [vmem:[%s1510 + $0x49] sm:$0xff]
      %v1711 = vld [vmem:[%s1510 + $0x51] sm:$0xff]
      %v1712 = vld [vmem:[%s1510 + $0x61] sm:$0xff]
      %v1713 = vld [vmem:[%s1510 + $0x69] sm:$0xff]
      %v1714 = vld [vmem:[%s1510 + $0x79] sm:$0xff]
      %v1715 = vld [vmem:[%s1510 + $0x81] sm:$0xff]
      %v1716 = vld [vmem:[%s1510 + $0x91] sm:$0xff]
      %v1717 = vld [vmem:[%s1510 + $0x99] sm:$0xff]
      %v1718 = vld [vmem:[%s1510 + $0xa9] sm:$0xff]
      %v1719 = vld [vmem:[%s1510 + $0xb1] sm:$0xff]
      %v1720 = vld [vmem:[%s1510 + $0xc1] sm:$0xff]
      %v1721 = vld [vmem:[%s1510 + $0xc9] sm:$0xff]
      %v1722 = vld [vmem:[%s1510 + $0xd9] sm:$0xff]
      %v1723 = vld [vmem:[%s1510 + $0xe1] sm:$0xff]
      %v1724 = vld [vmem:[%s1510 + $0xf1] sm:$0xff]
      %v1725 = vld [vmem:[%s1510 + $0xf9] sm:$0xff]
      %v1726 = vld [vmem:[%s1510 + $0x109] sm:$0xff]
      %v1727 = vld [vmem:[%s1510 + $0x111] sm:$0xff]
      %v1728 = vld [vmem:[%s1510 + $0x121] sm:$0xff]
      %v1729 = vld [vmem:[%s1510 + $0x129] sm:$0xff]
      %v1730 = vld [vmem:[%s1510 + $0x139] sm:$0xff]
      %v1731 = vld [vmem:[%s1510 + $0x141] sm:$0xff]
      %v1732 = vld [vmem:[%s1510 + $0x151] sm:$0xff]
      %v1733 = vld [vmem:[%s1510 + $0x159] sm:$0xff]
      %v1734 = vld [vmem:[%s1510 + $0x169] sm:$0xff]
      %v1735 = vld [vmem:[%s1510 + $0x171] sm:$0xff]
      %1768 = vrot.lane.b32.xlu0 %v1704, 56
      %v1769 = vpop.permute.xlu0 %1768
      %1770 = vrot.lane.b32.xlu0 %v1705, 56
      %v1771 = vpop.permute.xlu0 %1770
      %1772 = vrot.lane.b32.xlu0 %v1706, 56
      %v1773 = vpop.permute.xlu0 %1772
      %1774 = vrot.lane.b32.xlu0 %v1707, 56
      %v1775 = vpop.permute.xlu0 %1774
      %1776 = vrot.lane.b32.xlu0 %v1708, 56
      %v1777 = vpop.permute.xlu0 %1776
      %1778 = vrot.lane.b32.xlu0 %v1709, 56
      %v1779 = vpop.permute.xlu0 %1778
      %1780 = vrot.lane.b32.xlu0 %v1710, 56
      %v1781 = vpop.permute.xlu0 %1780
      %1782 = vrot.lane.b32.xlu0 %v1711, 56
      %v1783 = vpop.permute.xlu0 %1782
      %1784 = vrot.lane.b32.xlu0 %v1712, 56
      %v1785 = vpop.permute.xlu0 %1784
      %1786 = vrot.lane.b32.xlu0 %v1713, 56
      %v1787 = vpop.permute.xlu0 %1786
      %1788 = vrot.lane.b32.xlu0 %v1714, 56
      %v1789 = vpop.permute.xlu0 %1788
      %1790 = vrot.lane.b32.xlu0 %v1715, 56
      %v1791 = vpop.permute.xlu0 %1790
      %1792 = vrot.lane.b32.xlu0 %v1716, 56
      %v1793 = vpop.permute.xlu0 %1792
      %1794 = vrot.lane.b32.xlu0 %v1717, 56
      %v1795 = vpop.permute.xlu0 %1794
      %1796 = vrot.lane.b32.xlu0 %v1718, 56
      %v1797 = vpop.permute.xlu0 %1796
      %1798 = vrot.lane.b32.xlu0 %v1719, 56
      %v1799 = vpop.permute.xlu0 %1798
      %1800 = vrot.lane.b32.xlu0 %v1720, 56
      %v1801 = vpop.permute.xlu0 %1800
      %1802 = vrot.lane.b32.xlu0 %v1721, 56
      %v1803 = vpop.permute.xlu0 %1802
      %1804 = vrot.lane.b32.xlu0 %v1722, 56
      %v1805 = vpop.permute.xlu0 %1804
      %1806 = vrot.lane.b32.xlu0 %v1723, 56
      %v1807 = vpop.permute.xlu0 %1806
      %1808 = vrot.lane.b32.xlu0 %v1724, 56
      %v1809 = vpop.permute.xlu0 %1808
      %1810 = vrot.lane.b32.xlu0 %v1725, 56
      %v1811 = vpop.permute.xlu0 %1810
      %1812 = vrot.lane.b32.xlu0 %v1726, 56
      %v1813 = vpop.permute.xlu0 %1812
      %1814 = vrot.lane.b32.xlu0 %v1727, 56
      %v1815 = vpop.permute.xlu0 %1814
      %1816 = vrot.lane.b32.xlu0 %v1728, 56
      %v1817 = vpop.permute.xlu0 %1816
      %1818 = vrot.lane.b32.xlu0 %v1729, 56
      %v1819 = vpop.permute.xlu0 %1818
      %1820 = vrot.lane.b32.xlu0 %v1730, 56
      %v1821 = vpop.permute.xlu0 %1820
      %1822 = vrot.lane.b32.xlu0 %v1731, 56
      %v1823 = vpop.permute.xlu0 %1822
      %1824 = vrot.lane.b32.xlu0 %v1732, 56
      %v1825 = vpop.permute.xlu0 %1824
      %1826 = vrot.lane.b32.xlu0 %v1733, 56
      %v1827 = vpop.permute.xlu0 %1826
      %1828 = vrot.lane.b32.xlu0 %v1734, 56
      %v1829 = vpop.permute.xlu0 %1828
      %1830 = vrot.lane.b32.xlu0 %v1735, 56
      %v1831 = vpop.permute.xlu0 %1830
      %vm1864 = vcmask 523712
      %1865 = vst.msk [vmem:[#allocation3] sm:$0xff] %vm1864, %v1769
      %1866 = vst.msk [vmem:[#allocation3 + $0x8] sm:$0xff] %vm1864, %v1771
      %1867 = vst.msk [vmem:[#allocation3 + $0x10] sm:$0xff] %vm1864, %v1773
      %1868 = vst.msk [vmem:[#allocation3 + $0x18] sm:$0xff] %vm1864, %v1775
      %1869 = vst.msk [vmem:[#allocation3 + $0x20] sm:$0xff] %vm1864, %v1777
      %1870 = vst.msk [vmem:[#allocation3 + $0x28] sm:$0xff] %vm1864, %v1779
      %1871 = vst.msk [vmem:[#allocation3 + $0x30] sm:$0xff] %vm1864, %v1781
      %1872 = vst.msk [vmem:[#allocation3 + $0x38] sm:$0xff] %vm1864, %v1783
      %1873 = vst.msk [vmem:[#allocation3 + $0x40] sm:$0xff] %vm1864, %v1785
      %1874 = vst.msk [vmem:[#allocation3 + $0x48] sm:$0xff] %vm1864, %v1787
      %1875 = vst.msk [vmem:[#allocation3 + $0x50] sm:$0xff] %vm1864, %v1789
      %1876 = vst.msk [vmem:[#allocation3 + $0x58] sm:$0xff] %vm1864, %v1791
      %1877 = vst.msk [vmem:[#allocation3 + $0x60] sm:$0xff] %vm1864, %v1793
      %1878 = vst.msk [vmem:[#allocation3 + $0x68] sm:$0xff] %vm1864, %v1795
      %1879 = vst.msk [vmem:[#allocation3 + $0x70] sm:$0xff] %vm1864, %v1797
      %1880 = vst.msk [vmem:[#allocation3 + $0x78] sm:$0xff] %vm1864, %v1799
      %1881 = vst.msk [vmem:[#allocation3 + $0x80] sm:$0xff] %vm1864, %v1801
      %1882 = vst.msk [vmem:[#allocation3 + $0x88] sm:$0xff] %vm1864, %v1803
      %1883 = vst.msk [vmem:[#allocation3 + $0x90] sm:$0xff] %vm1864, %v1805
      %1884 = vst.msk [vmem:[#allocation3 + $0x98] sm:$0xff] %vm1864, %v1807
      %1885 = vst.msk [vmem:[#allocation3 + $0xa0] sm:$0xff] %vm1864, %v1809
      %1886 = vst.msk [vmem:[#allocation3 + $0xa8] sm:$0xff] %vm1864, %v1811
      %1887 = vst.msk [vmem:[#allocation3 + $0xb0] sm:$0xff] %vm1864, %v1813
      %1888 = vst.msk [vmem:[#allocation3 + $0xb8] sm:$0xff] %vm1864, %v1815
      %1889 = vst.msk [vmem:[#allocation3 + $0xc0] sm:$0xff] %vm1864, %v1817
      %1890 = vst.msk [vmem:[#allocation3 + $0xc8] sm:$0xff] %vm1864, %v1819
      %1891 = vst.msk [vmem:[#allocation3 + $0xd0] sm:$0xff] %vm1864, %v1821
      %1892 = vst.msk [vmem:[#allocation3 + $0xd8] sm:$0xff] %vm1864, %v1823
      %1893 = vst.msk [vmem:[#allocation3 + $0xe0] sm:$0xff] %vm1864, %v1825
      %1894 = vst.msk [vmem:[#allocation3 + $0xe8] sm:$0xff] %vm1864, %v1827
      %1895 = vst.msk [vmem:[#allocation3 + $0xf0] sm:$0xff] %vm1864, %v1829
      %1896 = vst.msk [vmem:[#allocation3 + $0xf8] sm:$0xff] %vm1864, %v1831
      %v1897 = vld [vmem:[%s1510 + $0x2] sm:$0xff]
      %v1898 = vld [vmem:[%s1510 + $0xa] sm:$0xff]
      %v1899 = vld [vmem:[%s1510 + $0x1a] sm:$0xff]
      %v1900 = vld [vmem:[%s1510 + $0x22] sm:$0xff]
      %v1901 = vld [vmem:[%s1510 + $0x32] sm:$0xff]
      %v1902 = vld [vmem:[%s1510 + $0x3a] sm:$0xff]
      %v1903 = vld [vmem:[%s1510 + $0x4a] sm:$0xff]
      %v1904 = vld [vmem:[%s1510 + $0x52] sm:$0xff]
      %v1905 = vld [vmem:[%s1510 + $0x62] sm:$0xff]
      %v1906 = vld [vmem:[%s1510 + $0x6a] sm:$0xff]
      %v1907 = vld [vmem:[%s1510 + $0x7a] sm:$0xff]
      %v1908 = vld [vmem:[%s1510 + $0x82] sm:$0xff]
      %v1909 = vld [vmem:[%s1510 + $0x92] sm:$0xff]
      %v1910 = vld [vmem:[%s1510 + $0x9a] sm:$0xff]
      %v1911 = vld [vmem:[%s1510 + $0xaa] sm:$0xff]
      %v1912 = vld [vmem:[%s1510 + $0xb2] sm:$0xff]
      %v1913 = vld [vmem:[%s1510 + $0xc2] sm:$0xff]
      %v1914 = vld [vmem:[%s1510 + $0xca] sm:$0xff]
      %v1915 = vld [vmem:[%s1510 + $0xda] sm:$0xff]
      %v1916 = vld [vmem:[%s1510 + $0xe2] sm:$0xff]
      %v1917 = vld [vmem:[%s1510 + $0xf2] sm:$0xff]
      %v1918 = vld [vmem:[%s1510 + $0xfa] sm:$0xff]
      %v1919 = vld [vmem:[%s1510 + $0x10a] sm:$0xff]
      %v1920 = vld [vmem:[%s1510 + $0x112] sm:$0xff]
      %v1921 = vld [vmem:[%s1510 + $0x122] sm:$0xff]
      %v1922 = vld [vmem:[%s1510 + $0x12a] sm:$0xff]
      %v1923 = vld [vmem:[%s1510 + $0x13a] sm:$0xff]
      %v1924 = vld [vmem:[%s1510 + $0x142] sm:$0xff]
      %v1925 = vld [vmem:[%s1510 + $0x152] sm:$0xff]
      %v1926 = vld [vmem:[%s1510 + $0x15a] sm:$0xff]
      %v1927 = vld [vmem:[%s1510 + $0x16a] sm:$0xff]
      %v1928 = vld [vmem:[%s1510 + $0x172] sm:$0xff]
      %1961 = vrot.lane.b32.xlu0 %v1897, 64
      %v1962 = vpop.permute.xlu0 %1961
      %1963 = vrot.lane.b32.xlu0 %v1898, 64
      %v1964 = vpop.permute.xlu0 %1963
      %1965 = vrot.lane.b32.xlu0 %v1899, 64
      %v1966 = vpop.permute.xlu0 %1965
      %1967 = vrot.lane.b32.xlu0 %v1900, 64
      %v1968 = vpop.permute.xlu0 %1967
      %1969 = vrot.lane.b32.xlu0 %v1901, 64
      %v1970 = vpop.permute.xlu0 %1969
      %1971 = vrot.lane.b32.xlu0 %v1902, 64
      %v1972 = vpop.permute.xlu0 %1971
      %1973 = vrot.lane.b32.xlu0 %v1903, 64
      %v1974 = vpop.permute.xlu0 %1973
      %1975 = vrot.lane.b32.xlu0 %v1904, 64
      %v1976 = vpop.permute.xlu0 %1975
      %1977 = vrot.lane.b32.xlu0 %v1905, 64
      %v1978 = vpop.permute.xlu0 %1977
      %1979 = vrot.lane.b32.xlu0 %v1906, 64
      %v1980 = vpop.permute.xlu0 %1979
      %1981 = vrot.lane.b32.xlu0 %v1907, 64
      %v1982 = vpop.permute.xlu0 %1981
      %1983 = vrot.lane.b32.xlu0 %v1908, 64
      %v1984 = vpop.permute.xlu0 %1983
      %1985 = vrot.lane.b32.xlu0 %v1909, 64
      %v1986 = vpop.permute.xlu0 %1985
      %1987 = vrot.lane.b32.xlu0 %v1910, 64
      %v1988 = vpop.permute.xlu0 %1987
      %1989 = vrot.lane.b32.xlu0 %v1911, 64
      %v1990 = vpop.permute.xlu0 %1989
      %1991 = vrot.lane.b32.xlu0 %v1912, 64
      %v1992 = vpop.permute.xlu0 %1991
      %1993 = vrot.lane.b32.xlu0 %v1913, 64
      %v1994 = vpop.permute.xlu0 %1993
      %1995 = vrot.lane.b32.xlu0 %v1914, 64
      %v1996 = vpop.permute.xlu0 %1995
      %1997 = vrot.lane.b32.xlu0 %v1915, 64
      %v1998 = vpop.permute.xlu0 %1997
      %1999 = vrot.lane.b32.xlu0 %v1916, 64
      %v2000 = vpop.permute.xlu0 %1999
      %2001 = vrot.lane.b32.xlu0 %v1917, 64
      %v2002 = vpop.permute.xlu0 %2001
      %2003 = vrot.lane.b32.xlu0 %v1918, 64
      %v2004 = vpop.permute.xlu0 %2003
      %2005 = vrot.lane.b32.xlu0 %v1919, 64
      %v2006 = vpop.permute.xlu0 %2005
      %2007 = vrot.lane.b32.xlu0 %v1920, 64
      %v2008 = vpop.permute.xlu0 %2007
      %2009 = vrot.lane.b32.xlu0 %v1921, 64
      %v2010 = vpop.permute.xlu0 %2009
      %2011 = vrot.lane.b32.xlu0 %v1922, 64
      %v2012 = vpop.permute.xlu0 %2011
      %2013 = vrot.lane.b32.xlu0 %v1923, 64
      %v2014 = vpop.permute.xlu0 %2013
      %2015 = vrot.lane.b32.xlu0 %v1924, 64
      %v2016 = vpop.permute.xlu0 %2015
      %2017 = vrot.lane.b32.xlu0 %v1925, 64
      %v2018 = vpop.permute.xlu0 %2017
      %2019 = vrot.lane.b32.xlu0 %v1926, 64
      %v2020 = vpop.permute.xlu0 %2019
      %2021 = vrot.lane.b32.xlu0 %v1927, 64
      %v2022 = vpop.permute.xlu0 %2021
      %2023 = vrot.lane.b32.xlu0 %v1928, 64
      %v2024 = vpop.permute.xlu0 %2023
      %vm2057 = vcmask 589312
      %2058 = vst.msk [vmem:[#allocation3] sm:$0xff] %vm2057, %v1962
      %2059 = vst.msk [vmem:[#allocation3 + $0x8] sm:$0xff] %vm2057, %v1964
      %2060 = vst.msk [vmem:[#allocation3 + $0x10] sm:$0xff] %vm2057, %v1966
      %2061 = vst.msk [vmem:[#allocation3 + $0x18] sm:$0xff] %vm2057, %v1968
      %2062 = vst.msk [vmem:[#allocation3 + $0x20] sm:$0xff] %vm2057, %v1970
      %2063 = vst.msk [vmem:[#allocation3 + $0x28] sm:$0xff] %vm2057, %v1972
      %2064 = vst.msk [vmem:[#allocation3 + $0x30] sm:$0xff] %vm2057, %v1974
      %2065 = vst.msk [vmem:[#allocation3 + $0x38] sm:$0xff] %vm2057, %v1976
      %2066 = vst.msk [vmem:[#allocation3 + $0x40] sm:$0xff] %vm2057, %v1978
      %2067 = vst.msk [vmem:[#allocation3 + $0x48] sm:$0xff] %vm2057, %v1980
      %2068 = vst.msk [vmem:[#allocation3 + $0x50] sm:$0xff] %vm2057, %v1982
      %2069 = vst.msk [vmem:[#allocation3 + $0x58] sm:$0xff] %vm2057, %v1984
      %2070 = vst.msk [vmem:[#allocation3 + $0x60] sm:$0xff] %vm2057, %v1986
      %2071 = vst.msk [vmem:[#allocation3 + $0x68] sm:$0xff] %vm2057, %v1988
      %2072 = vst.msk [vmem:[#allocation3 + $0x70] sm:$0xff] %vm2057, %v1990
      %2073 = vst.msk [vmem:[#allocation3 + $0x78] sm:$0xff] %vm2057, %v1992
      %2074 = vst.msk [vmem:[#allocation3 + $0x80] sm:$0xff] %vm2057, %v1994
      %2075 = vst.msk [vmem:[#allocation3 + $0x88] sm:$0xff] %vm2057, %v1996
      %2076 = vst.msk [vmem:[#allocation3 + $0x90] sm:$0xff] %vm2057, %v1998
      %2077 = vst.msk [vmem:[#allocation3 + $0x98] sm:$0xff] %vm2057, %v2000
      %2078 = vst.msk [vmem:[#allocation3 + $0xa0] sm:$0xff] %vm2057, %v2002
      %2079 = vst.msk [vmem:[#allocation3 + $0xa8] sm:$0xff] %vm2057, %v2004
      %2080 = vst.msk [vmem:[#allocation3 + $0xb0] sm:$0xff] %vm2057, %v2006
      %2081 = vst.msk [vmem:[#allocation3 + $0xb8] sm:$0xff] %vm2057, %v2008
      %2082 = vst.msk [vmem:[#allocation3 + $0xc0] sm:$0xff] %vm2057, %v2010
      %2083 = vst.msk [vmem:[#allocation3 + $0xc8] sm:$0xff] %vm2057, %v2012
      %2084 = vst.msk [vmem:[#allocation3 + $0xd0] sm:$0xff] %vm2057, %v2014
      %2085 = vst.msk [vmem:[#allocation3 + $0xd8] sm:$0xff] %vm2057, %v2016
      %2086 = vst.msk [vmem:[#allocation3 + $0xe0] sm:$0xff] %vm2057, %v2018
      %2087 = vst.msk [vmem:[#allocation3 + $0xe8] sm:$0xff] %vm2057, %v2020
      %2088 = vst.msk [vmem:[#allocation3 + $0xf0] sm:$0xff] %vm2057, %v2022
      %2089 = vst.msk [vmem:[#allocation3 + $0xf8] sm:$0xff] %vm2057, %v2024
      %v2090 = vld [vmem:[#allocation3] sm:$0xff]
      %v2091 = vld [vmem:[#allocation3 + $0x8] sm:$0xff]
      %v2092 = vld [vmem:[#allocation3 + $0x10] sm:$0xff]
      %v2093 = vld [vmem:[#allocation3 + $0x18] sm:$0xff]
      %v2094 = vld [vmem:[#allocation3 + $0x20] sm:$0xff]
      %v2095 = vld [vmem:[#allocation3 + $0x28] sm:$0xff]
      %v2096 = vld [vmem:[#allocation3 + $0x30] sm:$0xff]
      %v2097 = vld [vmem:[#allocation3 + $0x38] sm:$0xff]
      %v2098 = vld [vmem:[#allocation3 + $0x40] sm:$0xff]
      %v2099 = vld [vmem:[#allocation3 + $0x48] sm:$0xff]
      %v2100 = vld [vmem:[#allocation3 + $0x50] sm:$0xff]
      %v2101 = vld [vmem:[#allocation3 + $0x58] sm:$0xff]
      %v2102 = vld [vmem:[#allocation3 + $0x60] sm:$0xff]
      %v2103 = vld [vmem:[#allocation3 + $0x68] sm:$0xff]
      %v2104 = vld [vmem:[#allocation3 + $0x70] sm:$0xff]
      %v2105 = vld [vmem:[#allocation3 + $0x78] sm:$0xff]
      %v2106 = vld [vmem:[#allocation3 + $0x80] sm:$0xff]
      %v2107 = vld [vmem:[#allocation3 + $0x88] sm:$0xff]
      %v2108 = vld [vmem:[#allocation3 + $0x90] sm:$0xff]
      %v2109 = vld [vmem:[#allocation3 + $0x98] sm:$0xff]
      %v2110 = vld [vmem:[#allocation3 + $0xa0] sm:$0xff]
      %v2111 = vld [vmem:[#allocation3 + $0xa8] sm:$0xff]
      %v2112 = vld [vmem:[#allocation3 + $0xb0] sm:$0xff]
      %v2113 = vld [vmem:[#allocation3 + $0xb8] sm:$0xff]
      %v2114 = vld [vmem:[#allocation3 + $0xc0] sm:$0xff]
      %v2115 = vld [vmem:[#allocation3 + $0xc8] sm:$0xff]
      %v2116 = vld [vmem:[#allocation3 + $0xd0] sm:$0xff]
      %v2117 = vld [vmem:[#allocation3 + $0xd8] sm:$0xff]
      %v2118 = vld [vmem:[#allocation3 + $0xe0] sm:$0xff]
      %v2119 = vld [vmem:[#allocation3 + $0xe8] sm:$0xff]
      %v2120 = vld [vmem:[#allocation3 + $0xf0] sm:$0xff]
      %v2121 = vld [vmem:[#allocation3 + $0xf8] sm:$0xff]
      %v2122 = vld [vmem:[%s1] sm:$0xff]
      %v2123 = vld [vmem:[%s1 + $0x8] sm:$0xff]
      %v2124 = vld [vmem:[%s1 + $0x10] sm:$0xff]
      %v2125 = vld [vmem:[%s1 + $0x18] sm:$0xff]
      %v2126 = vld [vmem:[%s1 + $0x20] sm:$0xff]
      %v2127 = vld [vmem:[%s1 + $0x28] sm:$0xff]
      %v2128 = vld [vmem:[%s1 + $0x30] sm:$0xff]
      %v2129 = vld [vmem:[%s1 + $0x38] sm:$0xff]
      %v2130 = vld [vmem:[%s1 + $0x40] sm:$0xff]
      %v2131 = vld [vmem:[%s2] sm:$0x1]
      %v2133 = vlaneseq
      %v2134 = vshrl.u32 %v2133, 7
      %v2135 = vsub.s32 0, %v2134
      %v2136 = vrot.slane %v2131, %v2135
      %vm2138 = vcmask 588800
      %v2140 = vsel %vm2138, %v2090, 0
      %v2143 = vsel %vm2138, %v2091, 0
      %v2146 = vsel %vm2138, %v2092, 0
      %v2149 = vsel %vm2138, %v2093, 0
      %v2152 = vsel %vm2138, %v2094, 0
      %v2155 = vsel %vm2138, %v2095, 0
      %v2158 = vsel %vm2138, %v2096, 0
      %v2161 = vsel %vm2138, %v2097, 0
      %v2164 = vsel %vm2138, %v2098, 0
      %v2167 = vsel %vm2138, %v2099, 0
      %v2170 = vsel %vm2138, %v2100, 0
      %v2173 = vsel %vm2138, %v2101, 0
      %v2176 = vsel %vm2138, %v2102, 0
      %v2179 = vsel %vm2138, %v2103, 0
      %v2182 = vsel %vm2138, %v2104, 0
      %v2185 = vsel %vm2138, %v2105, 0
      %v2188 = vsel %vm2138, %v2106, 0
      %v2191 = vsel %vm2138, %v2107, 0
      %v2194 = vsel %vm2138, %v2108, 0
      %v2197 = vsel %vm2138, %v2109, 0
      %v2200 = vsel %vm2138, %v2110, 0
      %v2203 = vsel %vm2138, %v2111, 0
      %v2206 = vsel %vm2138, %v2112, 0
      %v2209 = vsel %vm2138, %v2113, 0
      %v2212 = vsel %vm2138, %v2114, 0
      %v2215 = vsel %vm2138, %v2115, 0
      %v2218 = vsel %vm2138, %v2116, 0
      %v2221 = vsel %vm2138, %v2117, 0
      %v2224 = vsel %vm2138, %v2118, 0
      %v2227 = vsel %vm2138, %v2119, 0
      %v2230 = vsel %vm2138, %v2120, 0
      %v2233 = vsel %vm2138, %v2121, 0
      %2235 = vmatprep.subr.mxu0 0.0
      %2236 = vmatpush1.msra.mxu0 0.0
      %2237 = vmatprep.subr.mxu0 0.0
      %2238 = vmatpush1.msra.mxu0 0.0
      %2239 = vmatprep.subr.mxu0 0.0
      %2240 = vmatpush1.msra.mxu0 0.0
      %2241 = vmatprep.subr.mxu0 0.0
      %2242 = vmatpush1.msra.mxu0 0.0
      %2243 = vmatprep.subr.mxu0 0.0
      %2244 = vmatpush1.msra.mxu0 0.0
      %2245 = vmatprep.subr.mxu0 0.0
      %2246 = vmatpush1.msra.mxu0 0.0
      %2247 = vmatprep.subr.mxu0 0.0
      %2248 = vmatpush1.msra.mxu0 0.0
      %2249 = vmatprep.subr.mxu0 0.0
      %2250 = vmatpush1.msra.mxu0 %v2130
      %2251 = vmatprep.subr.mxu0 0.0
      %2252 = vmatpush1.msra.mxu0 %v2129
      %2253 = vmatprep.subr.mxu0 0.0
      %2254 = vmatpush1.msra.mxu0 %v2128
      %2255 = vmatprep.subr.mxu0 0.0
      %2256 = vmatpush1.msra.mxu0 %v2127
      %2257 = vmatprep.subr.mxu0 0.0
      %2258 = vmatpush1.msra.mxu0 %v2126
      %2259 = vmatprep.subr.mxu0 0.0
      %2260 = vmatpush1.msra.mxu0 %v2125
      %2261 = vmatprep.subr.mxu0 0.0
      %2262 = vmatpush1.msra.mxu0 %v2124
      %2263 = vmatprep.subr.mxu0 0.0
      %2264 = vmatpush1.msra.mxu0 %v2123
      %2265 = vmatprep.subr.mxu0 0.0
      %2266 = vmatpush1.msra.mxu0 %v2122
      %2267 = vmatprep.subr.mxu0 0.0
      %2268 = vmatpush2.msra.mxu0 0.0
      %2269 = vmatprep.subr.mxu0 0.0
      %2270 = vmatpush2.msra.mxu0 0.0
      %2271 = vmatprep.subr.mxu0 0.0
      %2272 = vmatpush2.msra.mxu0 0.0
      %2273 = vmatprep.subr.mxu0 0.0
      %2274 = vmatpush2.msra.mxu0 0.0
      %2275 = vmatprep.subr.mxu0 0.0
      %2276 = vmatpush2.msra.mxu0 0.0
      %2277 = vmatprep.subr.mxu0 0.0
      %2278 = vmatpush2.msra.mxu0 0.0
      %2279 = vmatprep.subr.mxu0 0.0
      %2280 = vmatpush2.msra.mxu0 0.0
      %2281 = vmatprep.subr.mxu0 0.0
      %2282 = vmatpush2.msra.mxu0 0.0
      %2283 = vmatprep.subr.mxu0 0.0
      %2284 = vmatpush2.msra.mxu0 0.0
      %2285 = vmatprep.subr.mxu0 0.0
      %2286 = vmatpush2.msra.mxu0 0.0
      %2287 = vmatprep.subr.mxu0 0.0
      %2288 = vmatpush2.msra.mxu0 0.0
      %2289 = vmatprep.subr.mxu0 0.0
      %2290 = vmatpush2.msra.mxu0 0.0
      %2291 = vmatprep.subr.mxu0 0.0
      %2292 = vmatpush2.msra.mxu0 0.0
      %2293 = vmatprep.subr.mxu0 0.0
      %2294 = vmatpush2.msra.mxu0 0.0
      %2295 = vmatprep.subr.mxu0 0.0
      %2296 = vmatpush2.msra.mxu0 0.0
      %2297 = vmatprep.subr.mxu0 0.0
      %2298 = vmatpush2.msra.mxu0 0.0
      %2299 = vmatprep.mubr.f32.mxu0 0.0
      %2300 = vmatmul.mubr.f32.gmra.mxu0 %v2140
      %v2301 = vpop.f32.mrf.mxu0
      %v2302 = vadd.f32 %v2136, %v2301
      %v2303 = vpop.f32.mrf.mxu0
      %2304 = vmatprep.mubr.f32.mxu0 0.0
      %2305 = vmatmul.mubr.f32.gmra.mxu0 %v2143
      %v2306 = vpop.f32.mrf.mxu0
      %v2307 = vadd.f32 %v2136, %v2306
      %v2308 = vpop.f32.mrf.mxu0
      %2309 = vmatprep.mubr.f32.mxu0 0.0
      %2310 = vmatmul.mubr.f32.gmra.mxu0 %v2146
      %v2311 = vpop.f32.mrf.mxu0
      %v2312 = vadd.f32 %v2136, %v2311
      %v2313 = vpop.f32.mrf.mxu0
      %2314 = vmatprep.mubr.f32.mxu0 0.0
      %2315 = vmatmul.mubr.f32.gmra.mxu0 %v2149
      %v2316 = vpop.f32.mrf.mxu0
      %v2317 = vadd.f32 %v2136, %v2316
      %v2318 = vpop.f32.mrf.mxu0
      %2319 = vmatprep.mubr.f32.mxu0 0.0
      %2320 = vmatmul.mubr.f32.gmra.mxu0 %v2152
      %v2321 = vpop.f32.mrf.mxu0
      %v2322 = vadd.f32 %v2136, %v2321
      %v2323 = vpop.f32.mrf.mxu0
      %2324 = vmatprep.mubr.f32.mxu0 0.0
      %2325 = vmatmul.mubr.f32.gmra.mxu0 %v2155
      %v2326 = vpop.f32.mrf.mxu0
      %v2327 = vadd.f32 %v2136, %v2326
      %v2328 = vpop.f32.mrf.mxu0
      %2329 = vmatprep.mubr.f32.mxu0 0.0
      %2330 = vmatmul.mubr.f32.gmra.mxu0 %v2158
      %v2331 = vpop.f32.mrf.mxu0
      %v2332 = vadd.f32 %v2136, %v2331
      %v2333 = vpop.f32.mrf.mxu0
      %2334 = vmatprep.mubr.f32.mxu0 0.0
      %2335 = vmatmul.mubr.f32.gmra.mxu0 %v2161
      %v2336 = vpop.f32.mrf.mxu0
      %v2337 = vadd.f32 %v2136, %v2336
      %v2338 = vpop.f32.mrf.mxu0
      %2339 = vmatprep.mubr.f32.mxu0 0.0
      %2340 = vmatmul.mubr.f32.gmra.mxu0 %v2164
      %v2341 = vpop.f32.mrf.mxu0
      %v2342 = vadd.f32 %v2136, %v2341
      %v2343 = vpop.f32.mrf.mxu0
      %2344 = vmatprep.mubr.f32.mxu0 0.0
      %2345 = vmatmul.mubr.f32.gmra.mxu0 %v2167
      %v2346 = vpop.f32.mrf.mxu0
      %v2347 = vadd.f32 %v2136, %v2346
      %v2348 = vpop.f32.mrf.mxu0
      %2349 = vmatprep.mubr.f32.mxu0 0.0
      %2350 = vmatmul.mubr.f32.gmra.mxu0 %v2170
      %v2351 = vpop.f32.mrf.mxu0
      %v2352 = vadd.f32 %v2136, %v2351
      %v2353 = vpop.f32.mrf.mxu0
      %2354 = vmatprep.mubr.f32.mxu0 0.0
      %2355 = vmatmul.mubr.f32.gmra.mxu0 %v2173
      %v2356 = vpop.f32.mrf.mxu0
      %v2357 = vadd.f32 %v2136, %v2356
      %v2358 = vpop.f32.mrf.mxu0
      %2359 = vmatprep.mubr.f32.mxu0 0.0
      %2360 = vmatmul.mubr.f32.gmra.mxu0 %v2176
      %v2361 = vpop.f32.mrf.mxu0
      %v2362 = vadd.f32 %v2136, %v2361
      %v2363 = vpop.f32.mrf.mxu0
      %2364 = vmatprep.mubr.f32.mxu0 0.0
      %2365 = vmatmul.mubr.f32.gmra.mxu0 %v2179
      %v2366 = vpop.f32.mrf.mxu0
      %v2367 = vadd.f32 %v2136, %v2366
      %v2368 = vpop.f32.mrf.mxu0
      %2369 = vmatprep.mubr.f32.mxu0 0.0
      %2370 = vmatmul.mubr.f32.gmra.mxu0 %v2182
      %v2371 = vpop.f32.mrf.mxu0
      %v2372 = vadd.f32 %v2136, %v2371
      %v2373 = vpop.f32.mrf.mxu0
      %2374 = vmatprep.mubr.f32.mxu0 0.0
      %2375 = vmatmul.mubr.f32.gmra.mxu0 %v2185
      %v2376 = vpop.f32.mrf.mxu0
      %v2377 = vadd.f32 %v2136, %v2376
      %v2378 = vpop.f32.mrf.mxu0
      %2379 = vmatprep.mubr.f32.mxu0 0.0
      %2380 = vmatmul.mubr.f32.gmra.mxu0 %v2188
      %v2381 = vpop.f32.mrf.mxu0
      %v2382 = vadd.f32 %v2136, %v2381
      %v2383 = vpop.f32.mrf.mxu0
      %2384 = vmatprep.mubr.f32.mxu0 0.0
      %2385 = vmatmul.mubr.f32.gmra.mxu0 %v2191
      %v2386 = vpop.f32.mrf.mxu0
      %v2387 = vadd.f32 %v2136, %v2386
      %v2388 = vpop.f32.mrf.mxu0
      %2389 = vmatprep.mubr.f32.mxu0 0.0
      %2390 = vmatmul.mubr.f32.gmra.mxu0 %v2194
      %v2391 = vpop.f32.mrf.mxu0
      %v2392 = vadd.f32 %v2136, %v2391
      %v2393 = vpop.f32.mrf.mxu0
      %2394 = vmatprep.mubr.f32.mxu0 0.0
      %2395 = vmatmul.mubr.f32.gmra.mxu0 %v2197
      %v2396 = vpop.f32.mrf.mxu0
      %v2397 = vadd.f32 %v2136, %v2396
      %v2398 = vpop.f32.mrf.mxu0
      %2399 = vmatprep.mubr.f32.mxu0 0.0
      %2400 = vmatmul.mubr.f32.gmra.mxu0 %v2200
      %v2401 = vpop.f32.mrf.mxu0
      %v2402 = vadd.f32 %v2136, %v2401
      %v2403 = vpop.f32.mrf.mxu0
      %2404 = vmatprep.mubr.f32.mxu0 0.0
      %2405 = vmatmul.mubr.f32.gmra.mxu0 %v2203
      %v2406 = vpop.f32.mrf.mxu0
      %v2407 = vadd.f32 %v2136, %v2406
      %v2408 = vpop.f32.mrf.mxu0
      %2409 = vmatprep.mubr.f32.mxu0 0.0
      %2410 = vmatmul.mubr.f32.gmra.mxu0 %v2206
      %v2411 = vpop.f32.mrf.mxu0
      %v2412 = vadd.f32 %v2136, %v2411
      %v2413 = vpop.f32.mrf.mxu0
      %2414 = vmatprep.mubr.f32.mxu0 0.0
      %2415 = vmatmul.mubr.f32.gmra.mxu0 %v2209
      %v2416 = vpop.f32.mrf.mxu0
      %v2417 = vadd.f32 %v2136, %v2416
      %v2418 = vpop.f32.mrf.mxu0
      %2419 = vmatprep.mubr.f32.mxu0 0.0
      %2420 = vmatmul.mubr.f32.gmra.mxu0 %v2212
      %v2421 = vpop.f32.mrf.mxu0
      %v2422 = vadd.f32 %v2136, %v2421
      %v2423 = vpop.f32.mrf.mxu0
      %2424 = vmatprep.mubr.f32.mxu0 0.0
      %2425 = vmatmul.mubr.f32.gmra.mxu0 %v2215
      %v2426 = vpop.f32.mrf.mxu0
      %v2427 = vadd.f32 %v2136, %v2426
      %v2428 = vpop.f32.mrf.mxu0
      %2429 = vmatprep.mubr.f32.mxu0 0.0
      %2430 = vmatmul.mubr.f32.gmra.mxu0 %v2218
      %v2431 = vpop.f32.mrf.mxu0
      %v2432 = vadd.f32 %v2136, %v2431
      %v2433 = vpop.f32.mrf.mxu0
      %2434 = vmatprep.mubr.f32.mxu0 0.0
      %2435 = vmatmul.mubr.f32.gmra.mxu0 %v2221
      %v2436 = vpop.f32.mrf.mxu0
      %v2437 = vadd.f32 %v2136, %v2436
      %v2438 = vpop.f32.mrf.mxu0
      %2439 = vmatprep.mubr.f32.mxu0 0.0
      %2440 = vmatmul.mubr.f32.gmra.mxu0 %v2224
      %v2441 = vpop.f32.mrf.mxu0
      %v2442 = vadd.f32 %v2136, %v2441
      %v2443 = vpop.f32.mrf.mxu0
      %2444 = vmatprep.mubr.f32.mxu0 0.0
      %2445 = vmatmul.mubr.f32.gmra.mxu0 %v2227
      %v2446 = vpop.f32.mrf.mxu0
      %v2447 = vadd.f32 %v2136, %v2446
      %v2448 = vpop.f32.mrf.mxu0
      %2449 = vmatprep.mubr.f32.mxu0 0.0
      %2450 = vmatmul.mubr.f32.gmra.mxu0 %v2230
      %v2451 = vpop.f32.mrf.mxu0
      %v2452 = vadd.f32 %v2136, %v2451
      %v2453 = vpop.f32.mrf.mxu0
      %2454 = vmatprep.mubr.f32.mxu0 0.0
      %2455 = vmatmul.mubr.f32.gmra.mxu0 %v2233
      %v2456 = vpop.f32.mrf.mxu0
      %v2457 = vadd.f32 %v2136, %v2456
      %v2458 = vpop.f32.mrf.mxu0
      %2459 = vdwg.mxu0
      %v2460 = vmax.f32 %v2302, 0.0
      %v2461 = vmax.f32 %v2307, 0.0
      %v2462 = vmax.f32 %v2312, 0.0
      %v2463 = vmax.f32 %v2317, 0.0
      %v2464 = vmax.f32 %v2322, 0.0
      %v2465 = vmax.f32 %v2327, 0.0
      %v2466 = vmax.f32 %v2332, 0.0
      %v2467 = vmax.f32 %v2337, 0.0
      %v2468 = vmax.f32 %v2342, 0.0
      %v2469 = vmax.f32 %v2347, 0.0
      %v2470 = vmax.f32 %v2352, 0.0
      %v2471 = vmax.f32 %v2357, 0.0
      %v2472 = vmax.f32 %v2362, 0.0
      %v2473 = vmax.f32 %v2367, 0.0
      %v2474 = vmax.f32 %v2372, 0.0
      %v2475 = vmax.f32 %v2377, 0.0
      %v2476 = vmax.f32 %v2382, 0.0
      %v2477 = vmax.f32 %v2387, 0.0
      %v2478 = vmax.f32 %v2392, 0.0
      %v2479 = vmax.f32 %v2397, 0.0
      %v2480 = vmax.f32 %v2402, 0.0
      %v2481 = vmax.f32 %v2407, 0.0
      %v2482 = vmax.f32 %v2412, 0.0
      %v2483 = vmax.f32 %v2417, 0.0
      %v2484 = vmax.f32 %v2422, 0.0
      %v2485 = vmax.f32 %v2427, 0.0
      %v2486 = vmax.f32 %v2432, 0.0
      %v2487 = vmax.f32 %v2437, 0.0
      %v2488 = vmax.f32 %v2442, 0.0
      %v2489 = vmax.f32 %v2447, 0.0
      %v2490 = vmax.f32 %v2452, 0.0
      %v2491 = vmax.f32 %v2457, 0.0
      %v2492 = vld [vmem:[%s7] sm:$0x3]
      %v2494 = vlaneseq
      %v2495 = vshrl.u32 %v2494, 7
      %v2496 = vsub.s32 0, %v2495
      %v2497 = vrot.slane %v2492, %v2496
      %v2498 = vlaneseq
      %v2499 = vshrl.u32 %v2498, 7
      %v2500 = vsub.s32 1, %v2499
      %v2501 = vrot.slane %v2492, %v2500
      %2504 = vmatprep.subr.mxu0 0.0
      %2505 = vmatpush1.msra.mxu0 %v2475
      %2506 = vmatprep.subr.mxu0 0.0
      %2507 = vmatpush1.msra.mxu0 %v2474
      %2508 = vmatprep.subr.mxu0 0.0
      %2509 = vmatpush1.msra.mxu0 %v2473
      %2510 = vmatprep.subr.mxu0 0.0
      %2511 = vmatpush1.msra.mxu0 %v2472
      %2512 = vmatprep.subr.mxu0 0.0
      %2513 = vmatpush1.msra.mxu0 %v2471
      %2514 = vmatprep.subr.mxu0 0.0
      %2515 = vmatpush1.msra.mxu0 %v2470
      %2516 = vmatprep.subr.mxu0 0.0
      %2517 = vmatpush1.msra.mxu0 %v2469
      %2518 = vmatprep.subr.mxu0 0.0
      %2519 = vmatpush1.msra.mxu0 %v2468
      %2520 = vmatprep.subr.mxu0 0.0
      %2521 = vmatpush1.msra.mxu0 %v2467
      %2522 = vmatprep.subr.mxu0 0.0
      %2523 = vmatpush1.msra.mxu0 %v2466
      %2524 = vmatprep.subr.mxu0 0.0
      %2525 = vmatpush1.msra.mxu0 %v2465
      %2526 = vmatprep.subr.mxu0 0.0
      %2527 = vmatpush1.msra.mxu0 %v2464
      %2528 = vmatprep.subr.mxu0 0.0
      %2529 = vmatpush1.msra.mxu0 %v2463
      %2530 = vmatprep.subr.mxu0 0.0
      %2531 = vmatpush1.msra.mxu0 %v2462
      %2532 = vmatprep.subr.mxu0 0.0
      %2533 = vmatpush1.msra.mxu0 %v2461
      %2534 = vmatprep.subr.mxu0 0.0
      %2535 = vmatpush1.msra.mxu0 %v2460
      %2536 = vmatprep.subr.mxu0 0.0
      %2537 = vmatpush2.msra.mxu0 %v2491
      %2538 = vmatprep.subr.mxu0 0.0
      %2539 = vmatpush2.msra.mxu0 %v2490
      %2540 = vmatprep.subr.mxu0 0.0
      %2541 = vmatpush2.msra.mxu0 %v2489
      %2542 = vmatprep.subr.mxu0 0.0
      %2543 = vmatpush2.msra.mxu0 %v2488
      %2544 = vmatprep.subr.mxu0 0.0
      %2545 = vmatpush2.msra.mxu0 %v2487
      %2546 = vmatprep.subr.mxu0 0.0
      %2547 = vmatpush2.msra.mxu0 %v2486
      %2548 = vmatprep.subr.mxu0 0.0
      %2549 = vmatpush2.msra.mxu0 %v2485
      %2550 = vmatprep.subr.mxu0 0.0
      %2551 = vmatpush2.msra.mxu0 %v2484
      %2552 = vmatprep.subr.mxu0 0.0
      %2553 = vmatpush2.msra.mxu0 %v2483
      %2554 = vmatprep.subr.mxu0 0.0
      %2555 = vmatpush2.msra.mxu0 %v2482
      %2556 = vmatprep.subr.mxu0 0.0
      %2557 = vmatpush2.msra.mxu0 %v2481
      %2558 = vmatprep.subr.mxu0 0.0
      %2559 = vmatpush2.msra.mxu0 %v2480
      %2560 = vmatprep.subr.mxu0 0.0
      %2561 = vmatpush2.msra.mxu0 %v2479
      %2562 = vmatprep.subr.mxu0 0.0
      %2563 = vmatpush2.msra.mxu0 %v2478
      %2564 = vmatprep.subr.mxu0 0.0
      %2565 = vmatpush2.msra.mxu0 %v2477
      %2566 = vmatprep.subr.mxu0 0.0
      %2567 = vmatpush2.msra.mxu0 %v2476
      %2568 = vmatprep.mubr.f32.mxu0 %v2501
      %2569 = vmatmul.mubr.f32.gmra.mxu0 %v2497
      %v2570 = vpop.f32.mrf.mxu0
      %v2571 = vadd.f32 0.0, %v2570
      %v2572 = vpop.f32.mrf.mxu0
      %2573 = vdwg.mxu0
      %v2574 = vld [vmem:[%s6] sm:$0xff]
      %v2575 = vld [vmem:[%s8] sm:$0x1]
      %v2577 = vsel %vm360, %v2571, 0
      %2579 = vmatprep.subr.mxu0 0.0
      %2580 = vmatpush1.msra.mxu0 0.0
      %2581 = vmatprep.subr.mxu0 0.0
      %2582 = vmatpush1.msra.mxu0 0.0
      %2583 = vmatprep.subr.mxu0 0.0
      %2584 = vmatpush1.msra.mxu0 0.0
      %2585 = vmatprep.subr.mxu0 0.0
      %2586 = vmatpush1.msra.mxu0 0.0
      %2587 = vmatprep.subr.mxu0 0.0
      %2588 = vmatpush1.msra.mxu0 0.0
      %2589 = vmatprep.subr.mxu0 0.0
      %2590 = vmatpush1.msra.mxu0 0.0
      %2591 = vmatprep.subr.mxu0 0.0
      %2592 = vmatpush1.msra.mxu0 0.0
      %2593 = vmatprep.subr.mxu0 0.0
      %2594 = vmatpush1.msra.mxu0 0.0
      %2595 = vmatprep.subr.mxu0 0.0
      %2596 = vmatpush1.msra.mxu0 0.0
      %2597 = vmatprep.subr.mxu0 0.0
      %2598 = vmatpush1.msra.mxu0 0.0
      %2599 = vmatprep.subr.mxu0 0.0
      %2600 = vmatpush1.msra.mxu0 0.0
      %2601 = vmatprep.subr.mxu0 0.0
      %2602 = vmatpush1.msra.mxu0 0.0
      %2603 = vmatprep.subr.mxu0 0.0
      %2604 = vmatpush1.msra.mxu0 0.0
      %2605 = vmatprep.subr.mxu0 0.0
      %2606 = vmatpush1.msra.mxu0 0.0
      %2607 = vmatprep.subr.mxu0 0.0
      %2608 = vmatpush1.msra.mxu0 0.0
      %2609 = vmatprep.subr.mxu0 0.0
      %2610 = vmatpush1.msra.mxu0 %v2574
      %2611 = vmatprep.subr.mxu0 0.0
      %2612 = vmatpush2.msra.mxu0 0.0
      %2613 = vmatprep.subr.mxu0 0.0
      %2614 = vmatpush2.msra.mxu0 0.0
      %2615 = vmatprep.subr.mxu0 0.0
      %2616 = vmatpush2.msra.mxu0 0.0
      %2617 = vmatprep.subr.mxu0 0.0
      %2618 = vmatpush2.msra.mxu0 0.0
      %2619 = vmatprep.subr.mxu0 0.0
      %2620 = vmatpush2.msra.mxu0 0.0
      %2621 = vmatprep.subr.mxu0 0.0
      %2622 = vmatpush2.msra.mxu0 0.0
      %2623 = vmatprep.subr.mxu0 0.0
      %2624 = vmatpush2.msra.mxu0 0.0
      %2625 = vmatprep.subr.mxu0 0.0
      %2626 = vmatpush2.msra.mxu0 0.0
      %2627 = vmatprep.subr.mxu0 0.0
      %2628 = vmatpush2.msra.mxu0 0.0
      %2629 = vmatprep.subr.mxu0 0.0
      %2630 = vmatpush2.msra.mxu0 0.0
      %2631 = vmatprep.subr.mxu0 0.0
      %2632 = vmatpush2.msra.mxu0 0.0
      %2633 = vmatprep.subr.mxu0 0.0
      %2634 = vmatpush2.msra.mxu0 0.0
      %2635 = vmatprep.subr.mxu0 0.0
      %2636 = vmatpush2.msra.mxu0 0.0
      %2637 = vmatprep.subr.mxu0 0.0
      %2638 = vmatpush2.msra.mxu0 0.0
      %2639 = vmatprep.subr.mxu0 0.0
      %2640 = vmatpush2.msra.mxu0 0.0
      %2641 = vmatprep.subr.mxu0 0.0
      %2642 = vmatpush2.msra.mxu0 0.0
      %2643 = vmatprep.mubr.f32.mxu0 0.0
      %2644 = vmatmul.mubr.f32.gmra.mxu0 %v2577
      %v2645 = vpop.f32.mrf.mxu0
      %v2646 = vadd.f32 %v2575, %v2645
      %v2647 = vpop.f32.mrf.mxu0
      %2648 = vdwg.mxu0
      %2649 = vst.msk [vmem:[%s448 + $0x1] sm:$0xff] %vm360, %v2460
      %2650 = vst.msk [vmem:[%s448 + $0x9] sm:$0xff] %vm360, %v2461
      %2651 = vst.msk [vmem:[%s448 + $0x19] sm:$0xff] %vm360, %v2462
      %2652 = vst.msk [vmem:[%s448 + $0x21] sm:$0xff] %vm360, %v2463
      %2653 = vst.msk [vmem:[%s448 + $0x31] sm:$0xff] %vm360, %v2464
      %2654 = vst.msk [vmem:[%s448 + $0x39] sm:$0xff] %vm360, %v2465
      %2655 = vst.msk [vmem:[%s448 + $0x49] sm:$0xff] %vm360, %v2466
      %2656 = vst.msk [vmem:[%s448 + $0x51] sm:$0xff] %vm360, %v2467
      %2657 = vst.msk [vmem:[%s448 + $0x61] sm:$0xff] %vm360, %v2468
      %2658 = vst.msk [vmem:[%s448 + $0x69] sm:$0xff] %vm360, %v2469
      %2659 = vst.msk [vmem:[%s448 + $0x79] sm:$0xff] %vm360, %v2470
      %2660 = vst.msk [vmem:[%s448 + $0x81] sm:$0xff] %vm360, %v2471
      %2661 = vst.msk [vmem:[%s448 + $0x91] sm:$0xff] %vm360, %v2472
      %2662 = vst.msk [vmem:[%s448 + $0x99] sm:$0xff] %vm360, %v2473
      %2663 = vst.msk [vmem:[%s448 + $0xa9] sm:$0xff] %vm360, %v2474
      %2664 = vst.msk [vmem:[%s448 + $0xb1] sm:$0xff] %vm360, %v2475
      %2665 = vst.msk [vmem:[%s448 + $0xc1] sm:$0xff] %vm360, %v2476
      %2666 = vst.msk [vmem:[%s448 + $0xc9] sm:$0xff] %vm360, %v2477
      %2667 = vst.msk [vmem:[%s448 + $0xd9] sm:$0xff] %vm360, %v2478
      %2668 = vst.msk [vmem:[%s448 + $0xe1] sm:$0xff] %vm360, %v2479
      %2669 = vst.msk [vmem:[%s448 + $0xf1] sm:$0xff] %vm360, %v2480
      %2670 = vst.msk [vmem:[%s448 + $0xf9] sm:$0xff] %vm360, %v2481
      %2671 = vst.msk [vmem:[%s448 + $0x109] sm:$0xff] %vm360, %v2482
      %2672 = vst.msk [vmem:[%s448 + $0x111] sm:$0xff] %vm360, %v2483
      %2673 = vst.msk [vmem:[%s448 + $0x121] sm:$0xff] %vm360, %v2484
      %2674 = vst.msk [vmem:[%s448 + $0x129] sm:$0xff] %vm360, %v2485
      %2675 = vst.msk [vmem:[%s448 + $0x139] sm:$0xff] %vm360, %v2486
      %2676 = vst.msk [vmem:[%s448 + $0x141] sm:$0xff] %vm360, %v2487
      %2677 = vst.msk [vmem:[%s448 + $0x151] sm:$0xff] %vm360, %v2488
      %2678 = vst.msk [vmem:[%s448 + $0x159] sm:$0xff] %vm360, %v2489
      %2679 = vst.msk [vmem:[%s448 + $0x169] sm:$0xff] %vm360, %v2490
      %2680 = vst.msk [vmem:[%s448 + $0x171] sm:$0xff] %vm360, %v2491
      %v2681 = vld [vmem:[#allocation2] sm:$0xff]
      %v2682 = vld [vmem:[#allocation2 + $0x8] sm:$0xff]
      %v2683 = vld [vmem:[#allocation2 + $0x18] sm:$0xff]
      %v2684 = vld [vmem:[#allocation2 + $0x20] sm:$0xff]
      %v2685 = vld [vmem:[#allocation2 + $0x30] sm:$0xff]
      %v2686 = vld [vmem:[#allocation2 + $0x38] sm:$0xff]
      %v2687 = vld [vmem:[#allocation2 + $0x48] sm:$0xff]
      %v2688 = vld [vmem:[#allocation2 + $0x50] sm:$0xff]
      %v2689 = vld [vmem:[#allocation2 + $0x60] sm:$0xff]
      %v2690 = vld [vmem:[#allocation2 + $0x68] sm:$0xff]
      %v2691 = vld [vmem:[#allocation2 + $0x78] sm:$0xff]
      %v2692 = vld [vmem:[#allocation2 + $0x80] sm:$0xff]
      %v2693 = vld [vmem:[#allocation2 + $0x90] sm:$0xff]
      %v2694 = vld [vmem:[#allocation2 + $0x98] sm:$0xff]
      %v2695 = vld [vmem:[#allocation2 + $0xa8] sm:$0xff]
      %v2696 = vld [vmem:[#allocation2 + $0xb0] sm:$0xff]
      %v2697 = vld [vmem:[#allocation2 + $0xc0] sm:$0xff]
      %v2698 = vld [vmem:[#allocation2 + $0xc8] sm:$0xff]
      %v2699 = vld [vmem:[#allocation2 + $0xd8] sm:$0xff]
      %v2700 = vld [vmem:[#allocation2 + $0xe0] sm:$0xff]
      %v2701 = vld [vmem:[#allocation2 + $0xf0] sm:$0xff]
      %v2702 = vld [vmem:[#allocation2 + $0xf8] sm:$0xff]
      %v2703 = vld [vmem:[#allocation2 + $0x108] sm:$0xff]
      %v2704 = vld [vmem:[#allocation2 + $0x110] sm:$0xff]
      %v2705 = vld [vmem:[#allocation2 + $0x120] sm:$0xff]
      %v2706 = vld [vmem:[#allocation2 + $0x128] sm:$0xff]
      %v2707 = vld [vmem:[#allocation2 + $0x138] sm:$0xff]
      %v2708 = vld [vmem:[#allocation2 + $0x140] sm:$0xff]
      %v2709 = vld [vmem:[#allocation2 + $0x150] sm:$0xff]
      %v2710 = vld [vmem:[#allocation2 + $0x158] sm:$0xff]
      %v2711 = vld [vmem:[#allocation2 + $0x168] sm:$0xff]
      %v2712 = vld [vmem:[#allocation2 + $0x170] sm:$0xff]
      %2713 = vst.msk [vmem:[#allocation3] sm:$0xff] %vm360, %v2681
      %2714 = vst.msk [vmem:[#allocation3 + $0x8] sm:$0xff] %vm360, %v2682
      %2715 = vst.msk [vmem:[#allocation3 + $0x10] sm:$0xff] %vm360, %v2683
      %2716 = vst.msk [vmem:[#allocation3 + $0x18] sm:$0xff] %vm360, %v2684
      %2717 = vst.msk [vmem:[#allocation3 + $0x20] sm:$0xff] %vm360, %v2685
      %2718 = vst.msk [vmem:[#allocation3 + $0x28] sm:$0xff] %vm360, %v2686
      %2719 = vst.msk [vmem:[#allocation3 + $0x30] sm:$0xff] %vm360, %v2687
      %2720 = vst.msk [vmem:[#allocation3 + $0x38] sm:$0xff] %vm360, %v2688
      %2721 = vst.msk [vmem:[#allocation3 + $0x40] sm:$0xff] %vm360, %v2689
      %2722 = vst.msk [vmem:[#allocation3 + $0x48] sm:$0xff] %vm360, %v2690
      %2723 = vst.msk [vmem:[#allocation3 + $0x50] sm:$0xff] %vm360, %v2691
      %2724 = vst.msk [vmem:[#allocation3 + $0x58] sm:$0xff] %vm360, %v2692
      %2725 = vst.msk [vmem:[#allocation3 + $0x60] sm:$0xff] %vm360, %v2693
      %2726 = vst.msk [vmem:[#allocation3 + $0x68] sm:$0xff] %vm360, %v2694
      %2727 = vst.msk [vmem:[#allocation3 + $0x70] sm:$0xff] %vm360, %v2695
      %2728 = vst.msk [vmem:[#allocation3 + $0x78] sm:$0xff] %vm360, %v2696
      %2729 = vst.msk [vmem:[#allocation3 + $0x80] sm:$0xff] %vm360, %v2697
      %2730 = vst.msk [vmem:[#allocation3 + $0x88] sm:$0xff] %vm360, %v2698
      %2731 = vst.msk [vmem:[#allocation3 + $0x90] sm:$0xff] %vm360, %v2699
      %2732 = vst.msk [vmem:[#allocation3 + $0x98] sm:$0xff] %vm360, %v2700
      %2733 = vst.msk [vmem:[#allocation3 + $0xa0] sm:$0xff] %vm360, %v2701
      %2734 = vst.msk [vmem:[#allocation3 + $0xa8] sm:$0xff] %vm360, %v2702
      %2735 = vst.msk [vmem:[#allocation3 + $0xb0] sm:$0xff] %vm360, %v2703
      %2736 = vst.msk [vmem:[#allocation3 + $0xb8] sm:$0xff] %vm360, %v2704
      %2737 = vst.msk [vmem:[#allocation3 + $0xc0] sm:$0xff] %vm360, %v2705
      %2738 = vst.msk [vmem:[#allocation3 + $0xc8] sm:$0xff] %vm360, %v2706
      %2739 = vst.msk [vmem:[#allocation3 + $0xd0] sm:$0xff] %vm360, %v2707
      %2740 = vst.msk [vmem:[#allocation3 + $0xd8] sm:$0xff] %vm360, %v2708
      %2741 = vst.msk [vmem:[#allocation3 + $0xe0] sm:$0xff] %vm360, %v2709
      %2742 = vst.msk [vmem:[#allocation3 + $0xe8] sm:$0xff] %vm360, %v2710
      %2743 = vst.msk [vmem:[#allocation3 + $0xf0] sm:$0xff] %vm360, %v2711
      %2744 = vst.msk [vmem:[#allocation3 + $0xf8] sm:$0xff] %vm360, %v2712
      %v2745 = vld [vmem:[#allocation2 + $0x1] sm:$0xff]
      %v2746 = vld [vmem:[#allocation2 + $0x9] sm:$0xff]
      %v2747 = vld [vmem:[#allocation2 + $0x19] sm:$0xff]
      %v2748 = vld [vmem:[#allocation2 + $0x21] sm:$0xff]
      %v2749 = vld [vmem:[#allocation2 + $0x31] sm:$0xff]
      %v2750 = vld [vmem:[#allocation2 + $0x39] sm:$0xff]
      %v2751 = vld [vmem:[#allocation2 + $0x49] sm:$0xff]
      %v2752 = vld [vmem:[#allocation2 + $0x51] sm:$0xff]
      %v2753 = vld [vmem:[#allocation2 + $0x61] sm:$0xff]
      %v2754 = vld [vmem:[#allocation2 + $0x69] sm:$0xff]
      %v2755 = vld [vmem:[#allocation2 + $0x79] sm:$0xff]
      %v2756 = vld [vmem:[#allocation2 + $0x81] sm:$0xff]
      %v2757 = vld [vmem:[#allocation2 + $0x91] sm:$0xff]
      %v2758 = vld [vmem:[#allocation2 + $0x99] sm:$0xff]
      %v2759 = vld [vmem:[#allocation2 + $0xa9] sm:$0xff]
      %v2760 = vld [vmem:[#allocation2 + $0xb1] sm:$0xff]
      %v2761 = vld [vmem:[#allocation2 + $0xc1] sm:$0xff]
      %v2762 = vld [vmem:[#allocation2 + $0xc9] sm:$0xff]
      %v2763 = vld [vmem:[#allocation2 + $0xd9] sm:$0xff]
      %v2764 = vld [vmem:[#allocation2 + $0xe1] sm:$0xff]
      %v2765 = vld [vmem:[#allocation2 + $0xf1] sm:$0xff]
      %v2766 = vld [vmem:[#allocation2 + $0xf9] sm:$0xff]
      %v2767 = vld [vmem:[#allocation2 + $0x109] sm:$0xff]
      %v2768 = vld [vmem:[#allocation2 + $0x111] sm:$0xff]
      %v2769 = vld [vmem:[#allocation2 + $0x121] sm:$0xff]
      %v2770 = vld [vmem:[#allocation2 + $0x129] sm:$0xff]
      %v2771 = vld [vmem:[#allocation2 + $0x139] sm:$0xff]
      %v2772 = vld [vmem:[#allocation2 + $0x141] sm:$0xff]
      %v2773 = vld [vmem:[#allocation2 + $0x151] sm:$0xff]
      %v2774 = vld [vmem:[#allocation2 + $0x159] sm:$0xff]
      %v2775 = vld [vmem:[#allocation2 + $0x169] sm:$0xff]
      %v2776 = vld [vmem:[#allocation2 + $0x171] sm:$0xff]
      %2809 = vrot.lane.b32.xlu0 %v2745, 8
      %v2810 = vpop.permute.xlu0 %2809
      %2811 = vrot.lane.b32.xlu0 %v2746, 8
      %v2812 = vpop.permute.xlu0 %2811
      %2813 = vrot.lane.b32.xlu0 %v2747, 8
      %v2814 = vpop.permute.xlu0 %2813
      %2815 = vrot.lane.b32.xlu0 %v2748, 8
      %v2816 = vpop.permute.xlu0 %2815
      %2817 = vrot.lane.b32.xlu0 %v2749, 8
      %v2818 = vpop.permute.xlu0 %2817
      %2819 = vrot.lane.b32.xlu0 %v2750, 8
      %v2820 = vpop.permute.xlu0 %2819
      %2821 = vrot.lane.b32.xlu0 %v2751, 8
      %v2822 = vpop.permute.xlu0 %2821
      %2823 = vrot.lane.b32.xlu0 %v2752, 8
      %v2824 = vpop.permute.xlu0 %2823
      %2825 = vrot.lane.b32.xlu0 %v2753, 8
      %v2826 = vpop.permute.xlu0 %2825
      %2827 = vrot.lane.b32.xlu0 %v2754, 8
      %v2828 = vpop.permute.xlu0 %2827
      %2829 = vrot.lane.b32.xlu0 %v2755, 8
      %v2830 = vpop.permute.xlu0 %2829
      %2831 = vrot.lane.b32.xlu0 %v2756, 8
      %v2832 = vpop.permute.xlu0 %2831
      %2833 = vrot.lane.b32.xlu0 %v2757, 8
      %v2834 = vpop.permute.xlu0 %2833
      %2835 = vrot.lane.b32.xlu0 %v2758, 8
      %v2836 = vpop.permute.xlu0 %2835
      %2837 = vrot.lane.b32.xlu0 %v2759, 8
      %v2838 = vpop.permute.xlu0 %2837
      %2839 = vrot.lane.b32.xlu0 %v2760, 8
      %v2840 = vpop.permute.xlu0 %2839
      %2841 = vrot.lane.b32.xlu0 %v2761, 8
      %v2842 = vpop.permute.xlu0 %2841
      %2843 = vrot.lane.b32.xlu0 %v2762, 8
      %v2844 = vpop.permute.xlu0 %2843
      %2845 = vrot.lane.b32.xlu0 %v2763, 8
      %v2846 = vpop.permute.xlu0 %2845
      %2847 = vrot.lane.b32.xlu0 %v2764, 8
      %v2848 = vpop.permute.xlu0 %2847
      %2849 = vrot.lane.b32.xlu0 %v2765, 8
      %v2850 = vpop.permute.xlu0 %2849
      %2851 = vrot.lane.b32.xlu0 %v2766, 8
      %v2852 = vpop.permute.xlu0 %2851
      %2853 = vrot.lane.b32.xlu0 %v2767, 8
      %v2854 = vpop.permute.xlu0 %2853
      %2855 = vrot.lane.b32.xlu0 %v2768, 8
      %v2856 = vpop.permute.xlu0 %2855
      %2857 = vrot.lane.b32.xlu0 %v2769, 8
      %v2858 = vpop.permute.xlu0 %2857
      %2859 = vrot.lane.b32.xlu0 %v2770, 8
      %v2860 = vpop.permute.xlu0 %2859
      %2861 = vrot.lane.b32.xlu0 %v2771, 8
      %v2862 = vpop.permute.xlu0 %2861
      %2863 = vrot.lane.b32.xlu0 %v2772, 8
      %v2864 = vpop.permute.xlu0 %2863
      %2865 = vrot.lane.b32.xlu0 %v2773, 8
      %v2866 = vpop.permute.xlu0 %2865
      %2867 = vrot.lane.b32.xlu0 %v2774, 8
      %v2868 = vpop.permute.xlu0 %2867
      %2869 = vrot.lane.b32.xlu0 %v2775, 8
      %v2870 = vpop.permute.xlu0 %2869
      %2871 = vrot.lane.b32.xlu0 %v2776, 8
      %v2872 = vpop.permute.xlu0 %2871
      %2905 = vst.msk [vmem:[#allocation3] sm:$0xff] %vm705, %v2810
      %2906 = vst.msk [vmem:[#allocation3 + $0x8] sm:$0xff] %vm705, %v2812
      %2907 = vst.msk [vmem:[#allocation3 + $0x10] sm:$0xff] %vm705, %v2814
      %2908 = vst.msk [vmem:[#allocation3 + $0x18] sm:$0xff] %vm705, %v2816
      %2909 = vst.msk [vmem:[#allocation3 + $0x20] sm:$0xff] %vm705, %v2818
      %2910 = vst.msk [vmem:[#allocation3 + $0x28] sm:$0xff] %vm705, %v2820
      %2911 = vst.msk [vmem:[#allocation3 + $0x30] sm:$0xff] %vm705, %v2822
      %2912 = vst.msk [vmem:[#allocation3 + $0x38] sm:$0xff] %vm705, %v2824
      %2913 = vst.msk [vmem:[#allocation3 + $0x40] sm:$0xff] %vm705, %v2826
      %2914 = vst.msk [vmem:[#allocation3 + $0x48] sm:$0xff] %vm705, %v2828
      %2915 = vst.msk [vmem:[#allocation3 + $0x50] sm:$0xff] %vm705, %v2830
      %2916 = vst.msk [vmem:[#allocation3 + $0x58] sm:$0xff] %vm705, %v2832
      %2917 = vst.msk [vmem:[#allocation3 + $0x60] sm:$0xff] %vm705, %v2834
      %2918 = vst.msk [vmem:[#allocation3 + $0x68] sm:$0xff] %vm705, %v2836
      %2919 = vst.msk [vmem:[#allocation3 + $0x70] sm:$0xff] %vm705, %v2838
      %2920 = vst.msk [vmem:[#allocation3 + $0x78] sm:$0xff] %vm705, %v2840
      %2921 = vst.msk [vmem:[#allocation3 + $0x80] sm:$0xff] %vm705, %v2842
      %2922 = vst.msk [vmem:[#allocation3 + $0x88] sm:$0xff] %vm705, %v2844
      %2923 = vst.msk [vmem:[#allocation3 + $0x90] sm:$0xff] %vm705, %v2846
      %2924 = vst.msk [vmem:[#allocation3 + $0x98] sm:$0xff] %vm705, %v2848
      %2925 = vst.msk [vmem:[#allocation3 + $0xa0] sm:$0xff] %vm705, %v2850
      %2926 = vst.msk [vmem:[#allocation3 + $0xa8] sm:$0xff] %vm705, %v2852
      %2927 = vst.msk [vmem:[#allocation3 + $0xb0] sm:$0xff] %vm705, %v2854
      %2928 = vst.msk [vmem:[#allocation3 + $0xb8] sm:$0xff] %vm705, %v2856
      %2929 = vst.msk [vmem:[#allocation3 + $0xc0] sm:$0xff] %vm705, %v2858
      %2930 = vst.msk [vmem:[#allocation3 + $0xc8] sm:$0xff] %vm705, %v2860
      %2931 = vst.msk [vmem:[#allocation3 + $0xd0] sm:$0xff] %vm705, %v2862
      %2932 = vst.msk [vmem:[#allocation3 + $0xd8] sm:$0xff] %vm705, %v2864
      %2933 = vst.msk [vmem:[#allocation3 + $0xe0] sm:$0xff] %vm705, %v2866
      %2934 = vst.msk [vmem:[#allocation3 + $0xe8] sm:$0xff] %vm705, %v2868
      %2935 = vst.msk [vmem:[#allocation3 + $0xf0] sm:$0xff] %vm705, %v2870
      %2936 = vst.msk [vmem:[#allocation3 + $0xf8] sm:$0xff] %vm705, %v2872
      %v2937 = vld [vmem:[#allocation2 + $0x2] sm:$0xff]
      %v2938 = vld [vmem:[#allocation2 + $0xa] sm:$0xff]
      %v2939 = vld [vmem:[#allocation2 + $0x1a] sm:$0xff]
      %v2940 = vld [vmem:[#allocation2 + $0x22] sm:$0xff]
      %v2941 = vld [vmem:[#allocation2 + $0x32] sm:$0xff]
      %v2942 = vld [vmem:[#allocation2 + $0x3a] sm:$0xff]
      %v2943 = vld [vmem:[#allocation2 + $0x4a] sm:$0xff]
      %v2944 = vld [vmem:[#allocation2 + $0x52] sm:$0xff]
      %v2945 = vld [vmem:[#allocation2 + $0x62] sm:$0xff]
      %v2946 = vld [vmem:[#allocation2 + $0x6a] sm:$0xff]
      %v2947 = vld [vmem:[#allocation2 + $0x7a] sm:$0xff]
      %v2948 = vld [vmem:[#allocation2 + $0x82] sm:$0xff]
      %v2949 = vld [vmem:[#allocation2 + $0x92] sm:$0xff]
      %v2950 = vld [vmem:[#allocation2 + $0x9a] sm:$0xff]
      %v2951 = vld [vmem:[#allocation2 + $0xaa] sm:$0xff]
      %v2952 = vld [vmem:[#allocation2 + $0xb2] sm:$0xff]
      %v2953 = vld [vmem:[#allocation2 + $0xc2] sm:$0xff]
      %v2954 = vld [vmem:[#allocation2 + $0xca] sm:$0xff]
      %v2955 = vld [vmem:[#allocation2 + $0xda] sm:$0xff]
      %v2956 = vld [vmem:[#allocation2 + $0xe2] sm:$0xff]
      %v2957 = vld [vmem:[#allocation2 + $0xf2] sm:$0xff]
      %v2958 = vld [vmem:[#allocation2 + $0xfa] sm:$0xff]
      %v2959 = vld [vmem:[#allocation2 + $0x10a] sm:$0xff]
      %v2960 = vld [vmem:[#allocation2 + $0x112] sm:$0xff]
      %v2961 = vld [vmem:[#allocation2 + $0x122] sm:$0xff]
      %v2962 = vld [vmem:[#allocation2 + $0x12a] sm:$0xff]
      %v2963 = vld [vmem:[#allocation2 + $0x13a] sm:$0xff]
      %v2964 = vld [vmem:[#allocation2 + $0x142] sm:$0xff]
      %v2965 = vld [vmem:[#allocation2 + $0x152] sm:$0xff]
      %v2966 = vld [vmem:[#allocation2 + $0x15a] sm:$0xff]
      %v2967 = vld [vmem:[#allocation2 + $0x16a] sm:$0xff]
      %v2968 = vld [vmem:[#allocation2 + $0x172] sm:$0xff]
      %3001 = vrot.lane.b32.xlu0 %v2937, 16
      %v3002 = vpop.permute.xlu0 %3001
      %3003 = vrot.lane.b32.xlu0 %v2938, 16
      %v3004 = vpop.permute.xlu0 %3003
      %3005 = vrot.lane.b32.xlu0 %v2939, 16
      %v3006 = vpop.permute.xlu0 %3005
      %3007 = vrot.lane.b32.xlu0 %v2940, 16
      %v3008 = vpop.permute.xlu0 %3007
      %3009 = vrot.lane.b32.xlu0 %v2941, 16
      %v3010 = vpop.permute.xlu0 %3009
      %3011 = vrot.lane.b32.xlu0 %v2942, 16
      %v3012 = vpop.permute.xlu0 %3011
      %3013 = vrot.lane.b32.xlu0 %v2943, 16
      %v3014 = vpop.permute.xlu0 %3013
      %3015 = vrot.lane.b32.xlu0 %v2944, 16
      %v3016 = vpop.permute.xlu0 %3015
      %3017 = vrot.lane.b32.xlu0 %v2945, 16
      %v3018 = vpop.permute.xlu0 %3017
      %3019 = vrot.lane.b32.xlu0 %v2946, 16
      %v3020 = vpop.permute.xlu0 %3019
      %3021 = vrot.lane.b32.xlu0 %v2947, 16
      %v3022 = vpop.permute.xlu0 %3021
      %3023 = vrot.lane.b32.xlu0 %v2948, 16
      %v3024 = vpop.permute.xlu0 %3023
      %3025 = vrot.lane.b32.xlu0 %v2949, 16
      %v3026 = vpop.permute.xlu0 %3025
      %3027 = vrot.lane.b32.xlu0 %v2950, 16
      %v3028 = vpop.permute.xlu0 %3027
      %3029 = vrot.lane.b32.xlu0 %v2951, 16
      %v3030 = vpop.permute.xlu0 %3029
      %3031 = vrot.lane.b32.xlu0 %v2952, 16
      %v3032 = vpop.permute.xlu0 %3031
      %3033 = vrot.lane.b32.xlu0 %v2953, 16
      %v3034 = vpop.permute.xlu0 %3033
      %3035 = vrot.lane.b32.xlu0 %v2954, 16
      %v3036 = vpop.permute.xlu0 %3035
      %3037 = vrot.lane.b32.xlu0 %v2955, 16
      %v3038 = vpop.permute.xlu0 %3037
      %3039 = vrot.lane.b32.xlu0 %v2956, 16
      %v3040 = vpop.permute.xlu0 %3039
      %3041 = vrot.lane.b32.xlu0 %v2957, 16
      %v3042 = vpop.permute.xlu0 %3041
      %3043 = vrot.lane.b32.xlu0 %v2958, 16
      %v3044 = vpop.permute.xlu0 %3043
      %3045 = vrot.lane.b32.xlu0 %v2959, 16
      %v3046 = vpop.permute.xlu0 %3045
      %3047 = vrot.lane.b32.xlu0 %v2960, 16
      %v3048 = vpop.permute.xlu0 %3047
      %3049 = vrot.lane.b32.xlu0 %v2961, 16
      %v3050 = vpop.permute.xlu0 %3049
      %3051 = vrot.lane.b32.xlu0 %v2962, 16
      %v3052 = vpop.permute.xlu0 %3051
      %3053 = vrot.lane.b32.xlu0 %v2963, 16
      %v3054 = vpop.permute.xlu0 %3053
      %3055 = vrot.lane.b32.xlu0 %v2964, 16
      %v3056 = vpop.permute.xlu0 %3055
      %3057 = vrot.lane.b32.xlu0 %v2965, 16
      %v3058 = vpop.permute.xlu0 %3057
      %3059 = vrot.lane.b32.xlu0 %v2966, 16
      %v3060 = vpop.permute.xlu0 %3059
      %3061 = vrot.lane.b32.xlu0 %v2967, 16
      %v3062 = vpop.permute.xlu0 %3061
      %3063 = vrot.lane.b32.xlu0 %v2968, 16
      %v3064 = vpop.permute.xlu0 %3063
      %3097 = vst.msk [vmem:[#allocation3] sm:$0xff] %vm898, %v3002
      %3098 = vst.msk [vmem:[#allocation3 + $0x8] sm:$0xff] %vm898, %v3004
      %3099 = vst.msk [vmem:[#allocation3 + $0x10] sm:$0xff] %vm898, %v3006
      %3100 = vst.msk [vmem:[#allocation3 + $0x18] sm:$0xff] %vm898, %v3008
      %3101 = vst.msk [vmem:[#allocation3 + $0x20] sm:$0xff] %vm898, %v3010
      %3102 = vst.msk [vmem:[#allocation3 + $0x28] sm:$0xff] %vm898, %v3012
      %3103 = vst.msk [vmem:[#allocation3 + $0x30] sm:$0xff] %vm898, %v3014
      %3104 = vst.msk [vmem:[#allocation3 + $0x38] sm:$0xff] %vm898, %v3016
      %3105 = vst.msk [vmem:[#allocation3 + $0x40] sm:$0xff] %vm898, %v3018
      %3106 = vst.msk [vmem:[#allocation3 + $0x48] sm:$0xff] %vm898, %v3020
      %3107 = vst.msk [vmem:[#allocation3 + $0x50] sm:$0xff] %vm898, %v3022
      %3108 = vst.msk [vmem:[#allocation3 + $0x58] sm:$0xff] %vm898, %v3024
      %3109 = vst.msk [vmem:[#allocation3 + $0x60] sm:$0xff] %vm898, %v3026
      %3110 = vst.msk [vmem:[#allocation3 + $0x68] sm:$0xff] %vm898, %v3028
      %3111 = vst.msk [vmem:[#allocation3 + $0x70] sm:$0xff] %vm898, %v3030
      %3112 = vst.msk [vmem:[#allocation3 + $0x78] sm:$0xff] %vm898, %v3032
      %3113 = vst.msk [vmem:[#allocation3 + $0x80] sm:$0xff] %vm898, %v3034
      %3114 = vst.msk [vmem:[#allocation3 + $0x88] sm:$0xff] %vm898, %v3036
      %3115 = vst.msk [vmem:[#allocation3 + $0x90] sm:$0xff] %vm898, %v3038
      %3116 = vst.msk [vmem:[#allocation3 + $0x98] sm:$0xff] %vm898, %v3040
      %3117 = vst.msk [vmem:[#allocation3 + $0xa0] sm:$0xff] %vm898, %v3042
      %3118 = vst.msk [vmem:[#allocation3 + $0xa8] sm:$0xff] %vm898, %v3044
      %3119 = vst.msk [vmem:[#allocation3 + $0xb0] sm:$0xff] %vm898, %v3046
      %3120 = vst.msk [vmem:[#allocation3 + $0xb8] sm:$0xff] %vm898, %v3048
      %3121 = vst.msk [vmem:[#allocation3 + $0xc0] sm:$0xff] %vm898, %v3050
      %3122 = vst.msk [vmem:[#allocation3 + $0xc8] sm:$0xff] %vm898, %v3052
      %3123 = vst.msk [vmem:[#allocation3 + $0xd0] sm:$0xff] %vm898, %v3054
      %3124 = vst.msk [vmem:[#allocation3 + $0xd8] sm:$0xff] %vm898, %v3056
      %3125 = vst.msk [vmem:[#allocation3 + $0xe0] sm:$0xff] %vm898, %v3058
      %3126 = vst.msk [vmem:[#allocation3 + $0xe8] sm:$0xff] %vm898, %v3060
      %3127 = vst.msk [vmem:[#allocation3 + $0xf0] sm:$0xff] %vm898, %v3062
      %3128 = vst.msk [vmem:[#allocation3 + $0xf8] sm:$0xff] %vm898, %v3064
      %v3129 = vld [vmem:[%s448] sm:$0xff]
      %v3130 = vld [vmem:[%s448 + $0x8] sm:$0xff]
      %v3131 = vld [vmem:[%s448 + $0x18] sm:$0xff]
      %v3132 = vld [vmem:[%s448 + $0x20] sm:$0xff]
      %v3133 = vld [vmem:[%s448 + $0x30] sm:$0xff]
      %v3134 = vld [vmem:[%s448 + $0x38] sm:$0xff]
      %v3135 = vld [vmem:[%s448 + $0x48] sm:$0xff]
      %v3136 = vld [vmem:[%s448 + $0x50] sm:$0xff]
      %v3137 = vld [vmem:[%s448 + $0x60] sm:$0xff]
      %v3138 = vld [vmem:[%s448 + $0x68] sm:$0xff]
      %v3139 = vld [vmem:[%s448 + $0x78] sm:$0xff]
      %v3140 = vld [vmem:[%s448 + $0x80] sm:$0xff]
      %v3141 = vld [vmem:[%s448 + $0x90] sm:$0xff]
      %v3142 = vld [vmem:[%s448 + $0x98] sm:$0xff]
      %v3143 = vld [vmem:[%s448 + $0xa8] sm:$0xff]
      %v3144 = vld [vmem:[%s448 + $0xb0] sm:$0xff]
      %v3145 = vld [vmem:[%s448 + $0xc0] sm:$0xff]
      %v3146 = vld [vmem:[%s448 + $0xc8] sm:$0xff]
      %v3147 = vld [vmem:[%s448 + $0xd8] sm:$0xff]
      %v3148 = vld [vmem:[%s448 + $0xe0] sm:$0xff]
      %v3149 = vld [vmem:[%s448 + $0xf0] sm:$0xff]
      %v3150 = vld [vmem:[%s448 + $0xf8] sm:$0xff]
      %v3151 = vld [vmem:[%s448 + $0x108] sm:$0xff]
      %v3152 = vld [vmem:[%s448 + $0x110] sm:$0xff]
      %v3153 = vld [vmem:[%s448 + $0x120] sm:$0xff]
      %v3154 = vld [vmem:[%s448 + $0x128] sm:$0xff]
      %v3155 = vld [vmem:[%s448 + $0x138] sm:$0xff]
      %v3156 = vld [vmem:[%s448 + $0x140] sm:$0xff]
      %v3157 = vld [vmem:[%s448 + $0x150] sm:$0xff]
      %v3158 = vld [vmem:[%s448 + $0x158] sm:$0xff]
      %v3159 = vld [vmem:[%s448 + $0x168] sm:$0xff]
      %v3160 = vld [vmem:[%s448 + $0x170] sm:$0xff]
      %3193 = vrot.lane.b32.xlu0 %v3129, 24
      %v3194 = vpop.permute.xlu0 %3193
      %3195 = vrot.lane.b32.xlu0 %v3130, 24
      %v3196 = vpop.permute.xlu0 %3195
      %3197 = vrot.lane.b32.xlu0 %v3131, 24
      %v3198 = vpop.permute.xlu0 %3197
      %3199 = vrot.lane.b32.xlu0 %v3132, 24
      %v3200 = vpop.permute.xlu0 %3199
      %3201 = vrot.lane.b32.xlu0 %v3133, 24
      %v3202 = vpop.permute.xlu0 %3201
      %3203 = vrot.lane.b32.xlu0 %v3134, 24
      %v3204 = vpop.permute.xlu0 %3203
      %3205 = vrot.lane.b32.xlu0 %v3135, 24
      %v3206 = vpop.permute.xlu0 %3205
      %3207 = vrot.lane.b32.xlu0 %v3136, 24
      %v3208 = vpop.permute.xlu0 %3207
      %3209 = vrot.lane.b32.xlu0 %v3137, 24
      %v3210 = vpop.permute.xlu0 %3209
      %3211 = vrot.lane.b32.xlu0 %v3138, 24
      %v3212 = vpop.permute.xlu0 %3211
      %3213 = vrot.lane.b32.xlu0 %v3139, 24
      %v3214 = vpop.permute.xlu0 %3213
      %3215 = vrot.lane.b32.xlu0 %v3140, 24
      %v3216 = vpop.permute.xlu0 %3215
      %3217 = vrot.lane.b32.xlu0 %v3141, 24
      %v3218 = vpop.permute.xlu0 %3217
      %3219 = vrot.lane.b32.xlu0 %v3142, 24
      %v3220 = vpop.permute.xlu0 %3219
      %3221 = vrot.lane.b32.xlu0 %v3143, 24
      %v3222 = vpop.permute.xlu0 %3221
      %3223 = vrot.lane.b32.xlu0 %v3144, 24
      %v3224 = vpop.permute.xlu0 %3223
      %3225 = vrot.lane.b32.xlu0 %v3145, 24
      %v3226 = vpop.permute.xlu0 %3225
      %3227 = vrot.lane.b32.xlu0 %v3146, 24
      %v3228 = vpop.permute.xlu0 %3227
      %3229 = vrot.lane.b32.xlu0 %v3147, 24
      %v3230 = vpop.permute.xlu0 %3229
      %3231 = vrot.lane.b32.xlu0 %v3148, 24
      %v3232 = vpop.permute.xlu0 %3231
      %3233 = vrot.lane.b32.xlu0 %v3149, 24
      %v3234 = vpop.permute.xlu0 %3233
      %3235 = vrot.lane.b32.xlu0 %v3150, 24
      %v3236 = vpop.permute.xlu0 %3235
      %3237 = vrot.lane.b32.xlu0 %v3151, 24
      %v3238 = vpop.permute.xlu0 %3237
      %3239 = vrot.lane.b32.xlu0 %v3152, 24
      %v3240 = vpop.permute.xlu0 %3239
      %3241 = vrot.lane.b32.xlu0 %v3153, 24
      %v3242 = vpop.permute.xlu0 %3241
      %3243 = vrot.lane.b32.xlu0 %v3154, 24
      %v3244 = vpop.permute.xlu0 %3243
      %3245 = vrot.lane.b32.xlu0 %v3155, 24
      %v3246 = vpop.permute.xlu0 %3245
      %3247 = vrot.lane.b32.xlu0 %v3156, 24
      %v3248 = vpop.permute.xlu0 %3247
      %3249 = vrot.lane.b32.xlu0 %v3157, 24
      %v3250 = vpop.permute.xlu0 %3249
      %3251 = vrot.lane.b32.xlu0 %v3158, 24
      %v3252 = vpop.permute.xlu0 %3251
      %3253 = vrot.lane.b32.xlu0 %v3159, 24
      %v3254 = vpop.permute.xlu0 %3253
      %3255 = vrot.lane.b32.xlu0 %v3160, 24
      %v3256 = vpop.permute.xlu0 %3255
      %3289 = vst.msk [vmem:[#allocation3] sm:$0xff] %vm1091, %v3194
      %3290 = vst.msk [vmem:[#allocation3 + $0x8] sm:$0xff] %vm1091, %v3196
      %3291 = vst.msk [vmem:[#allocation3 + $0x10] sm:$0xff] %vm1091, %v3198
      %3292 = vst.msk [vmem:[#allocation3 + $0x18] sm:$0xff] %vm1091, %v3200
      %3293 = vst.msk [vmem:[#allocation3 + $0x20] sm:$0xff] %vm1091, %v3202
      %3294 = vst.msk [vmem:[#allocation3 + $0x28] sm:$0xff] %vm1091, %v3204
      %3295 = vst.msk [vmem:[#allocation3 + $0x30] sm:$0xff] %vm1091, %v3206
      %3296 = vst.msk [vmem:[#allocation3 + $0x38] sm:$0xff] %vm1091, %v3208
      %3297 = vst.msk [vmem:[#allocation3 + $0x40] sm:$0xff] %vm1091, %v3210
      %3298 = vst.msk [vmem:[#allocation3 + $0x48] sm:$0xff] %vm1091, %v3212
      %3299 = vst.msk [vmem:[#allocation3 + $0x50] sm:$0xff] %vm1091, %v3214
      %3300 = vst.msk [vmem:[#allocation3 + $0x58] sm:$0xff] %vm1091, %v3216
      %3301 = vst.msk [vmem:[#allocation3 + $0x60] sm:$0xff] %vm1091, %v3218
      %3302 = vst.msk [vmem:[#allocation3 + $0x68] sm:$0xff] %vm1091, %v3220
      %3303 = vst.msk [vmem:[#allocation3 + $0x70] sm:$0xff] %vm1091, %v3222
      %3304 = vst.msk [vmem:[#allocation3 + $0x78] sm:$0xff] %vm1091, %v3224
      %3305 = vst.msk [vmem:[#allocation3 + $0x80] sm:$0xff] %vm1091, %v3226
      %3306 = vst.msk [vmem:[#allocation3 + $0x88] sm:$0xff] %vm1091, %v3228
      %3307 = vst.msk [vmem:[#allocation3 + $0x90] sm:$0xff] %vm1091, %v3230
      %3308 = vst.msk [vmem:[#allocation3 + $0x98] sm:$0xff] %vm1091, %v3232
      %3309 = vst.msk [vmem:[#allocation3 + $0xa0] sm:$0xff] %vm1091, %v3234
      %3310 = vst.msk [vmem:[#allocation3 + $0xa8] sm:$0xff] %vm1091, %v3236
      %3311 = vst.msk [vmem:[#allocation3 + $0xb0] sm:$0xff] %vm1091, %v3238
      %3312 = vst.msk [vmem:[#allocation3 + $0xb8] sm:$0xff] %vm1091, %v3240
      %3313 = vst.msk [vmem:[#allocation3 + $0xc0] sm:$0xff] %vm1091, %v3242
      %3314 = vst.msk [vmem:[#allocation3 + $0xc8] sm:$0xff] %vm1091, %v3244
      %3315 = vst.msk [vmem:[#allocation3 + $0xd0] sm:$0xff] %vm1091, %v3246
      %3316 = vst.msk [vmem:[#allocation3 + $0xd8] sm:$0xff] %vm1091, %v3248
      %3317 = vst.msk [vmem:[#allocation3 + $0xe0] sm:$0xff] %vm1091, %v3250
      %3318 = vst.msk [vmem:[#allocation3 + $0xe8] sm:$0xff] %vm1091, %v3252
      %3319 = vst.msk [vmem:[#allocation3 + $0xf0] sm:$0xff] %vm1091, %v3254
      %3320 = vst.msk [vmem:[#allocation3 + $0xf8] sm:$0xff] %vm1091, %v3256
      %v3321 = vld [vmem:[%s448 + $0x1] sm:$0xff]
      %v3322 = vld [vmem:[%s448 + $0x9] sm:$0xff]
      %v3323 = vld [vmem:[%s448 + $0x19] sm:$0xff]
      %v3324 = vld [vmem:[%s448 + $0x21] sm:$0xff]
      %v3325 = vld [vmem:[%s448 + $0x31] sm:$0xff]
      %v3326 = vld [vmem:[%s448 + $0x39] sm:$0xff]
      %v3327 = vld [vmem:[%s448 + $0x49] sm:$0xff]
      %v3328 = vld [vmem:[%s448 + $0x51] sm:$0xff]
      %v3329 = vld [vmem:[%s448 + $0x61] sm:$0xff]
      %v3330 = vld [vmem:[%s448 + $0x69] sm:$0xff]
      %v3331 = vld [vmem:[%s448 + $0x79] sm:$0xff]
      %v3332 = vld [vmem:[%s448 + $0x81] sm:$0xff]
      %v3333 = vld [vmem:[%s448 + $0x91] sm:$0xff]
      %v3334 = vld [vmem:[%s448 + $0x99] sm:$0xff]
      %v3335 = vld [vmem:[%s448 + $0xa9] sm:$0xff]
      %v3336 = vld [vmem:[%s448 + $0xb1] sm:$0xff]
      %v3337 = vld [vmem:[%s448 + $0xc1] sm:$0xff]
      %v3338 = vld [vmem:[%s448 + $0xc9] sm:$0xff]
      %v3339 = vld [vmem:[%s448 + $0xd9] sm:$0xff]
      %v3340 = vld [vmem:[%s448 + $0xe1] sm:$0xff]
      %v3341 = vld [vmem:[%s448 + $0xf1] sm:$0xff]
      %v3342 = vld [vmem:[%s448 + $0xf9] sm:$0xff]
      %v3343 = vld [vmem:[%s448 + $0x109] sm:$0xff]
      %v3344 = vld [vmem:[%s448 + $0x111] sm:$0xff]
      %v3345 = vld [vmem:[%s448 + $0x121] sm:$0xff]
      %v3346 = vld [vmem:[%s448 + $0x129] sm:$0xff]
      %v3347 = vld [vmem:[%s448 + $0x139] sm:$0xff]
      %v3348 = vld [vmem:[%s448 + $0x141] sm:$0xff]
      %v3349 = vld [vmem:[%s448 + $0x151] sm:$0xff]
      %v3350 = vld [vmem:[%s448 + $0x159] sm:$0xff]
      %v3351 = vld [vmem:[%s448 + $0x169] sm:$0xff]
      %v3352 = vld [vmem:[%s448 + $0x171] sm:$0xff]
      %3385 = vrot.lane.b32.xlu0 %v3321, 32
      %v3386 = vpop.permute.xlu0 %3385
      %3387 = vrot.lane.b32.xlu0 %v3322, 32
      %v3388 = vpop.permute.xlu0 %3387
      %3389 = vrot.lane.b32.xlu0 %v3323, 32
      %v3390 = vpop.permute.xlu0 %3389
      %3391 = vrot.lane.b32.xlu0 %v3324, 32
      %v3392 = vpop.permute.xlu0 %3391
      %3393 = vrot.lane.b32.xlu0 %v3325, 32
      %v3394 = vpop.permute.xlu0 %3393
      %3395 = vrot.lane.b32.xlu0 %v3326, 32
      %v3396 = vpop.permute.xlu0 %3395
      %3397 = vrot.lane.b32.xlu0 %v3327, 32
      %v3398 = vpop.permute.xlu0 %3397
      %3399 = vrot.lane.b32.xlu0 %v3328, 32
      %v3400 = vpop.permute.xlu0 %3399
      %3401 = vrot.lane.b32.xlu0 %v3329, 32
      %v3402 = vpop.permute.xlu0 %3401
      %3403 = vrot.lane.b32.xlu0 %v3330, 32
      %v3404 = vpop.permute.xlu0 %3403
      %3405 = vrot.lane.b32.xlu0 %v3331, 32
      %v3406 = vpop.permute.xlu0 %3405
      %3407 = vrot.lane.b32.xlu0 %v3332, 32
      %v3408 = vpop.permute.xlu0 %3407
      %3409 = vrot.lane.b32.xlu0 %v3333, 32
      %v3410 = vpop.permute.xlu0 %3409
      %3411 = vrot.lane.b32.xlu0 %v3334, 32
      %v3412 = vpop.permute.xlu0 %3411
      %3413 = vrot.lane.b32.xlu0 %v3335, 32
      %v3414 = vpop.permute.xlu0 %3413
      %3415 = vrot.lane.b32.xlu0 %v3336, 32
      %v3416 = vpop.permute.xlu0 %3415
      %3417 = vrot.lane.b32.xlu0 %v3337, 32
      %v3418 = vpop.permute.xlu0 %3417
      %3419 = vrot.lane.b32.xlu0 %v3338, 32
      %v3420 = vpop.permute.xlu0 %3419
      %3421 = vrot.lane.b32.xlu0 %v3339, 32
      %v3422 = vpop.permute.xlu0 %3421
      %3423 = vrot.lane.b32.xlu0 %v3340, 32
      %v3424 = vpop.permute.xlu0 %3423
      %3425 = vrot.lane.b32.xlu0 %v3341, 32
      %v3426 = vpop.permute.xlu0 %3425
      %3427 = vrot.lane.b32.xlu0 %v3342, 32
      %v3428 = vpop.permute.xlu0 %3427
      %3429 = vrot.lane.b32.xlu0 %v3343, 32
      %v3430 = vpop.permute.xlu0 %3429
      %3431 = vrot.lane.b32.xlu0 %v3344, 32
      %v3432 = vpop.permute.xlu0 %3431
      %3433 = vrot.lane.b32.xlu0 %v3345, 32
      %v3434 = vpop.permute.xlu0 %3433
      %3435 = vrot.lane.b32.xlu0 %v3346, 32
      %v3436 = vpop.permute.xlu0 %3435
      %3437 = vrot.lane.b32.xlu0 %v3347, 32
      %v3438 = vpop.permute.xlu0 %3437
      %3439 = vrot.lane.b32.xlu0 %v3348, 32
      %v3440 = vpop.permute.xlu0 %3439
      %3441 = vrot.lane.b32.xlu0 %v3349, 32
      %v3442 = vpop.permute.xlu0 %3441
      %3443 = vrot.lane.b32.xlu0 %v3350, 32
      %v3444 = vpop.permute.xlu0 %3443
      %3445 = vrot.lane.b32.xlu0 %v3351, 32
      %v3446 = vpop.permute.xlu0 %3445
      %3447 = vrot.lane.b32.xlu0 %v3352, 32
      %v3448 = vpop.permute.xlu0 %3447
      %3481 = vst.msk [vmem:[#allocation3] sm:$0xff] %vm1284, %v3386
      %3482 = vst.msk [vmem:[#allocation3 + $0x8] sm:$0xff] %vm1284, %v3388
      %3483 = vst.msk [vmem:[#allocation3 + $0x10] sm:$0xff] %vm1284, %v3390
      %3484 = vst.msk [vmem:[#allocation3 + $0x18] sm:$0xff] %vm1284, %v3392
      %3485 = vst.msk [vmem:[#allocation3 + $0x20] sm:$0xff] %vm1284, %v3394
      %3486 = vst.msk [vmem:[#allocation3 + $0x28] sm:$0xff] %vm1284, %v3396
      %3487 = vst.msk [vmem:[#allocation3 + $0x30] sm:$0xff] %vm1284, %v3398
      %3488 = vst.msk [vmem:[#allocation3 + $0x38] sm:$0xff] %vm1284, %v3400
      %3489 = vst.msk [vmem:[#allocation3 + $0x40] sm:$0xff] %vm1284, %v3402
      %3490 = vst.msk [vmem:[#allocation3 + $0x48] sm:$0xff] %vm1284, %v3404
      %3491 = vst.msk [vmem:[#allocation3 + $0x50] sm:$0xff] %vm1284, %v3406
      %3492 = vst.msk [vmem:[#allocation3 + $0x58] sm:$0xff] %vm1284, %v3408
      %3493 = vst.msk [vmem:[#allocation3 + $0x60] sm:$0xff] %vm1284, %v3410
      %3494 = vst.msk [vmem:[#allocation3 + $0x68] sm:$0xff] %vm1284, %v3412
      %3495 = vst.msk [vmem:[#allocation3 + $0x70] sm:$0xff] %vm1284, %v3414
      %3496 = vst.msk [vmem:[#allocation3 + $0x78] sm:$0xff] %vm1284, %v3416
      %3497 = vst.msk [vmem:[#allocation3 + $0x80] sm:$0xff] %vm1284, %v3418
      %3498 = vst.msk [vmem:[#allocation3 + $0x88] sm:$0xff] %vm1284, %v3420
      %3499 = vst.msk [vmem:[#allocation3 + $0x90] sm:$0xff] %vm1284, %v3422
      %3500 = vst.msk [vmem:[#allocation3 + $0x98] sm:$0xff] %vm1284, %v3424
      %3501 = vst.msk [vmem:[#allocation3 + $0xa0] sm:$0xff] %vm1284, %v3426
      %3502 = vst.msk [vmem:[#allocation3 + $0xa8] sm:$0xff] %vm1284, %v3428
      %3503 = vst.msk [vmem:[#allocation3 + $0xb0] sm:$0xff] %vm1284, %v3430
      %3504 = vst.msk [vmem:[#allocation3 + $0xb8] sm:$0xff] %vm1284, %v3432
      %3505 = vst.msk [vmem:[#allocation3 + $0xc0] sm:$0xff] %vm1284, %v3434
      %3506 = vst.msk [vmem:[#allocation3 + $0xc8] sm:$0xff] %vm1284, %v3436
      %3507 = vst.msk [vmem:[#allocation3 + $0xd0] sm:$0xff] %vm1284, %v3438
      %3508 = vst.msk [vmem:[#allocation3 + $0xd8] sm:$0xff] %vm1284, %v3440
      %3509 = vst.msk [vmem:[#allocation3 + $0xe0] sm:$0xff] %vm1284, %v3442
      %3510 = vst.msk [vmem:[#allocation3 + $0xe8] sm:$0xff] %vm1284, %v3444
      %3511 = vst.msk [vmem:[#allocation3 + $0xf0] sm:$0xff] %vm1284, %v3446
      %3512 = vst.msk [vmem:[#allocation3 + $0xf8] sm:$0xff] %vm1284, %v3448
      %v3513 = vld [vmem:[%s448 + $0x2] sm:$0xff]
      %v3514 = vld [vmem:[%s448 + $0xa] sm:$0xff]
      %v3515 = vld [vmem:[%s448 + $0x1a] sm:$0xff]
      %v3516 = vld [vmem:[%s448 + $0x22] sm:$0xff]
      %v3517 = vld [vmem:[%s448 + $0x32] sm:$0xff]
      %v3518 = vld [vmem:[%s448 + $0x3a] sm:$0xff]
      %v3519 = vld [vmem:[%s448 + $0x4a] sm:$0xff]
      %v3520 = vld [vmem:[%s448 + $0x52] sm:$0xff]
      %v3521 = vld [vmem:[%s448 + $0x62] sm:$0xff]
      %v3522 = vld [vmem:[%s448 + $0x6a] sm:$0xff]
      %v3523 = vld [vmem:[%s448 + $0x7a] sm:$0xff]
      %v3524 = vld [vmem:[%s448 + $0x82] sm:$0xff]
      %v3525 = vld [vmem:[%s448 + $0x92] sm:$0xff]
      %v3526 = vld [vmem:[%s448 + $0x9a] sm:$0xff]
      %v3527 = vld [vmem:[%s448 + $0xaa] sm:$0xff]
      %v3528 = vld [vmem:[%s448 + $0xb2] sm:$0xff]
      %v3529 = vld [vmem:[%s448 + $0xc2] sm:$0xff]
      %v3530 = vld [vmem:[%s448 + $0xca] sm:$0xff]
      %v3531 = vld [vmem:[%s448 + $0xda] sm:$0xff]
      %v3532 = vld [vmem:[%s448 + $0xe2] sm:$0xff]
      %v3533 = vld [vmem:[%s448 + $0xf2] sm:$0xff]
      %v3534 = vld [vmem:[%s448 + $0xfa] sm:$0xff]
      %v3535 = vld [vmem:[%s448 + $0x10a] sm:$0xff]
      %v3536 = vld [vmem:[%s448 + $0x112] sm:$0xff]
      %v3537 = vld [vmem:[%s448 + $0x122] sm:$0xff]
      %v3538 = vld [vmem:[%s448 + $0x12a] sm:$0xff]
      %v3539 = vld [vmem:[%s448 + $0x13a] sm:$0xff]
      %v3540 = vld [vmem:[%s448 + $0x142] sm:$0xff]
      %v3541 = vld [vmem:[%s448 + $0x152] sm:$0xff]
      %v3542 = vld [vmem:[%s448 + $0x15a] sm:$0xff]
      %v3543 = vld [vmem:[%s448 + $0x16a] sm:$0xff]
      %v3544 = vld [vmem:[%s448 + $0x172] sm:$0xff]
      %3577 = vrot.lane.b32.xlu0 %v3513, 40
      %v3578 = vpop.permute.xlu0 %3577
      %3579 = vrot.lane.b32.xlu0 %v3514, 40
      %v3580 = vpop.permute.xlu0 %3579
      %3581 = vrot.lane.b32.xlu0 %v3515, 40
      %v3582 = vpop.permute.xlu0 %3581
      %3583 = vrot.lane.b32.xlu0 %v3516, 40
      %v3584 = vpop.permute.xlu0 %3583
      %3585 = vrot.lane.b32.xlu0 %v3517, 40
      %v3586 = vpop.permute.xlu0 %3585
      %3587 = vrot.lane.b32.xlu0 %v3518, 40
      %v3588 = vpop.permute.xlu0 %3587
      %3589 = vrot.lane.b32.xlu0 %v3519, 40
      %v3590 = vpop.permute.xlu0 %3589
      %3591 = vrot.lane.b32.xlu0 %v3520, 40
      %v3592 = vpop.permute.xlu0 %3591
      %3593 = vrot.lane.b32.xlu0 %v3521, 40
      %v3594 = vpop.permute.xlu0 %3593
      %3595 = vrot.lane.b32.xlu0 %v3522, 40
      %v3596 = vpop.permute.xlu0 %3595
      %3597 = vrot.lane.b32.xlu0 %v3523, 40
      %v3598 = vpop.permute.xlu0 %3597
      %3599 = vrot.lane.b32.xlu0 %v3524, 40
      %v3600 = vpop.permute.xlu0 %3599
      %3601 = vrot.lane.b32.xlu0 %v3525, 40
      %v3602 = vpop.permute.xlu0 %3601
      %3603 = vrot.lane.b32.xlu0 %v3526, 40
      %v3604 = vpop.permute.xlu0 %3603
      %3605 = vrot.lane.b32.xlu0 %v3527, 40
      %v3606 = vpop.permute.xlu0 %3605
      %3607 = vrot.lane.b32.xlu0 %v3528, 40
      %v3608 = vpop.permute.xlu0 %3607
      %3609 = vrot.lane.b32.xlu0 %v3529, 40
      %v3610 = vpop.permute.xlu0 %3609
      %3611 = vrot.lane.b32.xlu0 %v3530, 40
      %v3612 = vpop.permute.xlu0 %3611
      %3613 = vrot.lane.b32.xlu0 %v3531, 40
      %v3614 = vpop.permute.xlu0 %3613
      %3615 = vrot.lane.b32.xlu0 %v3532, 40
      %v3616 = vpop.permute.xlu0 %3615
      %3617 = vrot.lane.b32.xlu0 %v3533, 40
      %v3618 = vpop.permute.xlu0 %3617
      %3619 = vrot.lane.b32.xlu0 %v3534, 40
      %v3620 = vpop.permute.xlu0 %3619
      %3621 = vrot.lane.b32.xlu0 %v3535, 40
      %v3622 = vpop.permute.xlu0 %3621
      %3623 = vrot.lane.b32.xlu0 %v3536, 40
      %v3624 = vpop.permute.xlu0 %3623
      %3625 = vrot.lane.b32.xlu0 %v3537, 40
      %v3626 = vpop.permute.xlu0 %3625
      %3627 = vrot.lane.b32.xlu0 %v3538, 40
      %v3628 = vpop.permute.xlu0 %3627
      %3629 = vrot.lane.b32.xlu0 %v3539, 40
      %v3630 = vpop.permute.xlu0 %3629
      %3631 = vrot.lane.b32.xlu0 %v3540, 40
      %v3632 = vpop.permute.xlu0 %3631
      %3633 = vrot.lane.b32.xlu0 %v3541, 40
      %v3634 = vpop.permute.xlu0 %3633
      %3635 = vrot.lane.b32.xlu0 %v3542, 40
      %v3636 = vpop.permute.xlu0 %3635
      %3637 = vrot.lane.b32.xlu0 %v3543, 40
      %v3638 = vpop.permute.xlu0 %3637
      %3639 = vrot.lane.b32.xlu0 %v3544, 40
      %v3640 = vpop.permute.xlu0 %3639
      %3673 = vst.msk [vmem:[#allocation3] sm:$0xff] %vm1477, %v3578
      %3674 = vst.msk [vmem:[#allocation3 + $0x8] sm:$0xff] %vm1477, %v3580
      %3675 = vst.msk [vmem:[#allocation3 + $0x10] sm:$0xff] %vm1477, %v3582
      %3676 = vst.msk [vmem:[#allocation3 + $0x18] sm:$0xff] %vm1477, %v3584
      %3677 = vst.msk [vmem:[#allocation3 + $0x20] sm:$0xff] %vm1477, %v3586
      %3678 = vst.msk [vmem:[#allocation3 + $0x28] sm:$0xff] %vm1477, %v3588
      %3679 = vst.msk [vmem:[#allocation3 + $0x30] sm:$0xff] %vm1477, %v3590
      %3680 = vst.msk [vmem:[#allocation3 + $0x38] sm:$0xff] %vm1477, %v3592
      %3681 = vst.msk [vmem:[#allocation3 + $0x40] sm:$0xff] %vm1477, %v3594
      %3682 = vst.msk [vmem:[#allocation3 + $0x48] sm:$0xff] %vm1477, %v3596
      %3683 = vst.msk [vmem:[#allocation3 + $0x50] sm:$0xff] %vm1477, %v3598
      %3684 = vst.msk [vmem:[#allocation3 + $0x58] sm:$0xff] %vm1477, %v3600
      %3685 = vst.msk [vmem:[#allocation3 + $0x60] sm:$0xff] %vm1477, %v3602
      %3686 = vst.msk [vmem:[#allocation3 + $0x68] sm:$0xff] %vm1477, %v3604
      %3687 = vst.msk [vmem:[#allocation3 + $0x70] sm:$0xff] %vm1477, %v3606
      %3688 = vst.msk [vmem:[#allocation3 + $0x78] sm:$0xff] %vm1477, %v3608
      %3689 = vst.msk [vmem:[#allocation3 + $0x80] sm:$0xff] %vm1477, %v3610
      %3690 = vst.msk [vmem:[#allocation3 + $0x88] sm:$0xff] %vm1477, %v3612
      %3691 = vst.msk [vmem:[#allocation3 + $0x90] sm:$0xff] %vm1477, %v3614
      %3692 = vst.msk [vmem:[#allocation3 + $0x98] sm:$0xff] %vm1477, %v3616
      %3693 = vst.msk [vmem:[#allocation3 + $0xa0] sm:$0xff] %vm1477, %v3618
      %3694 = vst.msk [vmem:[#allocation3 + $0xa8] sm:$0xff] %vm1477, %v3620
      %3695 = vst.msk [vmem:[#allocation3 + $0xb0] sm:$0xff] %vm1477, %v3622
      %3696 = vst.msk [vmem:[#allocation3 + $0xb8] sm:$0xff] %vm1477, %v3624
      %3697 = vst.msk [vmem:[#allocation3 + $0xc0] sm:$0xff] %vm1477, %v3626
      %3698 = vst.msk [vmem:[#allocation3 + $0xc8] sm:$0xff] %vm1477, %v3628
      %3699 = vst.msk [vmem:[#allocation3 + $0xd0] sm:$0xff] %vm1477, %v3630
      %3700 = vst.msk [vmem:[#allocation3 + $0xd8] sm:$0xff] %vm1477, %v3632
      %3701 = vst.msk [vmem:[#allocation3 + $0xe0] sm:$0xff] %vm1477, %v3634
      %3702 = vst.msk [vmem:[#allocation3 + $0xe8] sm:$0xff] %vm1477, %v3636
      %3703 = vst.msk [vmem:[#allocation3 + $0xf0] sm:$0xff] %vm1477, %v3638
      %3704 = vst.msk [vmem:[#allocation3 + $0xf8] sm:$0xff] %vm1477, %v3640
      %v3705 = vld [vmem:[%s1510] sm:$0xff]
      %v3706 = vld [vmem:[%s1510 + $0x8] sm:$0xff]
      %v3707 = vld [vmem:[%s1510 + $0x18] sm:$0xff]
      %v3708 = vld [vmem:[%s1510 + $0x20] sm:$0xff]
      %v3709 = vld [vmem:[%s1510 + $0x30] sm:$0xff]
      %v3710 = vld [vmem:[%s1510 + $0x38] sm:$0xff]
      %v3711 = vld [vmem:[%s1510 + $0x48] sm:$0xff]
      %v3712 = vld [vmem:[%s1510 + $0x50] sm:$0xff]
      %v3713 = vld [vmem:[%s1510 + $0x60] sm:$0xff]
      %v3714 = vld [vmem:[%s1510 + $0x68] sm:$0xff]
      %v3715 = vld [vmem:[%s1510 + $0x78] sm:$0xff]
      %v3716 = vld [vmem:[%s1510 + $0x80] sm:$0xff]
      %v3717 = vld [vmem:[%s1510 + $0x90] sm:$0xff]
      %v3718 = vld [vmem:[%s1510 + $0x98] sm:$0xff]
      %v3719 = vld [vmem:[%s1510 + $0xa8] sm:$0xff]
      %v3720 = vld [vmem:[%s1510 + $0xb0] sm:$0xff]
      %v3721 = vld [vmem:[%s1510 + $0xc0] sm:$0xff]
      %v3722 = vld [vmem:[%s1510 + $0xc8] sm:$0xff]
      %v3723 = vld [vmem:[%s1510 + $0xd8] sm:$0xff]
      %v3724 = vld [vmem:[%s1510 + $0xe0] sm:$0xff]
      %v3725 = vld [vmem:[%s1510 + $0xf0] sm:$0xff]
      %v3726 = vld [vmem:[%s1510 + $0xf8] sm:$0xff]
      %v3727 = vld [vmem:[%s1510 + $0x108] sm:$0xff]
      %v3728 = vld [vmem:[%s1510 + $0x110] sm:$0xff]
      %v3729 = vld [vmem:[%s1510 + $0x120] sm:$0xff]
      %v3730 = vld [vmem:[%s1510 + $0x128] sm:$0xff]
      %v3731 = vld [vmem:[%s1510 + $0x138] sm:$0xff]
      %v3732 = vld [vmem:[%s1510 + $0x140] sm:$0xff]
      %v3733 = vld [vmem:[%s1510 + $0x150] sm:$0xff]
      %v3734 = vld [vmem:[%s1510 + $0x158] sm:$0xff]
      %v3735 = vld [vmem:[%s1510 + $0x168] sm:$0xff]
      %v3736 = vld [vmem:[%s1510 + $0x170] sm:$0xff]
      %3769 = vrot.lane.b32.xlu0 %v3705, 48
      %v3770 = vpop.permute.xlu0 %3769
      %3771 = vrot.lane.b32.xlu0 %v3706, 48
      %v3772 = vpop.permute.xlu0 %3771
      %3773 = vrot.lane.b32.xlu0 %v3707, 48
      %v3774 = vpop.permute.xlu0 %3773
      %3775 = vrot.lane.b32.xlu0 %v3708, 48
      %v3776 = vpop.permute.xlu0 %3775
      %3777 = vrot.lane.b32.xlu0 %v3709, 48
      %v3778 = vpop.permute.xlu0 %3777
      %3779 = vrot.lane.b32.xlu0 %v3710, 48
      %v3780 = vpop.permute.xlu0 %3779
      %3781 = vrot.lane.b32.xlu0 %v3711, 48
      %v3782 = vpop.permute.xlu0 %3781
      %3783 = vrot.lane.b32.xlu0 %v3712, 48
      %v3784 = vpop.permute.xlu0 %3783
      %3785 = vrot.lane.b32.xlu0 %v3713, 48
      %v3786 = vpop.permute.xlu0 %3785
      %3787 = vrot.lane.b32.xlu0 %v3714, 48
      %v3788 = vpop.permute.xlu0 %3787
      %3789 = vrot.lane.b32.xlu0 %v3715, 48
      %v3790 = vpop.permute.xlu0 %3789
      %3791 = vrot.lane.b32.xlu0 %v3716, 48
      %v3792 = vpop.permute.xlu0 %3791
      %3793 = vrot.lane.b32.xlu0 %v3717, 48
      %v3794 = vpop.permute.xlu0 %3793
      %3795 = vrot.lane.b32.xlu0 %v3718, 48
      %v3796 = vpop.permute.xlu0 %3795
      %3797 = vrot.lane.b32.xlu0 %v3719, 48
      %v3798 = vpop.permute.xlu0 %3797
      %3799 = vrot.lane.b32.xlu0 %v3720, 48
      %v3800 = vpop.permute.xlu0 %3799
      %3801 = vrot.lane.b32.xlu0 %v3721, 48
      %v3802 = vpop.permute.xlu0 %3801
      %3803 = vrot.lane.b32.xlu0 %v3722, 48
      %v3804 = vpop.permute.xlu0 %3803
      %3805 = vrot.lane.b32.xlu0 %v3723, 48
      %v3806 = vpop.permute.xlu0 %3805
      %3807 = vrot.lane.b32.xlu0 %v3724, 48
      %v3808 = vpop.permute.xlu0 %3807
      %3809 = vrot.lane.b32.xlu0 %v3725, 48
      %v3810 = vpop.permute.xlu0 %3809
      %3811 = vrot.lane.b32.xlu0 %v3726, 48
      %v3812 = vpop.permute.xlu0 %3811
      %3813 = vrot.lane.b32.xlu0 %v3727, 48
      %v3814 = vpop.permute.xlu0 %3813
      %3815 = vrot.lane.b32.xlu0 %v3728, 48
      %v3816 = vpop.permute.xlu0 %3815
      %3817 = vrot.lane.b32.xlu0 %v3729, 48
      %v3818 = vpop.permute.xlu0 %3817
      %3819 = vrot.lane.b32.xlu0 %v3730, 48
      %v3820 = vpop.permute.xlu0 %3819
      %3821 = vrot.lane.b32.xlu0 %v3731, 48
      %v3822 = vpop.permute.xlu0 %3821
      %3823 = vrot.lane.b32.xlu0 %v3732, 48
      %v3824 = vpop.permute.xlu0 %3823
      %3825 = vrot.lane.b32.xlu0 %v3733, 48
      %v3826 = vpop.permute.xlu0 %3825
      %3827 = vrot.lane.b32.xlu0 %v3734, 48
      %v3828 = vpop.permute.xlu0 %3827
      %3829 = vrot.lane.b32.xlu0 %v3735, 48
      %v3830 = vpop.permute.xlu0 %3829
      %3831 = vrot.lane.b32.xlu0 %v3736, 48
      %v3832 = vpop.permute.xlu0 %3831
      %3865 = vst.msk [vmem:[#allocation3] sm:$0xff] %vm1671, %v3770
      %3866 = vst.msk [vmem:[#allocation3 + $0x8] sm:$0xff] %vm1671, %v3772
      %3867 = vst.msk [vmem:[#allocation3 + $0x10] sm:$0xff] %vm1671, %v3774
      %3868 = vst.msk [vmem:[#allocation3 + $0x18] sm:$0xff] %vm1671, %v3776
      %3869 = vst.msk [vmem:[#allocation3 + $0x20] sm:$0xff] %vm1671, %v3778
      %3870 = vst.msk [vmem:[#allocation3 + $0x28] sm:$0xff] %vm1671, %v3780
      %3871 = vst.msk [vmem:[#allocation3 + $0x30] sm:$0xff] %vm1671, %v3782
      %3872 = vst.msk [vmem:[#allocation3 + $0x38] sm:$0xff] %vm1671, %v3784
      %3873 = vst.msk [vmem:[#allocation3 + $0x40] sm:$0xff] %vm1671, %v3786
      %3874 = vst.msk [vmem:[#allocation3 + $0x48] sm:$0xff] %vm1671, %v3788
      %3875 = vst.msk [vmem:[#allocation3 + $0x50] sm:$0xff] %vm1671, %v3790
      %3876 = vst.msk [vmem:[#allocation3 + $0x58] sm:$0xff] %vm1671, %v3792
      %3877 = vst.msk [vmem:[#allocation3 + $0x60] sm:$0xff] %vm1671, %v3794
      %3878 = vst.msk [vmem:[#allocation3 + $0x68] sm:$0xff] %vm1671, %v3796
      %3879 = vst.msk [vmem:[#allocation3 + $0x70] sm:$0xff] %vm1671, %v3798
      %3880 = vst.msk [vmem:[#allocation3 + $0x78] sm:$0xff] %vm1671, %v3800
      %3881 = vst.msk [vmem:[#allocation3 + $0x80] sm:$0xff] %vm1671, %v3802
      %3882 = vst.msk [vmem:[#allocation3 + $0x88] sm:$0xff] %vm1671, %v3804
      %3883 = vst.msk [vmem:[#allocation3 + $0x90] sm:$0xff] %vm1671, %v3806
      %3884 = vst.msk [vmem:[#allocation3 + $0x98] sm:$0xff] %vm1671, %v3808
      %3885 = vst.msk [vmem:[#allocation3 + $0xa0] sm:$0xff] %vm1671, %v3810
      %3886 = vst.msk [vmem:[#allocation3 + $0xa8] sm:$0xff] %vm1671, %v3812
      %3887 = vst.msk [vmem:[#allocation3 + $0xb0] sm:$0xff] %vm1671, %v3814
      %3888 = vst.msk [vmem:[#allocation3 + $0xb8] sm:$0xff] %vm1671, %v3816
      %3889 = vst.msk [vmem:[#allocation3 + $0xc0] sm:$0xff] %vm1671, %v3818
      %3890 = vst.msk [vmem:[#allocation3 + $0xc8] sm:$0xff] %vm1671, %v3820
      %3891 = vst.msk [vmem:[#allocation3 + $0xd0] sm:$0xff] %vm1671, %v3822
      %3892 = vst.msk [vmem:[#allocation3 + $0xd8] sm:$0xff] %vm1671, %v3824
      %3893 = vst.msk [vmem:[#allocation3 + $0xe0] sm:$0xff] %vm1671, %v3826
      %3894 = vst.msk [vmem:[#allocation3 + $0xe8] sm:$0xff] %vm1671, %v3828
      %3895 = vst.msk [vmem:[#allocation3 + $0xf0] sm:$0xff] %vm1671, %v3830
      %3896 = vst.msk [vmem:[#allocation3 + $0xf8] sm:$0xff] %vm1671, %v3832
      %v3897 = vld [vmem:[%s1510 + $0x1] sm:$0xff]
      %v3898 = vld [vmem:[%s1510 + $0x9] sm:$0xff]
      %v3899 = vld [vmem:[%s1510 + $0x19] sm:$0xff]
      %v3900 = vld [vmem:[%s1510 + $0x21] sm:$0xff]
      %v3901 = vld [vmem:[%s1510 + $0x31] sm:$0xff]
      %v3902 = vld [vmem:[%s1510 + $0x39] sm:$0xff]
      %v3903 = vld [vmem:[%s1510 + $0x49] sm:$0xff]
      %v3904 = vld [vmem:[%s1510 + $0x51] sm:$0xff]
      %v3905 = vld [vmem:[%s1510 + $0x61] sm:$0xff]
      %v3906 = vld [vmem:[%s1510 + $0x69] sm:$0xff]
      %v3907 = vld [vmem:[%s1510 + $0x79] sm:$0xff]
      %v3908 = vld [vmem:[%s1510 + $0x81] sm:$0xff]
      %v3909 = vld [vmem:[%s1510 + $0x91] sm:$0xff]
      %v3910 = vld [vmem:[%s1510 + $0x99] sm:$0xff]
      %v3911 = vld [vmem:[%s1510 + $0xa9] sm:$0xff]
      %v3912 = vld [vmem:[%s1510 + $0xb1] sm:$0xff]
      %v3913 = vld [vmem:[%s1510 + $0xc1] sm:$0xff]
      %v3914 = vld [vmem:[%s1510 + $0xc9] sm:$0xff]
      %v3915 = vld [vmem:[%s1510 + $0xd9] sm:$0xff]
      %v3916 = vld [vmem:[%s1510 + $0xe1] sm:$0xff]
      %v3917 = vld [vmem:[%s1510 + $0xf1] sm:$0xff]
      %v3918 = vld [vmem:[%s1510 + $0xf9] sm:$0xff]
      %v3919 = vld [vmem:[%s1510 + $0x109] sm:$0xff]
      %v3920 = vld [vmem:[%s1510 + $0x111] sm:$0xff]
      %v3921 = vld [vmem:[%s1510 + $0x121] sm:$0xff]
      %v3922 = vld [vmem:[%s1510 + $0x129] sm:$0xff]
      %v3923 = vld [vmem:[%s1510 + $0x139] sm:$0xff]
      %v3924 = vld [vmem:[%s1510 + $0x141] sm:$0xff]
      %v3925 = vld [vmem:[%s1510 + $0x151] sm:$0xff]
      %v3926 = vld [vmem:[%s1510 + $0x159] sm:$0xff]
      %v3927 = vld [vmem:[%s1510 + $0x169] sm:$0xff]
      %v3928 = vld [vmem:[%s1510 + $0x171] sm:$0xff]
      %3961 = vrot.lane.b32.xlu0 %v3897, 56
      %v3962 = vpop.permute.xlu0 %3961
      %3963 = vrot.lane.b32.xlu0 %v3898, 56
      %v3964 = vpop.permute.xlu0 %3963
      %3965 = vrot.lane.b32.xlu0 %v3899, 56
      %v3966 = vpop.permute.xlu0 %3965
      %3967 = vrot.lane.b32.xlu0 %v3900, 56
      %v3968 = vpop.permute.xlu0 %3967
      %3969 = vrot.lane.b32.xlu0 %v3901, 56
      %v3970 = vpop.permute.xlu0 %3969
      %3971 = vrot.lane.b32.xlu0 %v3902, 56
      %v3972 = vpop.permute.xlu0 %3971
      %3973 = vrot.lane.b32.xlu0 %v3903, 56
      %v3974 = vpop.permute.xlu0 %3973
      %3975 = vrot.lane.b32.xlu0 %v3904, 56
      %v3976 = vpop.permute.xlu0 %3975
      %3977 = vrot.lane.b32.xlu0 %v3905, 56
      %v3978 = vpop.permute.xlu0 %3977
      %3979 = vrot.lane.b32.xlu0 %v3906, 56
      %v3980 = vpop.permute.xlu0 %3979
      %3981 = vrot.lane.b32.xlu0 %v3907, 56
      %v3982 = vpop.permute.xlu0 %3981
      %3983 = vrot.lane.b32.xlu0 %v3908, 56
      %v3984 = vpop.permute.xlu0 %3983
      %3985 = vrot.lane.b32.xlu0 %v3909, 56
      %v3986 = vpop.permute.xlu0 %3985
      %3987 = vrot.lane.b32.xlu0 %v3910, 56
      %v3988 = vpop.permute.xlu0 %3987
      %3989 = vrot.lane.b32.xlu0 %v3911, 56
      %v3990 = vpop.permute.xlu0 %3989
      %3991 = vrot.lane.b32.xlu0 %v3912, 56
      %v3992 = vpop.permute.xlu0 %3991
      %3993 = vrot.lane.b32.xlu0 %v3913, 56
      %v3994 = vpop.permute.xlu0 %3993
      %3995 = vrot.lane.b32.xlu0 %v3914, 56
      %v3996 = vpop.permute.xlu0 %3995
      %3997 = vrot.lane.b32.xlu0 %v3915, 56
      %v3998 = vpop.permute.xlu0 %3997
      %3999 = vrot.lane.b32.xlu0 %v3916, 56
      %v4000 = vpop.permute.xlu0 %3999
      %4001 = vrot.lane.b32.xlu0 %v3917, 56
      %v4002 = vpop.permute.xlu0 %4001
      %4003 = vrot.lane.b32.xlu0 %v3918, 56
      %v4004 = vpop.permute.xlu0 %4003
      %4005 = vrot.lane.b32.xlu0 %v3919, 56
      %v4006 = vpop.permute.xlu0 %4005
      %4007 = vrot.lane.b32.xlu0 %v3920, 56
      %v4008 = vpop.permute.xlu0 %4007
      %4009 = vrot.lane.b32.xlu0 %v3921, 56
      %v4010 = vpop.permute.xlu0 %4009
      %4011 = vrot.lane.b32.xlu0 %v3922, 56
      %v4012 = vpop.permute.xlu0 %4011
      %4013 = vrot.lane.b32.xlu0 %v3923, 56
      %v4014 = vpop.permute.xlu0 %4013
      %4015 = vrot.lane.b32.xlu0 %v3924, 56
      %v4016 = vpop.permute.xlu0 %4015
      %4017 = vrot.lane.b32.xlu0 %v3925, 56
      %v4018 = vpop.permute.xlu0 %4017
      %4019 = vrot.lane.b32.xlu0 %v3926, 56
      %v4020 = vpop.permute.xlu0 %4019
      %4021 = vrot.lane.b32.xlu0 %v3927, 56
      %v4022 = vpop.permute.xlu0 %4021
      %4023 = vrot.lane.b32.xlu0 %v3928, 56
      %v4024 = vpop.permute.xlu0 %4023
      %4057 = vst.msk [vmem:[#allocation3] sm:$0xff] %vm1864, %v3962
      %4058 = vst.msk [vmem:[#allocation3 + $0x8] sm:$0xff] %vm1864, %v3964
      %4059 = vst.msk [vmem:[#allocation3 + $0x10] sm:$0xff] %vm1864, %v3966
      %4060 = vst.msk [vmem:[#allocation3 + $0x18] sm:$0xff] %vm1864, %v3968
      %4061 = vst.msk [vmem:[#allocation3 + $0x20] sm:$0xff] %vm1864, %v3970
      %4062 = vst.msk [vmem:[#allocation3 + $0x28] sm:$0xff] %vm1864, %v3972
      %4063 = vst.msk [vmem:[#allocation3 + $0x30] sm:$0xff] %vm1864, %v3974
      %4064 = vst.msk [vmem:[#allocation3 + $0x38] sm:$0xff] %vm1864, %v3976
      %4065 = vst.msk [vmem:[#allocation3 + $0x40] sm:$0xff] %vm1864, %v3978
      %4066 = vst.msk [vmem:[#allocation3 + $0x48] sm:$0xff] %vm1864, %v3980
      %4067 = vst.msk [vmem:[#allocation3 + $0x50] sm:$0xff] %vm1864, %v3982
      %4068 = vst.msk [vmem:[#allocation3 + $0x58] sm:$0xff] %vm1864, %v3984
      %4069 = vst.msk [vmem:[#allocation3 + $0x60] sm:$0xff] %vm1864, %v3986
      %4070 = vst.msk [vmem:[#allocation3 + $0x68] sm:$0xff] %vm1864, %v3988
      %4071 = vst.msk [vmem:[#allocation3 + $0x70] sm:$0xff] %vm1864, %v3990
      %4072 = vst.msk [vmem:[#allocation3 + $0x78] sm:$0xff] %vm1864, %v3992
      %4073 = vst.msk [vmem:[#allocation3 + $0x80] sm:$0xff] %vm1864, %v3994
      %4074 = vst.msk [vmem:[#allocation3 + $0x88] sm:$0xff] %vm1864, %v3996
      %4075 = vst.msk [vmem:[#allocation3 + $0x90] sm:$0xff] %vm1864, %v3998
      %4076 = vst.msk [vmem:[#allocation3 + $0x98] sm:$0xff] %vm1864, %v4000
      %4077 = vst.msk [vmem:[#allocation3 + $0xa0] sm:$0xff] %vm1864, %v4002
      %4078 = vst.msk [vmem:[#allocation3 + $0xa8] sm:$0xff] %vm1864, %v4004
      %4079 = vst.msk [vmem:[#allocation3 + $0xb0] sm:$0xff] %vm1864, %v4006
      %4080 = vst.msk [vmem:[#allocation3 + $0xb8] sm:$0xff] %vm1864, %v4008
      %4081 = vst.msk [vmem:[#allocation3 + $0xc0] sm:$0xff] %vm1864, %v4010
      %4082 = vst.msk [vmem:[#allocation3 + $0xc8] sm:$0xff] %vm1864, %v4012
      %4083 = vst.msk [vmem:[#allocation3 + $0xd0] sm:$0xff] %vm1864, %v4014
      %4084 = vst.msk [vmem:[#allocation3 + $0xd8] sm:$0xff] %vm1864, %v4016
      %4085 = vst.msk [vmem:[#allocation3 + $0xe0] sm:$0xff] %vm1864, %v4018
      %4086 = vst.msk [vmem:[#allocation3 + $0xe8] sm:$0xff] %vm1864, %v4020
      %4087 = vst.msk [vmem:[#allocation3 + $0xf0] sm:$0xff] %vm1864, %v4022
      %4088 = vst.msk [vmem:[#allocation3 + $0xf8] sm:$0xff] %vm1864, %v4024
      %v4089 = vld [vmem:[%s1510 + $0x2] sm:$0xff]
      %v4090 = vld [vmem:[%s1510 + $0xa] sm:$0xff]
      %v4091 = vld [vmem:[%s1510 + $0x1a] sm:$0xff]
      %v4092 = vld [vmem:[%s1510 + $0x22] sm:$0xff]
      %v4093 = vld [vmem:[%s1510 + $0x32] sm:$0xff]
      %v4094 = vld [vmem:[%s1510 + $0x3a] sm:$0xff]
      %v4095 = vld [vmem:[%s1510 + $0x4a] sm:$0xff]
      %v4096 = vld [vmem:[%s1510 + $0x52] sm:$0xff]
      %v4097 = vld [vmem:[%s1510 + $0x62] sm:$0xff]
      %v4098 = vld [vmem:[%s1510 + $0x6a] sm:$0xff]
      %v4099 = vld [vmem:[%s1510 + $0x7a] sm:$0xff]
      %v4100 = vld [vmem:[%s1510 + $0x82] sm:$0xff]
      %v4101 = vld [vmem:[%s1510 + $0x92] sm:$0xff]
      %v4102 = vld [vmem:[%s1510 + $0x9a] sm:$0xff]
      %v4103 = vld [vmem:[%s1510 + $0xaa] sm:$0xff]
      %v4104 = vld [vmem:[%s1510 + $0xb2] sm:$0xff]
      %v4105 = vld [vmem:[%s1510 + $0xc2] sm:$0xff]
      %v4106 = vld [vmem:[%s1510 + $0xca] sm:$0xff]
      %v4107 = vld [vmem:[%s1510 + $0xda] sm:$0xff]
      %v4108 = vld [vmem:[%s1510 + $0xe2] sm:$0xff]
      %v4109 = vld [vmem:[%s1510 + $0xf2] sm:$0xff]
      %v4110 = vld [vmem:[%s1510 + $0xfa] sm:$0xff]
      %v4111 = vld [vmem:[%s1510 + $0x10a] sm:$0xff]
      %v4112 = vld [vmem:[%s1510 + $0x112] sm:$0xff]
      %v4113 = vld [vmem:[%s1510 + $0x122] sm:$0xff]
      %v4114 = vld [vmem:[%s1510 + $0x12a] sm:$0xff]
      %v4115 = vld [vmem:[%s1510 + $0x13a] sm:$0xff]
      %v4116 = vld [vmem:[%s1510 + $0x142] sm:$0xff]
      %v4117 = vld [vmem:[%s1510 + $0x152] sm:$0xff]
      %v4118 = vld [vmem:[%s1510 + $0x15a] sm:$0xff]
      %v4119 = vld [vmem:[%s1510 + $0x16a] sm:$0xff]
      %v4120 = vld [vmem:[%s1510 + $0x172] sm:$0xff]
      %4153 = vrot.lane.b32.xlu0 %v4089, 64
      %v4154 = vpop.permute.xlu0 %4153
      %4155 = vrot.lane.b32.xlu0 %v4090, 64
      %v4156 = vpop.permute.xlu0 %4155
      %4157 = vrot.lane.b32.xlu0 %v4091, 64
      %v4158 = vpop.permute.xlu0 %4157
      %4159 = vrot.lane.b32.xlu0 %v4092, 64
      %v4160 = vpop.permute.xlu0 %4159
      %4161 = vrot.lane.b32.xlu0 %v4093, 64
      %v4162 = vpop.permute.xlu0 %4161
      %4163 = vrot.lane.b32.xlu0 %v4094, 64
      %v4164 = vpop.permute.xlu0 %4163
      %4165 = vrot.lane.b32.xlu0 %v4095, 64
      %v4166 = vpop.permute.xlu0 %4165
      %4167 = vrot.lane.b32.xlu0 %v4096, 64
      %v4168 = vpop.permute.xlu0 %4167
      %4169 = vrot.lane.b32.xlu0 %v4097, 64
      %v4170 = vpop.permute.xlu0 %4169
      %4171 = vrot.lane.b32.xlu0 %v4098, 64
      %v4172 = vpop.permute.xlu0 %4171
      %4173 = vrot.lane.b32.xlu0 %v4099, 64
      %v4174 = vpop.permute.xlu0 %4173
      %4175 = vrot.lane.b32.xlu0 %v4100, 64
      %v4176 = vpop.permute.xlu0 %4175
      %4177 = vrot.lane.b32.xlu0 %v4101, 64
      %v4178 = vpop.permute.xlu0 %4177
      %4179 = vrot.lane.b32.xlu0 %v4102, 64
      %v4180 = vpop.permute.xlu0 %4179
      %4181 = vrot.lane.b32.xlu0 %v4103, 64
      %v4182 = vpop.permute.xlu0 %4181
      %4183 = vrot.lane.b32.xlu0 %v4104, 64
      %v4184 = vpop.permute.xlu0 %4183
      %4185 = vrot.lane.b32.xlu0 %v4105, 64
      %v4186 = vpop.permute.xlu0 %4185
      %4187 = vrot.lane.b32.xlu0 %v4106, 64
      %v4188 = vpop.permute.xlu0 %4187
      %4189 = vrot.lane.b32.xlu0 %v4107, 64
      %v4190 = vpop.permute.xlu0 %4189
      %4191 = vrot.lane.b32.xlu0 %v4108, 64
      %v4192 = vpop.permute.xlu0 %4191
      %4193 = vrot.lane.b32.xlu0 %v4109, 64
      %v4194 = vpop.permute.xlu0 %4193
      %4195 = vrot.lane.b32.xlu0 %v4110, 64
      %v4196 = vpop.permute.xlu0 %4195
      %4197 = vrot.lane.b32.xlu0 %v4111, 64
      %v4198 = vpop.permute.xlu0 %4197
      %4199 = vrot.lane.b32.xlu0 %v4112, 64
      %v4200 = vpop.permute.xlu0 %4199
      %4201 = vrot.lane.b32.xlu0 %v4113, 64
      %v4202 = vpop.permute.xlu0 %4201
      %4203 = vrot.lane.b32.xlu0 %v4114, 64
      %v4204 = vpop.permute.xlu0 %4203
      %4205 = vrot.lane.b32.xlu0 %v4115, 64
      %v4206 = vpop.permute.xlu0 %4205
      %4207 = vrot.lane.b32.xlu0 %v4116, 64
      %v4208 = vpop.permute.xlu0 %4207
      %4209 = vrot.lane.b32.xlu0 %v4117, 64
      %v4210 = vpop.permute.xlu0 %4209
      %4211 = vrot.lane.b32.xlu0 %v4118, 64
      %v4212 = vpop.permute.xlu0 %4211
      %4213 = vrot.lane.b32.xlu0 %v4119, 64
      %v4214 = vpop.permute.xlu0 %4213
      %4215 = vrot.lane.b32.xlu0 %v4120, 64
      %v4216 = vpop.permute.xlu0 %4215
      %4249 = vst.msk [vmem:[#allocation3] sm:$0xff] %vm2057, %v4154
      %4250 = vst.msk [vmem:[#allocation3 + $0x8] sm:$0xff] %vm2057, %v4156
      %4251 = vst.msk [vmem:[#allocation3 + $0x10] sm:$0xff] %vm2057, %v4158
      %4252 = vst.msk [vmem:[#allocation3 + $0x18] sm:$0xff] %vm2057, %v4160
      %4253 = vst.msk [vmem:[#allocation3 + $0x20] sm:$0xff] %vm2057, %v4162
      %4254 = vst.msk [vmem:[#allocation3 + $0x28] sm:$0xff] %vm2057, %v4164
      %4255 = vst.msk [vmem:[#allocation3 + $0x30] sm:$0xff] %vm2057, %v4166
      %4256 = vst.msk [vmem:[#allocation3 + $0x38] sm:$0xff] %vm2057, %v4168
      %4257 = vst.msk [vmem:[#allocation3 + $0x40] sm:$0xff] %vm2057, %v4170
      %4258 = vst.msk [vmem:[#allocation3 + $0x48] sm:$0xff] %vm2057, %v4172
      %4259 = vst.msk [vmem:[#allocation3 + $0x50] sm:$0xff] %vm2057, %v4174
      %4260 = vst.msk [vmem:[#allocation3 + $0x58] sm:$0xff] %vm2057, %v4176
      %4261 = vst.msk [vmem:[#allocation3 + $0x60] sm:$0xff] %vm2057, %v4178
      %4262 = vst.msk [vmem:[#allocation3 + $0x68] sm:$0xff] %vm2057, %v4180
      %4263 = vst.msk [vmem:[#allocation3 + $0x70] sm:$0xff] %vm2057, %v4182
      %4264 = vst.msk [vmem:[#allocation3 + $0x78] sm:$0xff] %vm2057, %v4184
      %4265 = vst.msk [vmem:[#allocation3 + $0x80] sm:$0xff] %vm2057, %v4186
      %4266 = vst.msk [vmem:[#allocation3 + $0x88] sm:$0xff] %vm2057, %v4188
      %4267 = vst.msk [vmem:[#allocation3 + $0x90] sm:$0xff] %vm2057, %v4190
      %4268 = vst.msk [vmem:[#allocation3 + $0x98] sm:$0xff] %vm2057, %v4192
      %4269 = vst.msk [vmem:[#allocation3 + $0xa0] sm:$0xff] %vm2057, %v4194
      %4270 = vst.msk [vmem:[#allocation3 + $0xa8] sm:$0xff] %vm2057, %v4196
      %4271 = vst.msk [vmem:[#allocation3 + $0xb0] sm:$0xff] %vm2057, %v4198
      %4272 = vst.msk [vmem:[#allocation3 + $0xb8] sm:$0xff] %vm2057, %v4200
      %4273 = vst.msk [vmem:[#allocation3 + $0xc0] sm:$0xff] %vm2057, %v4202
      %4274 = vst.msk [vmem:[#allocation3 + $0xc8] sm:$0xff] %vm2057, %v4204
      %4275 = vst.msk [vmem:[#allocation3 + $0xd0] sm:$0xff] %vm2057, %v4206
      %4276 = vst.msk [vmem:[#allocation3 + $0xd8] sm:$0xff] %vm2057, %v4208
      %4277 = vst.msk [vmem:[#allocation3 + $0xe0] sm:$0xff] %vm2057, %v4210
      %4278 = vst.msk [vmem:[#allocation3 + $0xe8] sm:$0xff] %vm2057, %v4212
      %4279 = vst.msk [vmem:[#allocation3 + $0xf0] sm:$0xff] %vm2057, %v4214
      %4280 = vst.msk [vmem:[#allocation3 + $0xf8] sm:$0xff] %vm2057, %v4216
      %v4281 = vld [vmem:[#allocation3] sm:$0xff]
      %v4282 = vld [vmem:[#allocation3 + $0x8] sm:$0xff]
      %v4283 = vld [vmem:[#allocation3 + $0x10] sm:$0xff]
      %v4284 = vld [vmem:[#allocation3 + $0x18] sm:$0xff]
      %v4285 = vld [vmem:[#allocation3 + $0x20] sm:$0xff]
      %v4286 = vld [vmem:[#allocation3 + $0x28] sm:$0xff]
      %v4287 = vld [vmem:[#allocation3 + $0x30] sm:$0xff]
      %v4288 = vld [vmem:[#allocation3 + $0x38] sm:$0xff]
      %v4289 = vld [vmem:[#allocation3 + $0x40] sm:$0xff]
      %v4290 = vld [vmem:[#allocation3 + $0x48] sm:$0xff]
      %v4291 = vld [vmem:[#allocation3 + $0x50] sm:$0xff]
      %v4292 = vld [vmem:[#allocation3 + $0x58] sm:$0xff]
      %v4293 = vld [vmem:[#allocation3 + $0x60] sm:$0xff]
      %v4294 = vld [vmem:[#allocation3 + $0x68] sm:$0xff]
      %v4295 = vld [vmem:[#allocation3 + $0x70] sm:$0xff]
      %v4296 = vld [vmem:[#allocation3 + $0x78] sm:$0xff]
      %v4297 = vld [vmem:[#allocation3 + $0x80] sm:$0xff]
      %v4298 = vld [vmem:[#allocation3 + $0x88] sm:$0xff]
      %v4299 = vld [vmem:[#allocation3 + $0x90] sm:$0xff]
      %v4300 = vld [vmem:[#allocation3 + $0x98] sm:$0xff]
      %v4301 = vld [vmem:[#allocation3 + $0xa0] sm:$0xff]
      %v4302 = vld [vmem:[#allocation3 + $0xa8] sm:$0xff]
      %v4303 = vld [vmem:[#allocation3 + $0xb0] sm:$0xff]
      %v4304 = vld [vmem:[#allocation3 + $0xb8] sm:$0xff]
      %v4305 = vld [vmem:[#allocation3 + $0xc0] sm:$0xff]
      %v4306 = vld [vmem:[#allocation3 + $0xc8] sm:$0xff]
      %v4307 = vld [vmem:[#allocation3 + $0xd0] sm:$0xff]
      %v4308 = vld [vmem:[#allocation3 + $0xd8] sm:$0xff]
      %v4309 = vld [vmem:[#allocation3 + $0xe0] sm:$0xff]
      %v4310 = vld [vmem:[#allocation3 + $0xe8] sm:$0xff]
      %v4311 = vld [vmem:[#allocation3 + $0xf0] sm:$0xff]
      %v4312 = vld [vmem:[#allocation3 + $0xf8] sm:$0xff]
      %v4313 = vld [vmem:[%s3] sm:$0xff]
      %v4314 = vld [vmem:[%s3 + $0x8] sm:$0xff]
      %v4315 = vld [vmem:[%s3 + $0x10] sm:$0xff]
      %v4316 = vld [vmem:[%s3 + $0x18] sm:$0xff]
      %v4317 = vld [vmem:[%s3 + $0x20] sm:$0xff]
      %v4318 = vld [vmem:[%s3 + $0x28] sm:$0xff]
      %v4319 = vld [vmem:[%s3 + $0x30] sm:$0xff]
      %v4320 = vld [vmem:[%s3 + $0x38] sm:$0xff]
      %v4321 = vld [vmem:[%s3 + $0x40] sm:$0xff]
      %v4323 = vsel %vm2138, %v4281, 0
      %v4326 = vsel %vm2138, %v4282, 0
      %v4329 = vsel %vm2138, %v4283, 0
      %v4332 = vsel %vm2138, %v4284, 0
      %v4335 = vsel %vm2138, %v4285, 0
      %v4338 = vsel %vm2138, %v4286, 0
      %v4341 = vsel %vm2138, %v4287, 0
      %v4344 = vsel %vm2138, %v4288, 0
      %v4347 = vsel %vm2138, %v4289, 0
      %v4350 = vsel %vm2138, %v4290, 0
      %v4353 = vsel %vm2138, %v4291, 0
      %v4356 = vsel %vm2138, %v4292, 0
      %v4359 = vsel %vm2138, %v4293, 0
      %v4362 = vsel %vm2138, %v4294, 0
      %v4365 = vsel %vm2138, %v4295, 0
      %v4368 = vsel %vm2138, %v4296, 0
      %v4371 = vsel %vm2138, %v4297, 0
      %v4374 = vsel %vm2138, %v4298, 0
      %v4377 = vsel %vm2138, %v4299, 0
      %v4380 = vsel %vm2138, %v4300, 0
      %v4383 = vsel %vm2138, %v4301, 0
      %v4386 = vsel %vm2138, %v4302, 0
      %v4389 = vsel %vm2138, %v4303, 0
      %v4392 = vsel %vm2138, %v4304, 0
      %v4395 = vsel %vm2138, %v4305, 0
      %v4398 = vsel %vm2138, %v4306, 0
      %v4401 = vsel %vm2138, %v4307, 0
      %v4404 = vsel %vm2138, %v4308, 0
      %v4407 = vsel %vm2138, %v4309, 0
      %v4410 = vsel %vm2138, %v4310, 0
      %v4413 = vsel %vm2138, %v4311, 0
      %v4416 = vsel %vm2138, %v4312, 0
      %4418 = vmatprep.subr.mxu0 0.0
      %4419 = vmatpush1.msra.mxu0 0.0
      %4420 = vmatprep.subr.mxu0 0.0
      %4421 = vmatpush1.msra.mxu0 0.0
      %4422 = vmatprep.subr.mxu0 0.0
      %4423 = vmatpush1.msra.mxu0 0.0
      %4424 = vmatprep.subr.mxu0 0.0
      %4425 = vmatpush1.msra.mxu0 0.0
      %4426 = vmatprep.subr.mxu0 0.0
      %4427 = vmatpush1.msra.mxu0 0.0
      %4428 = vmatprep.subr.mxu0 0.0
      %4429 = vmatpush1.msra.mxu0 0.0
      %4430 = vmatprep.subr.mxu0 0.0
      %4431 = vmatpush1.msra.mxu0 0.0
      %4432 = vmatprep.subr.mxu0 0.0
      %4433 = vmatpush1.msra.mxu0 %v4321
      %4434 = vmatprep.subr.mxu0 0.0
      %4435 = vmatpush1.msra.mxu0 %v4320
      %4436 = vmatprep.subr.mxu0 0.0
      %4437 = vmatpush1.msra.mxu0 %v4319
      %4438 = vmatprep.subr.mxu0 0.0
      %4439 = vmatpush1.msra.mxu0 %v4318
      %4440 = vmatprep.subr.mxu0 0.0
      %4441 = vmatpush1.msra.mxu0 %v4317
      %4442 = vmatprep.subr.mxu0 0.0
      %4443 = vmatpush1.msra.mxu0 %v4316
      %4444 = vmatprep.subr.mxu0 0.0
      %4445 = vmatpush1.msra.mxu0 %v4315
      %4446 = vmatprep.subr.mxu0 0.0
      %4447 = vmatpush1.msra.mxu0 %v4314
      %4448 = vmatprep.subr.mxu0 0.0
      %4449 = vmatpush1.msra.mxu0 %v4313
      %4450 = vmatprep.subr.mxu0 0.0
      %4451 = vmatpush2.msra.mxu0 0.0
      %4452 = vmatprep.subr.mxu0 0.0
      %4453 = vmatpush2.msra.mxu0 0.0
      %4454 = vmatprep.subr.mxu0 0.0
      %4455 = vmatpush2.msra.mxu0 0.0
      %4456 = vmatprep.subr.mxu0 0.0
      %4457 = vmatpush2.msra.mxu0 0.0
      %4458 = vmatprep.subr.mxu0 0.0
      %4459 = vmatpush2.msra.mxu0 0.0
      %4460 = vmatprep.subr.mxu0 0.0
      %4461 = vmatpush2.msra.mxu0 0.0
      %4462 = vmatprep.subr.mxu0 0.0
      %4463 = vmatpush2.msra.mxu0 0.0
      %4464 = vmatprep.subr.mxu0 0.0
      %4465 = vmatpush2.msra.mxu0 0.0
      %4466 = vmatprep.subr.mxu0 0.0
      %4467 = vmatpush2.msra.mxu0 0.0
      %4468 = vmatprep.subr.mxu0 0.0
      %4469 = vmatpush2.msra.mxu0 0.0
      %4470 = vmatprep.subr.mxu0 0.0
      %4471 = vmatpush2.msra.mxu0 0.0
      %4472 = vmatprep.subr.mxu0 0.0
      %4473 = vmatpush2.msra.mxu0 0.0
      %4474 = vmatprep.subr.mxu0 0.0
      %4475 = vmatpush2.msra.mxu0 0.0
      %4476 = vmatprep.subr.mxu0 0.0
      %4477 = vmatpush2.msra.mxu0 0.0
      %4478 = vmatprep.subr.mxu0 0.0
      %4479 = vmatpush2.msra.mxu0 0.0
      %4480 = vmatprep.subr.mxu0 0.0
      %4481 = vmatpush2.msra.mxu0 0.0
      %4482 = vmatprep.mubr.f32.mxu0 0.0
      %4483 = vmatmul.mubr.f32.gmra.mxu0 %v4323
      %v4484 = vpop.f32.mrf.mxu0
      %v4485 = vadd.f32 0.0, %v4484
      %v4486 = vpop.f32.mrf.mxu0
      %4487 = vmatprep.mubr.f32.mxu0 0.0
      %4488 = vmatmul.mubr.f32.gmra.mxu0 %v4326
      %v4489 = vpop.f32.mrf.mxu0
      %v4490 = vadd.f32 0.0, %v4489
      %v4491 = vpop.f32.mrf.mxu0
      %4492 = vmatprep.mubr.f32.mxu0 0.0
      %4493 = vmatmul.mubr.f32.gmra.mxu0 %v4329
      %v4494 = vpop.f32.mrf.mxu0
      %v4495 = vadd.f32 0.0, %v4494
      %v4496 = vpop.f32.mrf.mxu0
      %4497 = vmatprep.mubr.f32.mxu0 0.0
      %4498 = vmatmul.mubr.f32.gmra.mxu0 %v4332
      %v4499 = vpop.f32.mrf.mxu0
      %v4500 = vadd.f32 0.0, %v4499
      %v4501 = vpop.f32.mrf.mxu0
      %4502 = vmatprep.mubr.f32.mxu0 0.0
      %4503 = vmatmul.mubr.f32.gmra.mxu0 %v4335
      %v4504 = vpop.f32.mrf.mxu0
      %v4505 = vadd.f32 0.0, %v4504
      %v4506 = vpop.f32.mrf.mxu0
      %4507 = vmatprep.mubr.f32.mxu0 0.0
      %4508 = vmatmul.mubr.f32.gmra.mxu0 %v4338
      %v4509 = vpop.f32.mrf.mxu0
      %v4510 = vadd.f32 0.0, %v4509
      %v4511 = vpop.f32.mrf.mxu0
      %4512 = vmatprep.mubr.f32.mxu0 0.0
      %4513 = vmatmul.mubr.f32.gmra.mxu0 %v4341
      %v4514 = vpop.f32.mrf.mxu0
      %v4515 = vadd.f32 0.0, %v4514
      %v4516 = vpop.f32.mrf.mxu0
      %4517 = vmatprep.mubr.f32.mxu0 0.0
      %4518 = vmatmul.mubr.f32.gmra.mxu0 %v4344
      %v4519 = vpop.f32.mrf.mxu0
      %v4520 = vadd.f32 0.0, %v4519
      %v4521 = vpop.f32.mrf.mxu0
      %4522 = vmatprep.mubr.f32.mxu0 0.0
      %4523 = vmatmul.mubr.f32.gmra.mxu0 %v4347
      %v4524 = vpop.f32.mrf.mxu0
      %v4525 = vadd.f32 0.0, %v4524
      %v4526 = vpop.f32.mrf.mxu0
      %4527 = vmatprep.mubr.f32.mxu0 0.0
      %4528 = vmatmul.mubr.f32.gmra.mxu0 %v4350
      %v4529 = vpop.f32.mrf.mxu0
      %v4530 = vadd.f32 0.0, %v4529
      %v4531 = vpop.f32.mrf.mxu0
      %4532 = vmatprep.mubr.f32.mxu0 0.0
      %4533 = vmatmul.mubr.f32.gmra.mxu0 %v4353
      %v4534 = vpop.f32.mrf.mxu0
      %v4535 = vadd.f32 0.0, %v4534
      %v4536 = vpop.f32.mrf.mxu0
      %4537 = vmatprep.mubr.f32.mxu0 0.0
      %4538 = vmatmul.mubr.f32.gmra.mxu0 %v4356
      %v4539 = vpop.f32.mrf.mxu0
      %v4540 = vadd.f32 0.0, %v4539
      %v4541 = vpop.f32.mrf.mxu0
      %4542 = vmatprep.mubr.f32.mxu0 0.0
      %4543 = vmatmul.mubr.f32.gmra.mxu0 %v4359
      %v4544 = vpop.f32.mrf.mxu0
      %v4545 = vadd.f32 0.0, %v4544
      %v4546 = vpop.f32.mrf.mxu0
      %4547 = vmatprep.mubr.f32.mxu0 0.0
      %4548 = vmatmul.mubr.f32.gmra.mxu0 %v4362
      %v4549 = vpop.f32.mrf.mxu0
      %v4550 = vadd.f32 0.0, %v4549
      %v4551 = vpop.f32.mrf.mxu0
      %4552 = vmatprep.mubr.f32.mxu0 0.0
      %4553 = vmatmul.mubr.f32.gmra.mxu0 %v4365
      %v4554 = vpop.f32.mrf.mxu0
      %v4555 = vadd.f32 0.0, %v4554
      %v4556 = vpop.f32.mrf.mxu0
      %4557 = vmatprep.mubr.f32.mxu0 0.0
      %4558 = vmatmul.mubr.f32.gmra.mxu0 %v4368
      %v4559 = vpop.f32.mrf.mxu0
      %v4560 = vadd.f32 0.0, %v4559
      %v4561 = vpop.f32.mrf.mxu0
      %4562 = vmatprep.mubr.f32.mxu0 0.0
      %4563 = vmatmul.mubr.f32.gmra.mxu0 %v4371
      %v4564 = vpop.f32.mrf.mxu0
      %v4565 = vadd.f32 0.0, %v4564
      %v4566 = vpop.f32.mrf.mxu0
      %4567 = vmatprep.mubr.f32.mxu0 0.0
      %4568 = vmatmul.mubr.f32.gmra.mxu0 %v4374
      %v4569 = vpop.f32.mrf.mxu0
      %v4570 = vadd.f32 0.0, %v4569
      %v4571 = vpop.f32.mrf.mxu0
      %4572 = vmatprep.mubr.f32.mxu0 0.0
      %4573 = vmatmul.mubr.f32.gmra.mxu0 %v4377
      %v4574 = vpop.f32.mrf.mxu0
      %v4575 = vadd.f32 0.0, %v4574
      %v4576 = vpop.f32.mrf.mxu0
      %4577 = vmatprep.mubr.f32.mxu0 0.0
      %4578 = vmatmul.mubr.f32.gmra.mxu0 %v4380
      %v4579 = vpop.f32.mrf.mxu0
      %v4580 = vadd.f32 0.0, %v4579
      %v4581 = vpop.f32.mrf.mxu0
      %4582 = vmatprep.mubr.f32.mxu0 0.0
      %4583 = vmatmul.mubr.f32.gmra.mxu0 %v4383
      %v4584 = vpop.f32.mrf.mxu0
      %v4585 = vadd.f32 0.0, %v4584
      %v4586 = vpop.f32.mrf.mxu0
      %4587 = vmatprep.mubr.f32.mxu0 0.0
      %4588 = vmatmul.mubr.f32.gmra.mxu0 %v4386
      %v4589 = vpop.f32.mrf.mxu0
      %v4590 = vadd.f32 0.0, %v4589
      %v4591 = vpop.f32.mrf.mxu0
      %4592 = vmatprep.mubr.f32.mxu0 0.0
      %4593 = vmatmul.mubr.f32.gmra.mxu0 %v4389
      %v4594 = vpop.f32.mrf.mxu0
      %v4595 = vadd.f32 0.0, %v4594
      %v4596 = vpop.f32.mrf.mxu0
      %4597 = vmatprep.mubr.f32.mxu0 0.0
      %4598 = vmatmul.mubr.f32.gmra.mxu0 %v4392
      %v4599 = vpop.f32.mrf.mxu0
      %v4600 = vadd.f32 0.0, %v4599
      %v4601 = vpop.f32.mrf.mxu0
      %4602 = vmatprep.mubr.f32.mxu0 0.0
      %4603 = vmatmul.mubr.f32.gmra.mxu0 %v4395
      %v4604 = vpop.f32.mrf.mxu0
      %v4605 = vadd.f32 0.0, %v4604
      %v4606 = vpop.f32.mrf.mxu0
      %4607 = vmatprep.mubr.f32.mxu0 0.0
      %4608 = vmatmul.mubr.f32.gmra.mxu0 %v4398
      %v4609 = vpop.f32.mrf.mxu0
      %v4610 = vadd.f32 0.0, %v4609
      %v4611 = vpop.f32.mrf.mxu0
      %4612 = vmatprep.mubr.f32.mxu0 0.0
      %4613 = vmatmul.mubr.f32.gmra.mxu0 %v4401
      %v4614 = vpop.f32.mrf.mxu0
      %v4615 = vadd.f32 0.0, %v4614
      %v4616 = vpop.f32.mrf.mxu0
      %4617 = vmatprep.mubr.f32.mxu0 0.0
      %4618 = vmatmul.mubr.f32.gmra.mxu0 %v4404
      %v4619 = vpop.f32.mrf.mxu0
      %v4620 = vadd.f32 0.0, %v4619
      %v4621 = vpop.f32.mrf.mxu0
      %4622 = vmatprep.mubr.f32.mxu0 0.0
      %4623 = vmatmul.mubr.f32.gmra.mxu0 %v4407
      %v4624 = vpop.f32.mrf.mxu0
      %v4625 = vadd.f32 0.0, %v4624
      %v4626 = vpop.f32.mrf.mxu0
      %4627 = vmatprep.mubr.f32.mxu0 0.0
      %4628 = vmatmul.mubr.f32.gmra.mxu0 %v4410
      %v4629 = vpop.f32.mrf.mxu0
      %v4630 = vadd.f32 0.0, %v4629
      %v4631 = vpop.f32.mrf.mxu0
      %4632 = vmatprep.mubr.f32.mxu0 0.0
      %4633 = vmatmul.mubr.f32.gmra.mxu0 %v4413
      %v4634 = vpop.f32.mrf.mxu0
      %v4635 = vadd.f32 0.0, %v4634
      %v4636 = vpop.f32.mrf.mxu0
      %4637 = vmatprep.mubr.f32.mxu0 0.0
      %4638 = vmatmul.mubr.f32.gmra.mxu0 %v4416
      %v4639 = vpop.f32.mrf.mxu0
      %v4640 = vadd.f32 0.0, %v4639
      %v4641 = vpop.f32.mrf.mxu0
      %4642 = vdwg.mxu0
      %v4643 = vld [vmem:[%s4] sm:$0xff]
      %v4644 = vld [vmem:[%s4 + $0x8] sm:$0xff]
      %v4645 = vld [vmem:[%s4 + $0x10] sm:$0xff]
      %v4646 = vld [vmem:[%s4 + $0x18] sm:$0xff]
      %v4647 = vld [vmem:[%s4 + $0x20] sm:$0xff]
      %v4648 = vld [vmem:[%s4 + $0x28] sm:$0xff]
      %v4649 = vld [vmem:[%s4 + $0x30] sm:$0xff]
      %v4650 = vld [vmem:[%s4 + $0x38] sm:$0xff]
      %v4651 = vld [vmem:[%s4 + $0x40] sm:$0xff]
      %4652 = vmatprep.subr.mxu0 0.0
      %4653 = vmatpush1.msra.mxu0 0.0
      %4654 = vmatprep.subr.mxu0 0.0
      %4655 = vmatpush1.msra.mxu0 0.0
      %4656 = vmatprep.subr.mxu0 0.0
      %4657 = vmatpush1.msra.mxu0 0.0
      %4658 = vmatprep.subr.mxu0 0.0
      %4659 = vmatpush1.msra.mxu0 0.0
      %4660 = vmatprep.subr.mxu0 0.0
      %4661 = vmatpush1.msra.mxu0 0.0
      %4662 = vmatprep.subr.mxu0 0.0
      %4663 = vmatpush1.msra.mxu0 0.0
      %4664 = vmatprep.subr.mxu0 0.0
      %4665 = vmatpush1.msra.mxu0 0.0
      %4666 = vmatprep.subr.mxu0 0.0
      %4667 = vmatpush1.msra.mxu0 %v4651
      %4668 = vmatprep.subr.mxu0 0.0
      %4669 = vmatpush1.msra.mxu0 %v4650
      %4670 = vmatprep.subr.mxu0 0.0
      %4671 = vmatpush1.msra.mxu0 %v4649
      %4672 = vmatprep.subr.mxu0 0.0
      %4673 = vmatpush1.msra.mxu0 %v4648
      %4674 = vmatprep.subr.mxu0 0.0
      %4675 = vmatpush1.msra.mxu0 %v4647
      %4676 = vmatprep.subr.mxu0 0.0
      %4677 = vmatpush1.msra.mxu0 %v4646
      %4678 = vmatprep.subr.mxu0 0.0
      %4679 = vmatpush1.msra.mxu0 %v4645
      %4680 = vmatprep.subr.mxu0 0.0
      %4681 = vmatpush1.msra.mxu0 %v4644
      %4682 = vmatprep.subr.mxu0 0.0
      %4683 = vmatpush1.msra.mxu0 %v4643
      %4684 = vmatprep.subr.mxu0 0.0
      %4685 = vmatpush2.msra.mxu0 0.0
      %4686 = vmatprep.subr.mxu0 0.0
      %4687 = vmatpush2.msra.mxu0 0.0
      %4688 = vmatprep.subr.mxu0 0.0
      %4689 = vmatpush2.msra.mxu0 0.0
      %4690 = vmatprep.subr.mxu0 0.0
      %4691 = vmatpush2.msra.mxu0 0.0
      %4692 = vmatprep.subr.mxu0 0.0
      %4693 = vmatpush2.msra.mxu0 0.0
      %4694 = vmatprep.subr.mxu0 0.0
      %4695 = vmatpush2.msra.mxu0 0.0
      %4696 = vmatprep.subr.mxu0 0.0
      %4697 = vmatpush2.msra.mxu0 0.0
      %4698 = vmatprep.subr.mxu0 0.0
      %4699 = vmatpush2.msra.mxu0 0.0
      %4700 = vmatprep.subr.mxu0 0.0
      %4701 = vmatpush2.msra.mxu0 0.0
      %4702 = vmatprep.subr.mxu0 0.0
      %4703 = vmatpush2.msra.mxu0 0.0
      %4704 = vmatprep.subr.mxu0 0.0
      %4705 = vmatpush2.msra.mxu0 0.0
      %4706 = vmatprep.subr.mxu0 0.0
      %4707 = vmatpush2.msra.mxu0 0.0
      %4708 = vmatprep.subr.mxu0 0.0
      %4709 = vmatpush2.msra.mxu0 0.0
      %4710 = vmatprep.subr.mxu0 0.0
      %4711 = vmatpush2.msra.mxu0 0.0
      %4712 = vmatprep.subr.mxu0 0.0
      %4713 = vmatpush2.msra.mxu0 0.0
      %4714 = vmatprep.subr.mxu0 0.0
      %4715 = vmatpush2.msra.mxu0 0.0
      %4716 = vmatprep.mubr.f32.mxu0 0.0
      %4717 = vmatmul.mubr.f32.gmra.mxu0 %v4323
      %v4718 = vpop.f32.mrf.mxu0
      %v4719 = vadd.f32 0.0, %v4718
      %v4720 = vpop.f32.mrf.mxu0
      %4721 = vmatprep.mubr.f32.mxu0 0.0
      %4722 = vmatmul.mubr.f32.gmra.mxu0 %v4326
      %v4723 = vpop.f32.mrf.mxu0
      %v4724 = vadd.f32 0.0, %v4723
      %v4725 = vpop.f32.mrf.mxu0
      %4726 = vmatprep.mubr.f32.mxu0 0.0
      %4727 = vmatmul.mubr.f32.gmra.mxu0 %v4329
      %v4728 = vpop.f32.mrf.mxu0
      %v4729 = vadd.f32 0.0, %v4728
      %v4730 = vpop.f32.mrf.mxu0
      %4731 = vmatprep.mubr.f32.mxu0 0.0
      %4732 = vmatmul.mubr.f32.gmra.mxu0 %v4332
      %v4733 = vpop.f32.mrf.mxu0
      %v4734 = vadd.f32 0.0, %v4733
      %v4735 = vpop.f32.mrf.mxu0
      %4736 = vmatprep.mubr.f32.mxu0 0.0
      %4737 = vmatmul.mubr.f32.gmra.mxu0 %v4335
      %v4738 = vpop.f32.mrf.mxu0
      %v4739 = vadd.f32 0.0, %v4738
      %v4740 = vpop.f32.mrf.mxu0
      %4741 = vmatprep.mubr.f32.mxu0 0.0
      %4742 = vmatmul.mubr.f32.gmra.mxu0 %v4338
      %v4743 = vpop.f32.mrf.mxu0
      %v4744 = vadd.f32 0.0, %v4743
      %v4745 = vpop.f32.mrf.mxu0
      %4746 = vmatprep.mubr.f32.mxu0 0.0
      %4747 = vmatmul.mubr.f32.gmra.mxu0 %v4341
      %v4748 = vpop.f32.mrf.mxu0
      %v4749 = vadd.f32 0.0, %v4748
      %v4750 = vpop.f32.mrf.mxu0
      %4751 = vmatprep.mubr.f32.mxu0 0.0
      %4752 = vmatmul.mubr.f32.gmra.mxu0 %v4344
      %v4753 = vpop.f32.mrf.mxu0
      %v4754 = vadd.f32 0.0, %v4753
      %v4755 = vpop.f32.mrf.mxu0
      %4756 = vmatprep.mubr.f32.mxu0 0.0
      %4757 = vmatmul.mubr.f32.gmra.mxu0 %v4347
      %v4758 = vpop.f32.mrf.mxu0
      %v4759 = vadd.f32 0.0, %v4758
      %v4760 = vpop.f32.mrf.mxu0
      %4761 = vmatprep.mubr.f32.mxu0 0.0
      %4762 = vmatmul.mubr.f32.gmra.mxu0 %v4350
      %v4763 = vpop.f32.mrf.mxu0
      %v4764 = vadd.f32 0.0, %v4763
      %v4765 = vpop.f32.mrf.mxu0
      %4766 = vmatprep.mubr.f32.mxu0 0.0
      %4767 = vmatmul.mubr.f32.gmra.mxu0 %v4353
      %v4768 = vpop.f32.mrf.mxu0
      %v4769 = vadd.f32 0.0, %v4768
      %v4770 = vpop.f32.mrf.mxu0
      %4771 = vmatprep.mubr.f32.mxu0 0.0
      %4772 = vmatmul.mubr.f32.gmra.mxu0 %v4356
      %v4773 = vpop.f32.mrf.mxu0
      %v4774 = vadd.f32 0.0, %v4773
      %v4775 = vpop.f32.mrf.mxu0
      %4776 = vmatprep.mubr.f32.mxu0 0.0
      %4777 = vmatmul.mubr.f32.gmra.mxu0 %v4359
      %v4778 = vpop.f32.mrf.mxu0
      %v4779 = vadd.f32 0.0, %v4778
      %v4780 = vpop.f32.mrf.mxu0
      %4781 = vmatprep.mubr.f32.mxu0 0.0
      %4782 = vmatmul.mubr.f32.gmra.mxu0 %v4362
      %v4783 = vpop.f32.mrf.mxu0
      %v4784 = vadd.f32 0.0, %v4783
      %v4785 = vpop.f32.mrf.mxu0
      %4786 = vmatprep.mubr.f32.mxu0 0.0
      %4787 = vmatmul.mubr.f32.gmra.mxu0 %v4365
      %v4788 = vpop.f32.mrf.mxu0
      %v4789 = vadd.f32 0.0, %v4788
      %v4790 = vpop.f32.mrf.mxu0
      %4791 = vmatprep.mubr.f32.mxu0 0.0
      %4792 = vmatmul.mubr.f32.gmra.mxu0 %v4368
      %v4793 = vpop.f32.mrf.mxu0
      %v4794 = vadd.f32 0.0, %v4793
      %v4795 = vpop.f32.mrf.mxu0
      %4796 = vmatprep.mubr.f32.mxu0 0.0
      %4797 = vmatmul.mubr.f32.gmra.mxu0 %v4371
      %v4798 = vpop.f32.mrf.mxu0
      %v4799 = vadd.f32 0.0, %v4798
      %v4800 = vpop.f32.mrf.mxu0
      %4801 = vmatprep.mubr.f32.mxu0 0.0
      %4802 = vmatmul.mubr.f32.gmra.mxu0 %v4374
      %v4803 = vpop.f32.mrf.mxu0
      %v4804 = vadd.f32 0.0, %v4803
      %v4805 = vpop.f32.mrf.mxu0
      %4806 = vmatprep.mubr.f32.mxu0 0.0
      %4807 = vmatmul.mubr.f32.gmra.mxu0 %v4377
      %v4808 = vpop.f32.mrf.mxu0
      %v4809 = vadd.f32 0.0, %v4808
      %v4810 = vpop.f32.mrf.mxu0
      %4811 = vmatprep.mubr.f32.mxu0 0.0
      %4812 = vmatmul.mubr.f32.gmra.mxu0 %v4380
      %v4813 = vpop.f32.mrf.mxu0
      %v4814 = vadd.f32 0.0, %v4813
      %v4815 = vpop.f32.mrf.mxu0
      %4816 = vmatprep.mubr.f32.mxu0 0.0
      %4817 = vmatmul.mubr.f32.gmra.mxu0 %v4383
      %v4818 = vpop.f32.mrf.mxu0
      %v4819 = vadd.f32 0.0, %v4818
      %v4820 = vpop.f32.mrf.mxu0
      %4821 = vmatprep.mubr.f32.mxu0 0.0
      %4822 = vmatmul.mubr.f32.gmra.mxu0 %v4386
      %v4823 = vpop.f32.mrf.mxu0
      %v4824 = vadd.f32 0.0, %v4823
      %v4825 = vpop.f32.mrf.mxu0
      %4826 = vmatprep.mubr.f32.mxu0 0.0
      %4827 = vmatmul.mubr.f32.gmra.mxu0 %v4389
      %v4828 = vpop.f32.mrf.mxu0
      %v4829 = vadd.f32 0.0, %v4828
      %v4830 = vpop.f32.mrf.mxu0
      %4831 = vmatprep.mubr.f32.mxu0 0.0
      %4832 = vmatmul.mubr.f32.gmra.mxu0 %v4392
      %v4833 = vpop.f32.mrf.mxu0
      %v4834 = vadd.f32 0.0, %v4833
      %v4835 = vpop.f32.mrf.mxu0
      %4836 = vmatprep.mubr.f32.mxu0 0.0
      %4837 = vmatmul.mubr.f32.gmra.mxu0 %v4395
      %v4838 = vpop.f32.mrf.mxu0
      %v4839 = vadd.f32 0.0, %v4838
      %v4840 = vpop.f32.mrf.mxu0
      %4841 = vmatprep.mubr.f32.mxu0 0.0
      %4842 = vmatmul.mubr.f32.gmra.mxu0 %v4398
      %v4843 = vpop.f32.mrf.mxu0
      %v4844 = vadd.f32 0.0, %v4843
      %v4845 = vpop.f32.mrf.mxu0
      %4846 = vmatprep.mubr.f32.mxu0 0.0
      %4847 = vmatmul.mubr.f32.gmra.mxu0 %v4401
      %v4848 = vpop.f32.mrf.mxu0
      %v4849 = vadd.f32 0.0, %v4848
      %v4850 = vpop.f32.mrf.mxu0
      %4851 = vmatprep.mubr.f32.mxu0 0.0
      %4852 = vmatmul.mubr.f32.gmra.mxu0 %v4404
      %v4853 = vpop.f32.mrf.mxu0
      %v4854 = vadd.f32 0.0, %v4853
      %v4855 = vpop.f32.mrf.mxu0
      %4856 = vmatprep.mubr.f32.mxu0 0.0
      %4857 = vmatmul.mubr.f32.gmra.mxu0 %v4407
      %v4858 = vpop.f32.mrf.mxu0
      %v4859 = vadd.f32 0.0, %v4858
      %v4860 = vpop.f32.mrf.mxu0
      %4861 = vmatprep.mubr.f32.mxu0 0.0
      %4862 = vmatmul.mubr.f32.gmra.mxu0 %v4410
      %v4863 = vpop.f32.mrf.mxu0
      %v4864 = vadd.f32 0.0, %v4863
      %v4865 = vpop.f32.mrf.mxu0
      %4866 = vmatprep.mubr.f32.mxu0 0.0
      %4867 = vmatmul.mubr.f32.gmra.mxu0 %v4413
      %v4868 = vpop.f32.mrf.mxu0
      %v4869 = vadd.f32 0.0, %v4868
      %v4870 = vpop.f32.mrf.mxu0
      %4871 = vmatprep.mubr.f32.mxu0 0.0
      %4872 = vmatmul.mubr.f32.gmra.mxu0 %v4416
      %v4873 = vpop.f32.mrf.mxu0
      %v4874 = vadd.f32 0.0, %v4873
      %v4875 = vpop.f32.mrf.mxu0
      %4876 = vdwg.mxu0
      %v4877 = vlaneseq
      %v4878 = vshrl.u32 %v4877, 7
      %v4879 = vsub.s32 0, %v4878
      %v4880 = vrot.slane %v2646, %v4879
      %v4881 = vmul.f32 %v4719, %v4880
      %v4882 = vmul.f32 %v4724, %v4880
      %v4883 = vmul.f32 %v4729, %v4880
      %v4884 = vmul.f32 %v4734, %v4880
      %v4885 = vmul.f32 %v4739, %v4880
      %v4886 = vmul.f32 %v4744, %v4880
      %v4887 = vmul.f32 %v4749, %v4880
      %v4888 = vmul.f32 %v4754, %v4880
      %v4889 = vmul.f32 %v4759, %v4880
      %v4890 = vmul.f32 %v4764, %v4880
      %v4891 = vmul.f32 %v4769, %v4880
      %v4892 = vmul.f32 %v4774, %v4880
      %v4893 = vmul.f32 %v4779, %v4880
      %v4894 = vmul.f32 %v4784, %v4880
      %v4895 = vmul.f32 %v4789, %v4880
      %v4896 = vmul.f32 %v4794, %v4880
      %v4897 = vmul.f32 %v4799, %v4880
      %v4898 = vmul.f32 %v4804, %v4880
      %v4899 = vmul.f32 %v4809, %v4880
      %v4900 = vmul.f32 %v4814, %v4880
      %v4901 = vmul.f32 %v4819, %v4880
      %v4902 = vmul.f32 %v4824, %v4880
      %v4903 = vmul.f32 %v4829, %v4880
      %v4904 = vmul.f32 %v4834, %v4880
      %v4905 = vmul.f32 %v4839, %v4880
      %v4906 = vmul.f32 %v4844, %v4880
      %v4907 = vmul.f32 %v4849, %v4880
      %v4908 = vmul.f32 %v4854, %v4880
      %v4909 = vmul.f32 %v4859, %v4880
      %v4910 = vmul.f32 %v4864, %v4880
      %v4911 = vmul.f32 %v4869, %v4880
      %v4912 = vmul.f32 %v4874, %v4880
      %v4913 = vld [vmem:[%s5] sm:$0x3]
      %vm4914 = vcmask 15360
      %v4916 = vsel %vm4914, %v4881, 0
      %v4919 = vsel %vm4914, %v4882, 0
      %v4922 = vsel %vm4914, %v4883, 0
      %v4925 = vsel %vm4914, %v4884, 0
      %v4928 = vsel %vm4914, %v4885, 0
      %v4931 = vsel %vm4914, %v4886, 0
      %v4934 = vsel %vm4914, %v4887, 0
      %v4937 = vsel %vm4914, %v4888, 0
      %v4940 = vsel %vm4914, %v4889, 0
      %v4943 = vsel %vm4914, %v4890, 0
      %v4946 = vsel %vm4914, %v4891, 0
      %v4949 = vsel %vm4914, %v4892, 0
      %v4952 = vsel %vm4914, %v4893, 0
      %v4955 = vsel %vm4914, %v4894, 0
      %v4958 = vsel %vm4914, %v4895, 0
      %v4961 = vsel %vm4914, %v4896, 0
      %v4964 = vsel %vm4914, %v4897, 0
      %v4967 = vsel %vm4914, %v4898, 0
      %v4970 = vsel %vm4914, %v4899, 0
      %v4973 = vsel %vm4914, %v4900, 0
      %v4976 = vsel %vm4914, %v4901, 0
      %v4979 = vsel %vm4914, %v4902, 0
      %v4982 = vsel %vm4914, %v4903, 0
      %v4985 = vsel %vm4914, %v4904, 0
      %v4988 = vsel %vm4914, %v4905, 0
      %v4991 = vsel %vm4914, %v4906, 0
      %v4994 = vsel %vm4914, %v4907, 0
      %v4997 = vsel %vm4914, %v4908, 0
      %v5000 = vsel %vm4914, %v4909, 0
      %v5003 = vsel %vm4914, %v4910, 0
      %v5006 = vsel %vm4914, %v4911, 0
      %v5009 = vsel %vm4914, %v4912, 0
      %vm5011 = vcmask 1041408
      %v5013 = vsel %vm5011, %v4913, 0
      %5015 = vmatprep.subr.mxu0 0.0
      %5016 = vmatpush1.msra.mxu0 0.0
      %5017 = vmatprep.subr.mxu0 0.0
      %5018 = vmatpush1.msra.mxu0 0.0
      %5019 = vmatprep.subr.mxu0 0.0
      %5020 = vmatpush1.msra.mxu0 0.0
      %5021 = vmatprep.subr.mxu0 0.0
      %5022 = vmatpush1.msra.mxu0 0.0
      %5023 = vmatprep.subr.mxu0 0.0
      %5024 = vmatpush1.msra.mxu0 0.0
      %5025 = vmatprep.subr.mxu0 0.0
      %5026 = vmatpush1.msra.mxu0 0.0
      %5027 = vmatprep.subr.mxu0 0.0
      %5028 = vmatpush1.msra.mxu0 0.0
      %5029 = vmatprep.subr.mxu0 0.0
      %5030 = vmatpush1.msra.mxu0 0.0
      %5031 = vmatprep.subr.mxu0 0.0
      %5032 = vmatpush1.msra.mxu0 0.0
      %5033 = vmatprep.subr.mxu0 0.0
      %5034 = vmatpush1.msra.mxu0 0.0
      %5035 = vmatprep.subr.mxu0 0.0
      %5036 = vmatpush1.msra.mxu0 0.0
      %5037 = vmatprep.subr.mxu0 0.0
      %5038 = vmatpush1.msra.mxu0 0.0
      %5039 = vmatprep.subr.mxu0 0.0
      %5040 = vmatpush1.msra.mxu0 0.0
      %5041 = vmatprep.subr.mxu0 0.0
      %5042 = vmatpush1.msra.mxu0 0.0
      %5043 = vmatprep.subr.mxu0 0.0
      %5044 = vmatpush1.msra.mxu0 0.0
      %5045 = vmatprep.subr.mxu0 0.0
      %5046 = vmatpush1.msra.mxu0 %v5013
      %5047 = vmatprep.subr.mxu0 0.0
      %5048 = vmatpush2.msra.mxu0 0.0
      %5049 = vmatprep.subr.mxu0 0.0
      %5050 = vmatpush2.msra.mxu0 0.0
      %5051 = vmatprep.subr.mxu0 0.0
      %5052 = vmatpush2.msra.mxu0 0.0
      %5053 = vmatprep.subr.mxu0 0.0
      %5054 = vmatpush2.msra.mxu0 0.0
      %5055 = vmatprep.subr.mxu0 0.0
      %5056 = vmatpush2.msra.mxu0 0.0
      %5057 = vmatprep.subr.mxu0 0.0
      %5058 = vmatpush2.msra.mxu0 0.0
      %5059 = vmatprep.subr.mxu0 0.0
      %5060 = vmatpush2.msra.mxu0 0.0
      %5061 = vmatprep.subr.mxu0 0.0
      %5062 = vmatpush2.msra.mxu0 0.0
      %5063 = vmatprep.subr.mxu0 0.0
      %5064 = vmatpush2.msra.mxu0 0.0
      %5065 = vmatprep.subr.mxu0 0.0
      %5066 = vmatpush2.msra.mxu0 0.0
      %5067 = vmatprep.subr.mxu0 0.0
      %5068 = vmatpush2.msra.mxu0 0.0
      %5069 = vmatprep.subr.mxu0 0.0
      %5070 = vmatpush2.msra.mxu0 0.0
      %5071 = vmatprep.subr.mxu0 0.0
      %5072 = vmatpush2.msra.mxu0 0.0
      %5073 = vmatprep.subr.mxu0 0.0
      %5074 = vmatpush2.msra.mxu0 0.0
      %5075 = vmatprep.subr.mxu0 0.0
      %5076 = vmatpush2.msra.mxu0 0.0
      %5077 = vmatprep.subr.mxu0 0.0
      %5078 = vmatpush2.msra.mxu0 0.0
      %5079 = vmatprep.mubr.f32.mxu0 0.0
      %5080 = vmatmul.mubr.f32.gmra.mxu0 %v4916
      %v5081 = vpop.f32.mrf.mxu0
      %v5082 = vadd.f32 0.0, %v5081
      %v5083 = vpop.f32.mrf.mxu0
      %5084 = vmatprep.mubr.f32.mxu0 0.0
      %5085 = vmatmul.mubr.f32.gmra.mxu0 %v4919
      %v5086 = vpop.f32.mrf.mxu0
      %v5087 = vadd.f32 0.0, %v5086
      %v5088 = vpop.f32.mrf.mxu0
      %5089 = vmatprep.mubr.f32.mxu0 0.0
      %5090 = vmatmul.mubr.f32.gmra.mxu0 %v4922
      %v5091 = vpop.f32.mrf.mxu0
      %v5092 = vadd.f32 0.0, %v5091
      %v5093 = vpop.f32.mrf.mxu0
      %5094 = vmatprep.mubr.f32.mxu0 0.0
      %5095 = vmatmul.mubr.f32.gmra.mxu0 %v4925
      %v5096 = vpop.f32.mrf.mxu0
      %v5097 = vadd.f32 0.0, %v5096
      %v5098 = vpop.f32.mrf.mxu0
      %5099 = vmatprep.mubr.f32.mxu0 0.0
      %5100 = vmatmul.mubr.f32.gmra.mxu0 %v4928
      %v5101 = vpop.f32.mrf.mxu0
      %v5102 = vadd.f32 0.0, %v5101
      %v5103 = vpop.f32.mrf.mxu0
      %5104 = vmatprep.mubr.f32.mxu0 0.0
      %5105 = vmatmul.mubr.f32.gmra.mxu0 %v4931
      %v5106 = vpop.f32.mrf.mxu0
      %v5107 = vadd.f32 0.0, %v5106
      %v5108 = vpop.f32.mrf.mxu0
      %5109 = vmatprep.mubr.f32.mxu0 0.0
      %5110 = vmatmul.mubr.f32.gmra.mxu0 %v4934
      %v5111 = vpop.f32.mrf.mxu0
      %v5112 = vadd.f32 0.0, %v5111
      %v5113 = vpop.f32.mrf.mxu0
      %5114 = vmatprep.mubr.f32.mxu0 0.0
      %5115 = vmatmul.mubr.f32.gmra.mxu0 %v4937
      %v5116 = vpop.f32.mrf.mxu0
      %v5117 = vadd.f32 0.0, %v5116
      %v5118 = vpop.f32.mrf.mxu0
      %5119 = vmatprep.mubr.f32.mxu0 0.0
      %5120 = vmatmul.mubr.f32.gmra.mxu0 %v4940
      %v5121 = vpop.f32.mrf.mxu0
      %v5122 = vadd.f32 0.0, %v5121
      %v5123 = vpop.f32.mrf.mxu0
      %5124 = vmatprep.mubr.f32.mxu0 0.0
      %5125 = vmatmul.mubr.f32.gmra.mxu0 %v4943
      %v5126 = vpop.f32.mrf.mxu0
      %v5127 = vadd.f32 0.0, %v5126
      %v5128 = vpop.f32.mrf.mxu0
      %5129 = vmatprep.mubr.f32.mxu0 0.0
      %5130 = vmatmul.mubr.f32.gmra.mxu0 %v4946
      %v5131 = vpop.f32.mrf.mxu0
      %v5132 = vadd.f32 0.0, %v5131
      %v5133 = vpop.f32.mrf.mxu0
      %5134 = vmatprep.mubr.f32.mxu0 0.0
      %5135 = vmatmul.mubr.f32.gmra.mxu0 %v4949
      %v5136 = vpop.f32.mrf.mxu0
      %v5137 = vadd.f32 0.0, %v5136
      %v5138 = vpop.f32.mrf.mxu0
      %5139 = vmatprep.mubr.f32.mxu0 0.0
      %5140 = vmatmul.mubr.f32.gmra.mxu0 %v4952
      %v5141 = vpop.f32.mrf.mxu0
      %v5142 = vadd.f32 0.0, %v5141
      %v5143 = vpop.f32.mrf.mxu0
      %5144 = vmatprep.mubr.f32.mxu0 0.0
      %5145 = vmatmul.mubr.f32.gmra.mxu0 %v4955
      %v5146 = vpop.f32.mrf.mxu0
      %v5147 = vadd.f32 0.0, %v5146
      %v5148 = vpop.f32.mrf.mxu0
      %5149 = vmatprep.mubr.f32.mxu0 0.0
      %5150 = vmatmul.mubr.f32.gmra.mxu0 %v4958
      %v5151 = vpop.f32.mrf.mxu0
      %v5152 = vadd.f32 0.0, %v5151
      %v5153 = vpop.f32.mrf.mxu0
      %5154 = vmatprep.mubr.f32.mxu0 0.0
      %5155 = vmatmul.mubr.f32.gmra.mxu0 %v4961
      %v5156 = vpop.f32.mrf.mxu0
      %v5157 = vadd.f32 0.0, %v5156
      %v5158 = vpop.f32.mrf.mxu0
      %5159 = vmatprep.mubr.f32.mxu0 0.0
      %5160 = vmatmul.mubr.f32.gmra.mxu0 %v4964
      %v5161 = vpop.f32.mrf.mxu0
      %v5162 = vadd.f32 0.0, %v5161
      %v5163 = vpop.f32.mrf.mxu0
      %5164 = vmatprep.mubr.f32.mxu0 0.0
      %5165 = vmatmul.mubr.f32.gmra.mxu0 %v4967
      %v5166 = vpop.f32.mrf.mxu0
      %v5167 = vadd.f32 0.0, %v5166
      %v5168 = vpop.f32.mrf.mxu0
      %5169 = vmatprep.mubr.f32.mxu0 0.0
      %5170 = vmatmul.mubr.f32.gmra.mxu0 %v4970
      %v5171 = vpop.f32.mrf.mxu0
      %v5172 = vadd.f32 0.0, %v5171
      %v5173 = vpop.f32.mrf.mxu0
      %5174 = vmatprep.mubr.f32.mxu0 0.0
      %5175 = vmatmul.mubr.f32.gmra.mxu0 %v4973
      %v5176 = vpop.f32.mrf.mxu0
      %v5177 = vadd.f32 0.0, %v5176
      %v5178 = vpop.f32.mrf.mxu0
      %5179 = vmatprep.mubr.f32.mxu0 0.0
      %5180 = vmatmul.mubr.f32.gmra.mxu0 %v4976
      %v5181 = vpop.f32.mrf.mxu0
      %v5182 = vadd.f32 0.0, %v5181
      %v5183 = vpop.f32.mrf.mxu0
      %5184 = vmatprep.mubr.f32.mxu0 0.0
      %5185 = vmatmul.mubr.f32.gmra.mxu0 %v4979
      %v5186 = vpop.f32.mrf.mxu0
      %v5187 = vadd.f32 0.0, %v5186
      %v5188 = vpop.f32.mrf.mxu0
      %5189 = vmatprep.mubr.f32.mxu0 0.0
      %5190 = vmatmul.mubr.f32.gmra.mxu0 %v4982
      %v5191 = vpop.f32.mrf.mxu0
      %v5192 = vadd.f32 0.0, %v5191
      %v5193 = vpop.f32.mrf.mxu0
      %5194 = vmatprep.mubr.f32.mxu0 0.0
      %5195 = vmatmul.mubr.f32.gmra.mxu0 %v4985
      %v5196 = vpop.f32.mrf.mxu0
      %v5197 = vadd.f32 0.0, %v5196
      %v5198 = vpop.f32.mrf.mxu0
      %5199 = vmatprep.mubr.f32.mxu0 0.0
      %5200 = vmatmul.mubr.f32.gmra.mxu0 %v4988
      %v5201 = vpop.f32.mrf.mxu0
      %v5202 = vadd.f32 0.0, %v5201
      %v5203 = vpop.f32.mrf.mxu0
      %5204 = vmatprep.mubr.f32.mxu0 0.0
      %5205 = vmatmul.mubr.f32.gmra.mxu0 %v4991
      %v5206 = vpop.f32.mrf.mxu0
      %v5207 = vadd.f32 0.0, %v5206
      %v5208 = vpop.f32.mrf.mxu0
      %5209 = vmatprep.mubr.f32.mxu0 0.0
      %5210 = vmatmul.mubr.f32.gmra.mxu0 %v4994
      %v5211 = vpop.f32.mrf.mxu0
      %v5212 = vadd.f32 0.0, %v5211
      %v5213 = vpop.f32.mrf.mxu0
      %5214 = vmatprep.mubr.f32.mxu0 0.0
      %5215 = vmatmul.mubr.f32.gmra.mxu0 %v4997
      %v5216 = vpop.f32.mrf.mxu0
      %v5217 = vadd.f32 0.0, %v5216
      %v5218 = vpop.f32.mrf.mxu0
      %5219 = vmatprep.mubr.f32.mxu0 0.0
      %5220 = vmatmul.mubr.f32.gmra.mxu0 %v5000
      %v5221 = vpop.f32.mrf.mxu0
      %v5222 = vadd.f32 0.0, %v5221
      %v5223 = vpop.f32.mrf.mxu0
      %5224 = vmatprep.mubr.f32.mxu0 0.0
      %5225 = vmatmul.mubr.f32.gmra.mxu0 %v5003
      %v5226 = vpop.f32.mrf.mxu0
      %v5227 = vadd.f32 0.0, %v5226
      %v5228 = vpop.f32.mrf.mxu0
      %5229 = vmatprep.mubr.f32.mxu0 0.0
      %5230 = vmatmul.mubr.f32.gmra.mxu0 %v5006
      %v5231 = vpop.f32.mrf.mxu0
      %v5232 = vadd.f32 0.0, %v5231
      %v5233 = vpop.f32.mrf.mxu0
      %5234 = vmatprep.mubr.f32.mxu0 0.0
      %5235 = vmatmul.mubr.f32.gmra.mxu0 %v5009
      %v5236 = vpop.f32.mrf.mxu0
      %v5237 = vadd.f32 0.0, %v5236
      %v5238 = vpop.f32.mrf.mxu0
      %5239 = vdwg.mxu0
      %v5240 = vld [vmem:[%s9] sm:$0x1]
      %v5242 = vlaneseq
      %v5243 = vshrl.u32 %v5242, 7
      %v5244 = vsub.s32 0, %v5243
      %v5245 = vrot.slane %v5240, %v5244
      %v5247 = vadd.f32 %v5245, %v416
      %v5248 = vadd.f32 %v5245, %v417
      %v5249 = vadd.f32 %v5245, %v418
      %v5250 = vadd.f32 %v5245, %v419
      %v5251 = vadd.f32 %v5245, %v420
      %v5252 = vadd.f32 %v5245, %v421
      %v5253 = vadd.f32 %v5245, %v422
      %v5254 = vadd.f32 %v5245, %v423
      %v5255 = vadd.f32 %v5245, %v424
      %v5256 = vadd.f32 %v5245, %v425
      %v5257 = vadd.f32 %v5245, %v426
      %v5258 = vadd.f32 %v5245, %v427
      %v5259 = vadd.f32 %v5245, %v428
      %v5260 = vadd.f32 %v5245, %v429
      %v5261 = vadd.f32 %v5245, %v430
      %v5262 = vadd.f32 %v5245, %v431
      %v5263 = vadd.f32 %v5245, %v432
      %v5264 = vadd.f32 %v5245, %v433
      %v5265 = vadd.f32 %v5245, %v434
      %v5266 = vadd.f32 %v5245, %v435
      %v5267 = vadd.f32 %v5245, %v436
      %v5268 = vadd.f32 %v5245, %v437
      %v5269 = vadd.f32 %v5245, %v438
      %v5270 = vadd.f32 %v5245, %v439
      %v5271 = vadd.f32 %v5245, %v440
      %v5272 = vadd.f32 %v5245, %v441
      %v5273 = vadd.f32 %v5245, %v442
      %v5274 = vadd.f32 %v5245, %v443
      %v5275 = vadd.f32 %v5245, %v444
      %v5276 = vadd.f32 %v5245, %v445
      %v5277 = vadd.f32 %v5245, %v446
      %v5278 = vadd.f32 %v5245, %v447
      %v5279 = vadd.f32 %v4485, %v5082
      %v5280 = vadd.f32 %v4490, %v5087
      %v5281 = vadd.f32 %v4495, %v5092
      %v5282 = vadd.f32 %v4500, %v5097
      %v5283 = vadd.f32 %v4505, %v5102
      %v5284 = vadd.f32 %v4510, %v5107
      %v5285 = vadd.f32 %v4515, %v5112
      %v5286 = vadd.f32 %v4520, %v5117
      %v5287 = vadd.f32 %v4525, %v5122
      %v5288 = vadd.f32 %v4530, %v5127
      %v5289 = vadd.f32 %v4535, %v5132
      %v5290 = vadd.f32 %v4540, %v5137
      %v5291 = vadd.f32 %v4545, %v5142
      %v5292 = vadd.f32 %v4550, %v5147
      %v5293 = vadd.f32 %v4555, %v5152
      %v5294 = vadd.f32 %v4560, %v5157
      %v5295 = vadd.f32 %v4565, %v5162
      %v5296 = vadd.f32 %v4570, %v5167
      %v5297 = vadd.f32 %v4575, %v5172
      %v5298 = vadd.f32 %v4580, %v5177
      %v5299 = vadd.f32 %v4585, %v5182
      %v5300 = vadd.f32 %v4590, %v5187
      %v5301 = vadd.f32 %v4595, %v5192
      %v5302 = vadd.f32 %v4600, %v5197
      %v5303 = vadd.f32 %v4605, %v5202
      %v5304 = vadd.f32 %v4610, %v5207
      %v5305 = vadd.f32 %v4615, %v5212
      %v5306 = vadd.f32 %v4620, %v5217
      %v5307 = vadd.f32 %v4625, %v5222
      %v5308 = vadd.f32 %v4630, %v5227
      %v5309 = vadd.f32 %v4635, %v5232
      %v5310 = vadd.f32 %v4640, %v5237
      %v5311 = vadd.f32 %v5279, %v5247
      %v5312 = vadd.f32 %v5280, %v5248
      %v5313 = vadd.f32 %v5281, %v5249
      %v5314 = vadd.f32 %v5282, %v5250
      %v5315 = vadd.f32 %v5283, %v5251
      %v5316 = vadd.f32 %v5284, %v5252
      %v5317 = vadd.f32 %v5285, %v5253
      %v5318 = vadd.f32 %v5286, %v5254
      %v5319 = vadd.f32 %v5287, %v5255
      %v5320 = vadd.f32 %v5288, %v5256
      %v5321 = vadd.f32 %v5289, %v5257
      %v5322 = vadd.f32 %v5290, %v5258
      %v5323 = vadd.f32 %v5291, %v5259
      %v5324 = vadd.f32 %v5292, %v5260
      %v5325 = vadd.f32 %v5293, %v5261
      %v5326 = vadd.f32 %v5294, %v5262
      %v5327 = vadd.f32 %v5295, %v5263
      %v5328 = vadd.f32 %v5296, %v5264
      %v5329 = vadd.f32 %v5297, %v5265
      %v5330 = vadd.f32 %v5298, %v5266
      %v5331 = vadd.f32 %v5299, %v5267
      %v5332 = vadd.f32 %v5300, %v5268
      %v5333 = vadd.f32 %v5301, %v5269
      %v5334 = vadd.f32 %v5302, %v5270
      %v5335 = vadd.f32 %v5303, %v5271
      %v5336 = vadd.f32 %v5304, %v5272
      %v5337 = vadd.f32 %v5305, %v5273
      %v5338 = vadd.f32 %v5306, %v5274
      %v5339 = vadd.f32 %v5307, %v5275
      %v5340 = vadd.f32 %v5308, %v5276
      %v5341 = vadd.f32 %v5309, %v5277
      %v5342 = vadd.f32 %v5310, %v5278
      %v5343 = vmax.f32 %v5311, 0.0
      %v5344 = vmax.f32 %v5312, 0.0
      %v5345 = vmax.f32 %v5313, 0.0
      %v5346 = vmax.f32 %v5314, 0.0
      %v5347 = vmax.f32 %v5315, 0.0
      %v5348 = vmax.f32 %v5316, 0.0
      %v5349 = vmax.f32 %v5317, 0.0
      %v5350 = vmax.f32 %v5318, 0.0
      %v5351 = vmax.f32 %v5319, 0.0
      %v5352 = vmax.f32 %v5320, 0.0
      %v5353 = vmax.f32 %v5321, 0.0
      %v5354 = vmax.f32 %v5322, 0.0
      %v5355 = vmax.f32 %v5323, 0.0
      %v5356 = vmax.f32 %v5324, 0.0
      %v5357 = vmax.f32 %v5325, 0.0
      %v5358 = vmax.f32 %v5326, 0.0
      %v5359 = vmax.f32 %v5327, 0.0
      %v5360 = vmax.f32 %v5328, 0.0
      %v5361 = vmax.f32 %v5329, 0.0
      %v5362 = vmax.f32 %v5330, 0.0
      %v5363 = vmax.f32 %v5331, 0.0
      %v5364 = vmax.f32 %v5332, 0.0
      %v5365 = vmax.f32 %v5333, 0.0
      %v5366 = vmax.f32 %v5334, 0.0
      %v5367 = vmax.f32 %v5335, 0.0
      %v5368 = vmax.f32 %v5336, 0.0
      %v5369 = vmax.f32 %v5337, 0.0
      %v5370 = vmax.f32 %v5338, 0.0
      %v5371 = vmax.f32 %v5339, 0.0
      %v5372 = vmax.f32 %v5340, 0.0
      %v5373 = vmax.f32 %v5341, 0.0
      %v5374 = vmax.f32 %v5342, 0.0
      %5375 = vst.msk [vmem:[%s359] sm:$0xff] %vm360, %v5343
      %5376 = vst.msk [vmem:[%s359 + $0x8] sm:$0xff] %vm360, %v5344
      %5377 = vst.msk [vmem:[%s359 + $0x10] sm:$0xff] %vm360, %v5345
      %5378 = vst.msk [vmem:[%s359 + $0x18] sm:$0xff] %vm360, %v5346
      %5379 = vst.msk [vmem:[%s359 + $0x20] sm:$0xff] %vm360, %v5347
      %5380 = vst.msk [vmem:[%s359 + $0x28] sm:$0xff] %vm360, %v5348
      %5381 = vst.msk [vmem:[%s359 + $0x30] sm:$0xff] %vm360, %v5349
      %5382 = vst.msk [vmem:[%s359 + $0x38] sm:$0xff] %vm360, %v5350
      %5383 = vst.msk [vmem:[%s359 + $0x40] sm:$0xff] %vm360, %v5351
      %5384 = vst.msk [vmem:[%s359 + $0x48] sm:$0xff] %vm360, %v5352
      %5385 = vst.msk [vmem:[%s359 + $0x50] sm:$0xff] %vm360, %v5353
      %5386 = vst.msk [vmem:[%s359 + $0x58] sm:$0xff] %vm360, %v5354
      %5387 = vst.msk [vmem:[%s359 + $0x60] sm:$0xff] %vm360, %v5355
      %5388 = vst.msk [vmem:[%s359 + $0x68] sm:$0xff] %vm360, %v5356
      %5389 = vst.msk [vmem:[%s359 + $0x70] sm:$0xff] %vm360, %v5357
      %5390 = vst.msk [vmem:[%s359 + $0x78] sm:$0xff] %vm360, %v5358
      %5391 = vst.msk [vmem:[%s359 + $0x80] sm:$0xff] %vm360, %v5359
      %5392 = vst.msk [vmem:[%s359 + $0x88] sm:$0xff] %vm360, %v5360
      %5393 = vst.msk [vmem:[%s359 + $0x90] sm:$0xff] %vm360, %v5361
      %5394 = vst.msk [vmem:[%s359 + $0x98] sm:$0xff] %vm360, %v5362
      %5395 = vst.msk [vmem:[%s359 + $0xa0] sm:$0xff] %vm360, %v5363
      %5396 = vst.msk [vmem:[%s359 + $0xa8] sm:$0xff] %vm360, %v5364
      %5397 = vst.msk [vmem:[%s359 + $0xb0] sm:$0xff] %vm360, %v5365
      %5398 = vst.msk [vmem:[%s359 + $0xb8] sm:$0xff] %vm360, %v5366
      %5399 = vst.msk [vmem:[%s359 + $0xc0] sm:$0xff] %vm360, %v5367
      %5400 = vst.msk [vmem:[%s359 + $0xc8] sm:$0xff] %vm360, %v5368
      %5401 = vst.msk [vmem:[%s359 + $0xd0] sm:$0xff] %vm360, %v5369
      %5402 = vst.msk [vmem:[%s359 + $0xd8] sm:$0xff] %vm360, %v5370
      %5403 = vst.msk [vmem:[%s359 + $0xe0] sm:$0xff] %vm360, %v5371
      %5404 = vst.msk [vmem:[%s359 + $0xe8] sm:$0xff] %vm360, %v5372
      %5405 = vst.msk [vmem:[%s359 + $0xf0] sm:$0xff] %vm360, %v5373
      %5406 = vst.msk [vmem:[%s359 + $0xf8] sm:$0xff] %vm360, %v5374
      %v5407 = vadd.f32 %v4485, %v5247
      %v5408 = vadd.f32 %v4490, %v5248
      %v5409 = vadd.f32 %v4495, %v5249
      %v5410 = vadd.f32 %v4500, %v5250
      %v5411 = vadd.f32 %v4505, %v5251
      %v5412 = vadd.f32 %v4510, %v5252
      %v5413 = vadd.f32 %v4515, %v5253
      %v5414 = vadd.f32 %v4520, %v5254
      %v5415 = vadd.f32 %v4525, %v5255
      %v5416 = vadd.f32 %v4530, %v5256
      %v5417 = vadd.f32 %v4535, %v5257
      %v5418 = vadd.f32 %v4540, %v5258
      %v5419 = vadd.f32 %v4545, %v5259
      %v5420 = vadd.f32 %v4550, %v5260
      %v5421 = vadd.f32 %v4555, %v5261
      %v5422 = vadd.f32 %v4560, %v5262
      %v5423 = vadd.f32 %v4565, %v5263
      %v5424 = vadd.f32 %v4570, %v5264
      %v5425 = vadd.f32 %v4575, %v5265
      %v5426 = vadd.f32 %v4580, %v5266
      %v5427 = vadd.f32 %v4585, %v5267
      %v5428 = vadd.f32 %v4590, %v5268
      %v5429 = vadd.f32 %v4595, %v5269
      %v5430 = vadd.f32 %v4600, %v5270
      %v5431 = vadd.f32 %v4605, %v5271
      %v5432 = vadd.f32 %v4610, %v5272
      %v5433 = vadd.f32 %v4615, %v5273
      %v5434 = vadd.f32 %v4620, %v5274
      %v5435 = vadd.f32 %v4625, %v5275
      %v5436 = vadd.f32 %v4630, %v5276
      %v5437 = vadd.f32 %v4635, %v5277
      %v5438 = vadd.f32 %v4640, %v5278
      %v5439 = vmax.f32 %v5407, 0.0
      %v5440 = vmax.f32 %v5408, 0.0
      %v5441 = vmax.f32 %v5409, 0.0
      %v5442 = vmax.f32 %v5410, 0.0
      %v5443 = vmax.f32 %v5411, 0.0
      %v5444 = vmax.f32 %v5412, 0.0
      %v5445 = vmax.f32 %v5413, 0.0
      %v5446 = vmax.f32 %v5414, 0.0
      %v5447 = vmax.f32 %v5415, 0.0
      %v5448 = vmax.f32 %v5416, 0.0
      %v5449 = vmax.f32 %v5417, 0.0
      %v5450 = vmax.f32 %v5418, 0.0
      %v5451 = vmax.f32 %v5419, 0.0
      %v5452 = vmax.f32 %v5420, 0.0
      %v5453 = vmax.f32 %v5421, 0.0
      %v5454 = vmax.f32 %v5422, 0.0
      %v5455 = vmax.f32 %v5423, 0.0
      %v5456 = vmax.f32 %v5424, 0.0
      %v5457 = vmax.f32 %v5425, 0.0
      %v5458 = vmax.f32 %v5426, 0.0
      %v5459 = vmax.f32 %v5427, 0.0
      %v5460 = vmax.f32 %v5428, 0.0
      %v5461 = vmax.f32 %v5429, 0.0
      %v5462 = vmax.f32 %v5430, 0.0
      %v5463 = vmax.f32 %v5431, 0.0
      %v5464 = vmax.f32 %v5432, 0.0
      %v5465 = vmax.f32 %v5433, 0.0
      %v5466 = vmax.f32 %v5434, 0.0
      %v5467 = vmax.f32 %v5435, 0.0
      %v5468 = vmax.f32 %v5436, 0.0
      %v5469 = vmax.f32 %v5437, 0.0
      %v5470 = vmax.f32 %v5438, 0.0
      %s5471 = scalar_lea.vmem %s359, 256
      %5472 = vst.msk [vmem:[%s5471] sm:$0xff] %vm360, %v5439
      %5473 = vst.msk [vmem:[%s5471 + $0x8] sm:$0xff] %vm360, %v5440
      %5474 = vst.msk [vmem:[%s5471 + $0x10] sm:$0xff] %vm360, %v5441
      %5475 = vst.msk [vmem:[%s5471 + $0x18] sm:$0xff] %vm360, %v5442
      %5476 = vst.msk [vmem:[%s5471 + $0x20] sm:$0xff] %vm360, %v5443
      %5477 = vst.msk [vmem:[%s5471 + $0x28] sm:$0xff] %vm360, %v5444
      %5478 = vst.msk [vmem:[%s5471 + $0x30] sm:$0xff] %vm360, %v5445
      %5479 = vst.msk [vmem:[%s5471 + $0x38] sm:$0xff] %vm360, %v5446
      %5480 = vst.msk [vmem:[%s5471 + $0x40] sm:$0xff] %vm360, %v5447
      %5481 = vst.msk [vmem:[%s5471 + $0x48] sm:$0xff] %vm360, %v5448
      %5482 = vst.msk [vmem:[%s5471 + $0x50] sm:$0xff] %vm360, %v5449
      %5483 = vst.msk [vmem:[%s5471 + $0x58] sm:$0xff] %vm360, %v5450
      %5484 = vst.msk [vmem:[%s5471 + $0x60] sm:$0xff] %vm360, %v5451
      %5485 = vst.msk [vmem:[%s5471 + $0x68] sm:$0xff] %vm360, %v5452
      %5486 = vst.msk [vmem:[%s5471 + $0x70] sm:$0xff] %vm360, %v5453
      %5487 = vst.msk [vmem:[%s5471 + $0x78] sm:$0xff] %vm360, %v5454
      %5488 = vst.msk [vmem:[%s5471 + $0x80] sm:$0xff] %vm360, %v5455
      %5489 = vst.msk [vmem:[%s5471 + $0x88] sm:$0xff] %vm360, %v5456
      %5490 = vst.msk [vmem:[%s5471 + $0x90] sm:$0xff] %vm360, %v5457
      %5491 = vst.msk [vmem:[%s5471 + $0x98] sm:$0xff] %vm360, %v5458
      %5492 = vst.msk [vmem:[%s5471 + $0xa0] sm:$0xff] %vm360, %v5459
      %5493 = vst.msk [vmem:[%s5471 + $0xa8] sm:$0xff] %vm360, %v5460
      %5494 = vst.msk [vmem:[%s5471 + $0xb0] sm:$0xff] %vm360, %v5461
      %5495 = vst.msk [vmem:[%s5471 + $0xb8] sm:$0xff] %vm360, %v5462
      %5496 = vst.msk [vmem:[%s5471 + $0xc0] sm:$0xff] %vm360, %v5463
      %5497 = vst.msk [vmem:[%s5471 + $0xc8] sm:$0xff] %vm360, %v5464
      %5498 = vst.msk [vmem:[%s5471 + $0xd0] sm:$0xff] %vm360, %v5465
      %5499 = vst.msk [vmem:[%s5471 + $0xd8] sm:$0xff] %vm360, %v5466
      %5500 = vst.msk [vmem:[%s5471 + $0xe0] sm:$0xff] %vm360, %v5467
      %5501 = vst.msk [vmem:[%s5471 + $0xe8] sm:$0xff] %vm360, %v5468
      %5502 = vst.msk [vmem:[%s5471 + $0xf0] sm:$0xff] %vm360, %v5469
      %5503 = vst.msk [vmem:[%s5471 + $0xf8] sm:$0xff] %vm360, %v5470
      %v5504 = vadd.f32 %v5082, %v5247
      %v5505 = vadd.f32 %v5087, %v5248
      %v5506 = vadd.f32 %v5092, %v5249
      %v5507 = vadd.f32 %v5097, %v5250
      %v5508 = vadd.f32 %v5102, %v5251
      %v5509 = vadd.f32 %v5107, %v5252
      %v5510 = vadd.f32 %v5112, %v5253
      %v5511 = vadd.f32 %v5117, %v5254
      %v5512 = vadd.f32 %v5122, %v5255
      %v5513 = vadd.f32 %v5127, %v5256
      %v5514 = vadd.f32 %v5132, %v5257
      %v5515 = vadd.f32 %v5137, %v5258
      %v5516 = vadd.f32 %v5142, %v5259
      %v5517 = vadd.f32 %v5147, %v5260
      %v5518 = vadd.f32 %v5152, %v5261
      %v5519 = vadd.f32 %v5157, %v5262
      %v5520 = vadd.f32 %v5162, %v5263
      %v5521 = vadd.f32 %v5167, %v5264
      %v5522 = vadd.f32 %v5172, %v5265
      %v5523 = vadd.f32 %v5177, %v5266
      %v5524 = vadd.f32 %v5182, %v5267
      %v5525 = vadd.f32 %v5187, %v5268
      %v5526 = vadd.f32 %v5192, %v5269
      %v5527 = vadd.f32 %v5197, %v5270
      %v5528 = vadd.f32 %v5202, %v5271
      %v5529 = vadd.f32 %v5207, %v5272
      %v5530 = vadd.f32 %v5212, %v5273
      %v5531 = vadd.f32 %v5217, %v5274
      %v5532 = vadd.f32 %v5222, %v5275
      %v5533 = vadd.f32 %v5227, %v5276
      %v5534 = vadd.f32 %v5232, %v5277
      %v5535 = vadd.f32 %v5237, %v5278
      %v5536 = vmax.f32 %v5504, 0.0
      %v5537 = vmax.f32 %v5505, 0.0
      %v5538 = vmax.f32 %v5506, 0.0
      %v5539 = vmax.f32 %v5507, 0.0
      %v5540 = vmax.f32 %v5508, 0.0
      %v5541 = vmax.f32 %v5509, 0.0
      %v5542 = vmax.f32 %v5510, 0.0
      %v5543 = vmax.f32 %v5511, 0.0
      %v5544 = vmax.f32 %v5512, 0.0
      %v5545 = vmax.f32 %v5513, 0.0
      %v5546 = vmax.f32 %v5514, 0.0
      %v5547 = vmax.f32 %v5515, 0.0
      %v5548 = vmax.f32 %v5516, 0.0
      %v5549 = vmax.f32 %v5517, 0.0
      %v5550 = vmax.f32 %v5518, 0.0
      %v5551 = vmax.f32 %v5519, 0.0
      %v5552 = vmax.f32 %v5520, 0.0
      %v5553 = vmax.f32 %v5521, 0.0
      %v5554 = vmax.f32 %v5522, 0.0
      %v5555 = vmax.f32 %v5523, 0.0
      %v5556 = vmax.f32 %v5524, 0.0
      %v5557 = vmax.f32 %v5525, 0.0
      %v5558 = vmax.f32 %v5526, 0.0
      %v5559 = vmax.f32 %v5527, 0.0
      %v5560 = vmax.f32 %v5528, 0.0
      %v5561 = vmax.f32 %v5529, 0.0
      %v5562 = vmax.f32 %v5530, 0.0
      %v5563 = vmax.f32 %v5531, 0.0
      %v5564 = vmax.f32 %v5532, 0.0
      %v5565 = vmax.f32 %v5533, 0.0
      %v5566 = vmax.f32 %v5534, 0.0
      %v5567 = vmax.f32 %v5535, 0.0
      %s5568 = scalar_lea.vmem %s359, 512
      %5569 = vst.msk [vmem:[%s5568] sm:$0xff] %vm360, %v5536
      %5570 = vst.msk [vmem:[%s5568 + $0x8] sm:$0xff] %vm360, %v5537
      %5571 = vst.msk [vmem:[%s5568 + $0x10] sm:$0xff] %vm360, %v5538
      %5572 = vst.msk [vmem:[%s5568 + $0x18] sm:$0xff] %vm360, %v5539
      %5573 = vst.msk [vmem:[%s5568 + $0x20] sm:$0xff] %vm360, %v5540
      %5574 = vst.msk [vmem:[%s5568 + $0x28] sm:$0xff] %vm360, %v5541
      %5575 = vst.msk [vmem:[%s5568 + $0x30] sm:$0xff] %vm360, %v5542
      %5576 = vst.msk [vmem:[%s5568 + $0x38] sm:$0xff] %vm360, %v5543
      %5577 = vst.msk [vmem:[%s5568 + $0x40] sm:$0xff] %vm360, %v5544
      %5578 = vst.msk [vmem:[%s5568 + $0x48] sm:$0xff] %vm360, %v5545
      %5579 = vst.msk [vmem:[%s5568 + $0x50] sm:$0xff] %vm360, %v5546
      %5580 = vst.msk [vmem:[%s5568 + $0x58] sm:$0xff] %vm360, %v5547
      %5581 = vst.msk [vmem:[%s5568 + $0x60] sm:$0xff] %vm360, %v5548
      %5582 = vst.msk [vmem:[%s5568 + $0x68] sm:$0xff] %vm360, %v5549
      %5583 = vst.msk [vmem:[%s5568 + $0x70] sm:$0xff] %vm360, %v5550
      %5584 = vst.msk [vmem:[%s5568 + $0x78] sm:$0xff] %vm360, %v5551
      %5585 = vst.msk [vmem:[%s5568 + $0x80] sm:$0xff] %vm360, %v5552
      %5586 = vst.msk [vmem:[%s5568 + $0x88] sm:$0xff] %vm360, %v5553
      %5587 = vst.msk [vmem:[%s5568 + $0x90] sm:$0xff] %vm360, %v5554
      %5588 = vst.msk [vmem:[%s5568 + $0x98] sm:$0xff] %vm360, %v5555
      %5589 = vst.msk [vmem:[%s5568 + $0xa0] sm:$0xff] %vm360, %v5556
      %5590 = vst.msk [vmem:[%s5568 + $0xa8] sm:$0xff] %vm360, %v5557
      %5591 = vst.msk [vmem:[%s5568 + $0xb0] sm:$0xff] %vm360, %v5558
      %5592 = vst.msk [vmem:[%s5568 + $0xb8] sm:$0xff] %vm360, %v5559
      %5593 = vst.msk [vmem:[%s5568 + $0xc0] sm:$0xff] %vm360, %v5560
      %5594 = vst.msk [vmem:[%s5568 + $0xc8] sm:$0xff] %vm360, %v5561
      %5595 = vst.msk [vmem:[%s5568 + $0xd0] sm:$0xff] %vm360, %v5562
      %5596 = vst.msk [vmem:[%s5568 + $0xd8] sm:$0xff] %vm360, %v5563
      %5597 = vst.msk [vmem:[%s5568 + $0xe0] sm:$0xff] %vm360, %v5564
      %5598 = vst.msk [vmem:[%s5568 + $0xe8] sm:$0xff] %vm360, %v5565
      %5599 = vst.msk [vmem:[%s5568 + $0xf0] sm:$0xff] %vm360, %v5566
      %5600 = vst.msk [vmem:[%s5568 + $0xf8] sm:$0xff] %vm360, %v5567
      %p5601 = scmp.lt.s32.totalorder %s21, 1
      %s5602 = scalar_select %p5601, %s21, 1
      %s5603 = smul.addr %s5602, 96
      %s5604 = smul.addr %s5603, 8
      %s5605 = scalar_lea.vmem %s10, %s5604
      // Predicated region
      $region61: #{basic_block_lrd_forward.1} parent=59 // pred_check
        %p5606 = pneg %p254
      $region62: #{basic_block_lrd_forward.1} parent=59 // pred_check_branch
        %5608 = sbr.rel (%p5606) target = $region64
      $region63: #{basic_block_lrd_forward.1} parent=59 // pred_region
        _
      $region64: #{basic_block_lrd_forward.1} parent=59 // pred_fallthru
        _
    $region60: #{basic_block_lrd_forward.1} parent=5 // pred_fallthru
      _
    %p5609 = scmp.le.s32.totalorder 2, %s16
    // Predicated region
    $region65: #{basic_block_lrd_forward.1} parent=5 // pred_check
      %p5610 = pneg %p5609
    $region66: #{basic_block_lrd_forward.1} parent=5 // pred_check_branch
      %5612 = sbr.rel (%p5610) target = $region68
    $region67: #{basic_block_lrd_forward.1} parent=5 // pred_region
      %s5613 = ssub.s32 %s16, 2
      // Predicated region
      $region69: #{basic_block_lrd_forward.1} parent=67 // pred_check
        %p5614 = pneg %p260
      $region70: #{basic_block_lrd_forward.1} parent=67 // pred_check_branch
        %5616 = sbr.rel (%p5614) target = $region72
      $region71: #{basic_block_lrd_forward.1} parent=67 // pred_region
        %p5617 = scmp.lt.s32.totalorder %s22, 1
        %s5618 = scalar_select %p5617, %s22, 1
        %s5619 = smul.addr %s5618, 96
        %s5620 = smul.addr %s5619, 8
        %s5621 = scalar_lea.vmem %s10, %s5620
      $region72: #{basic_block_lrd_forward.1} parent=67 // pred_fallthru
        _
    $region68: #{basic_block_lrd_forward.1} parent=5 // pred_fallthru
      _
  $region6: #{basic_block_lrd_forward.1} parent=0 // loop_footer
    %s20 = sadd.s32 1, %s16
  $region7: #{basic_block_lrd_forward.1} parent=0 // loop_footer_branch
    %15 = sbr.rel target = $region3
  $region8: #{basic_block_lrd_forward.1} parent=0 // loop_exit
    _

</llo_original>
